<compile_context>
chip_gen: v7x
topology: tpu7x:2x2x1
jax: 0.10.0
libtpu: 0.0.40
codegen_flags: <defaults>
</compile_context>

<pallas_src>
import functools

import numpy as np
import jax
import jax.numpy as jnp
from jax.experimental import pallas as pl
from jax.experimental.pallas import tpu as pltpu

# ---- model dimensions (small, consistent with the module's forward) ----
N_BATCH = 2
C_IN = 3
H = W = 16
HW = H * W
C_FEAT = 32            # n_classifier_input (scaled down from 512)
HIDDEN = 256           # scaled down from 4096
NUM_CLASSES = 12
POOL = 7
PP = POOL * POOL       # 49
K_CONV = 9 * C_IN      # 27
K_CONV_PAD = 32        # padded contraction dim for aligned MXU tiles


# ---------------------------------------------------------------------------
# Fused Pallas kernel: conv(+ReLU) -> adaptive avg pool -> 3-layer classifier
# ---------------------------------------------------------------------------
def _cnn_fused_kernel(colsT_ref, cwT_ref, cbT_ref, pmT_ref,
                      w1_ref, b1_ref, w2_ref, b2_ref, w3_ref, b3_ref,
                      out_ref, pooled_ref, *, n_batch):
    # --- Conv2d(3x3, pad=1) + ReLU + AdaptiveAvgPool2d(7,7), one batch element at a time.
    # featT is (C_FEAT, H*W) so the pool matmul directly produces (C_FEAT, 49), i.e. the
    # rows of the NCHW-flattened classifier input (index c*49 + p).
    for n in range(n_batch):
        featT = jnp.dot(cwT_ref[...], colsT_ref[n],
                        preferred_element_type=jnp.float32)            # (C_FEAT, HW)
        featT = jnp.maximum(featT + cbT_ref[...], 0.0)                 # bias bcast over lanes
        pooled_ref[n * C_FEAT:(n + 1) * C_FEAT, :] = jnp.dot(
            featT, pmT_ref[...], preferred_element_type=jnp.float32)   # (C_FEAT, 49)

    # --- Linear(C_FEAT*49 -> HIDDEN) + ReLU.
    # The K = C_FEAT*49 contraction is split into per-channel K=49 slabs so every operand
    # stays a clean 2-D tile (no in-kernel sublane->lane relayout of the pooled result).
    acc = jnp.zeros((n_batch, HIDDEN), jnp.float32)
    for c in range(C_FEAT):
        lhs = jnp.concatenate(
            [pooled_ref[n * C_FEAT + c:n * C_FEAT + c + 1, :] for n in range(n_batch)],
            axis=0)                                                     # (n_batch, 49)
        acc = acc + jnp.dot(lhs, w1_ref[c], preferred_element_type=jnp.float32)
    h1 = jnp.maximum(acc + b1_ref[...], 0.0)

    # TODO(synk): nn.Dropout is treated as inference-mode identity (no RNG mask).
    h2 = jnp.maximum(
        jnp.dot(h1, w2_ref[...], preferred_element_type=jnp.float32) + b2_ref[...], 0.0)
    out_ref[...] = (jnp.dot(h2, w3_ref[...], preferred_element_type=jnp.float32)
                    + b3_ref[...]).astype(out_ref.dtype)


def cnn_forward(x, params):
    """x: (N, C_IN, H, W) float32 NCHW, like the PyTorch module."""
    n = x.shape[0]
    colsT = im2col_T(x)  # (N, K_CONV_PAD, H*W) -- small wrapper-side layout plumbing
    kernel = functools.partial(_cnn_fused_kernel, n_batch=n)
    return pl.pallas_call(
        kernel,
        out_shape=jax.ShapeDtypeStruct((n, NUM_CLASSES), jnp.float32),
        in_specs=[pl.BlockSpec(memory_space=pltpu.MemorySpace.VMEM)] * 10,
        out_specs=pl.BlockSpec(memory_space=pltpu.MemorySpace.VMEM),
        scratch_shapes=[pltpu.VMEM((n * C_FEAT, PP), jnp.float32)],
    )(colsT, params["conv_wT"], params["conv_bT"], params["pool_matT"],
      params["w1_3d"], params["b1"], params["w2"], params["b2"],
      params["w3"], params["b3"])


# ---------------------------------------------------------------------------
# Glue (layout plumbing / parameter setup) in plain JAX
# ---------------------------------------------------------------------------
def im2col_T(x_nchw):
    """NCHW -> transposed im2col for a 3x3 same-padded conv: (N, K_CONV_PAD, H*W)."""
    n, c, h, w = x_nchw.shape
    xp = jnp.pad(x_nchw, ((0, 0), (0, 0), (1, 1), (1, 1)))
    taps = [xp[:, :, ky:ky + h, kx:kx + w] for ky in range(3) for kx in range(3)]
    cols = jnp.stack(taps, axis=1).reshape(n, 9 * c, h * w)     # rows: (ky*3+kx)*C_IN + ci
    return jnp.pad(cols, ((0, 0), (0, K_CONV_PAD - 9 * c), (0, 0)))


def make_pool_matrix(h, w, out_h, out_w):
    """Exact nn.AdaptiveAvgPool2d bin semantics as a (out_h*out_w, h*w) matrix."""
    pm = np.zeros((out_h * out_w, h * w), dtype=np.float32)
    for i in range(out_h):
        hs = (i * h) // out_h
        he = -((-(i + 1) * h) // out_h)          # ceil((i+1)*h/out_h)
        for j in range(out_w):
            ws = (j * w) // out_w
            we = -((-(j + 1) * w) // out_w)
            cnt = (he - hs) * (we - ws)
            for hh in range(hs, he):
                for ww in range(ws, we):
                    pm[i * out_w + j, hh * w + ww] = 1.0 / cnt
    return pm


def init_params(key):
    """Deterministic init mirroring the module's init_weights branch (weights pre-laid-out)."""
    k = jax.random.split(key, 4)
    # Conv2d(C_IN, C_FEAT, 3, padding=1): kaiming_normal_(fan_out, relu), bias 0.
    fan_out = C_FEAT * 3 * 3
    conv_w_torch = jax.random.normal(k[0], (C_FEAT, C_IN, 3, 3), jnp.float32) \
        * jnp.sqrt(2.0 / fan_out)
    conv_wT = jnp.transpose(conv_w_torch, (0, 2, 3, 1)).reshape(C_FEAT, K_CONV)
    conv_wT = jnp.pad(conv_wT, ((0, 0), (0, K_CONV_PAD - K_CONV)))      # (C_FEAT, 32)
    conv_bT = jnp.zeros((C_FEAT, 1), jnp.float32)
    # Classifier Linears: normal(0, 0.01) weights, zero bias (PyTorch weight is (out, in)).
    d_in = C_FEAT * PP
    w1 = (jax.random.normal(k[1], (HIDDEN, d_in), jnp.float32) * 0.01).T       # (1568, 256)
    w1_3d = w1.reshape(C_FEAT, PP, HIDDEN)                                     # rows c*49+p
    w2 = (jax.random.normal(k[2], (HIDDEN, HIDDEN), jnp.float32) * 0.01).T
    w3 = (jax.random.normal(k[3], (NUM_CLASSES, HIDDEN), jnp.float32) * 0.01).T
    pool_matT = jnp.asarray(make_pool_matrix(H, W, POOL, POOL).T)              # (HW, 49)
    return dict(conv_wT=conv_wT, conv_bT=conv_bT, pool_matT=pool_matT,
                w1_3d=w1_3d, b1=jnp.zeros((1, HIDDEN), jnp.float32),
                w2=w2, b2=jnp.zeros((1, HIDDEN), jnp.float32),
                w3=w3, b3=jnp.zeros((1, NUM_CLASSES), jnp.float32))


def reference_forward(x, p):
    """Straightforward jnp reference of the same forward pass (for validation)."""
    n = x.shape[0]
    colsT = im2col_T(x)
    featT = jnp.maximum(
        jnp.einsum("ck,nkh->nch", p["conv_wT"], colsT) + p["conv_bT"][None], 0.0)
    pooledT = jnp.einsum("nch,hp->ncp", featT, p["pool_matT"])     # (N, C_FEAT, 49)
    flat = pooledT.reshape(n, C_FEAT * PP)                         # NCHW flatten order
    h1 = jnp.maximum(flat @ p["w1_3d"].reshape(C_FEAT * PP, HIDDEN) + p["b1"], 0.0)
    h2 = jnp.maximum(h1 @ p["w2"] + p["b2"], 0.0)
    return h2 @ p["w3"] + p["b3"]


if __name__ == "__main__":
    key = jax.random.PRNGKey(0)
    kx, kp = jax.random.split(key)
    x = jax.random.normal(kx, (N_BATCH, C_IN, H, W), jnp.float32)   # NCHW, like PyTorch
    params = init_params(kp)

    out = jax.block_until_ready(jax.jit(cnn_forward)(x, params))
    assert out.shape == (N_BATCH, NUM_CLASSES), out.shape
    assert out.dtype == jnp.float32

    ref = jax.block_until_ready(jax.jit(reference_forward)(x, params))
    assert jnp.allclose(out, ref, rtol=1e-4, atol=1e-4), \
        float(jnp.max(jnp.abs(out - ref)))
    print("KERNEL_OK")
</pallas_src>

<mosaic_0001>
module attributes {stable_mosaic.version = 11 : i64} {
  func.func @_cnn_fused_kernel(%arg0: memref<2x32x256xf32, #tpu.memory_space<vmem>>, %arg1: memref<32x32xf32, #tpu.memory_space<vmem>>, %arg2: memref<32x1xf32, #tpu.memory_space<vmem>>, %arg3: memref<256x49xf32, #tpu.memory_space<vmem>>, %arg4: memref<32x49x256xf32, #tpu.memory_space<vmem>>, %arg5: memref<1x256xf32, #tpu.memory_space<vmem>>, %arg6: memref<256x256xf32, #tpu.memory_space<vmem>>, %arg7: memref<1x256xf32, #tpu.memory_space<vmem>>, %arg8: memref<256x12xf32, #tpu.memory_space<vmem>>, %arg9: memref<1x12xf32, #tpu.memory_space<vmem>>, %arg10: memref<2x12xf32, #tpu.memory_space<vmem>>, %arg11: memref<64x49xf32, #tpu.memory_space<vmem>>) attributes {dimension_semantics = [], scalar_prefetch = 0 : i64, scratch_operands = 1 : i64, tpu.core_type = #tpu.core_type<tc>} {
    %c0 = arith.constant 0 : index
    %c0_0 = arith.constant 0 : index
    %0 = vector.load %arg1[%c0, %c0_0] : memref<32x32xf32, #tpu.memory_space<vmem>>, vector<32x32xf32>
    %c0_1 = arith.constant 0 : index
    %c0_2 = arith.constant 0 : index
    %c0_3 = arith.constant 0 : index
    %1 = vector.load %arg0[%c0_1, %c0_2, %c0_3] : memref<2x32x256xf32, #tpu.memory_space<vmem>>, vector<1x32x256xf32>
    %2 = vector.shape_cast %1 : vector<1x32x256xf32> to vector<32x256xf32>
    %cst = arith.constant dense<0.000000e+00> : vector<32x256xf32>
    %3 = tpu.matmul %0, %2, %cst {dimension_numbers = #tpu.dot_dimension_numbers<[1], [0], [0], [1], [0, 0, 1, 1], [], []>} : vector<32x32xf32>, vector<32x256xf32>, vector<32x256xf32> -> vector<32x256xf32>
    %c0_4 = arith.constant 0 : index
    %c0_5 = arith.constant 0 : index
    %4 = vector.load %arg2[%c0_4, %c0_5] : memref<32x1xf32, #tpu.memory_space<vmem>>, vector<32x1xf32>
    %5 = vector.broadcast %4 : vector<32x1xf32> to vector<32x256xf32>
    %6 = arith.addf %3, %5 : vector<32x256xf32>
    %cst_6 = arith.constant 0.000000e+00 : f32
    %7 = vector.broadcast %cst_6 : f32 to vector<32x256xf32>
    %8 = arith.maximumf %6, %7 : vector<32x256xf32>
    %c0_7 = arith.constant 0 : index
    %c0_8 = arith.constant 0 : index
    %9 = vector.load %arg3[%c0_7, %c0_8] : memref<256x49xf32, #tpu.memory_space<vmem>>, vector<256x49xf32>
    %cst_9 = arith.constant dense<0.000000e+00> : vector<32x49xf32>
    %10 = tpu.matmul %8, %9, %cst_9 {dimension_numbers = #tpu.dot_dimension_numbers<[1], [0], [0], [1], [0, 0, 1, 1], [], []>} : vector<32x256xf32>, vector<256x49xf32>, vector<32x49xf32> -> vector<32x49xf32>
    %c0_10 = arith.constant 0 : index
    %c0_11 = arith.constant 0 : index
    %11 = vector.load %arg11[%c0_10, %c0_11] : memref<64x49xf32, #tpu.memory_space<vmem>>, vector<32x49xf32>
    tpu.vector_store %arg11[%c0_10, %c0_11], %10 {strides = array<i32>} : memref<64x49xf32, #tpu.memory_space<vmem>>, vector<32x49xf32>,
    %c0_12 = arith.constant 0 : index
    %c0_13 = arith.constant 0 : index
    %12 = vector.load %arg1[%c0_12, %c0_13] : memref<32x32xf32, #tpu.memory_space<vmem>>, vector<32x32xf32>
    %c1 = arith.constant 1 : index
    %c0_14 = arith.constant 0 : index
    %c0_15 = arith.constant 0 : index
    %13 = vector.load %arg0[%c1, %c0_14, %c0_15] : memref<2x32x256xf32, #tpu.memory_space<vmem>>, vector<1x32x256xf32>
    %14 = vector.shape_cast %13 : vector<1x32x256xf32> to vector<32x256xf32>
    %cst_16 = arith.constant dense<0.000000e+00> : vector<32x256xf32>
    %15 = tpu.matmul %12, %14, %cst_16 {dimension_numbers = #tpu.dot_dimension_numbers<[1], [0], [0], [1], [0, 0, 1, 1], [], []>} : vector<32x32xf32>, vector<32x256xf32>, vector<32x256xf32> -> vector<32x256xf32>
    %c0_17 = arith.constant 0 : index
    %c0_18 = arith.constant 0 : index
    %16 = vector.load %arg2[%c0_17, %c0_18] : memref<32x1xf32, #tpu.memory_space<vmem>>, vector<32x1xf32>
    %17 = vector.broadcast %16 : vector<32x1xf32> to vector<32x256xf32>
    %18 = arith.addf %15, %17 : vector<32x256xf32>
    %cst_19 = arith.constant 0.000000e+00 : f32
    %19 = vector.broadcast %cst_19 : f32 to vector<32x256xf32>
    %20 = arith.maximumf %18, %19 : vector<32x256xf32>
    %c0_20 = arith.constant 0 : index
    %c0_21 = arith.constant 0 : index
    %21 = vector.load %arg3[%c0_20, %c0_21] : memref<256x49xf32, #tpu.memory_space<vmem>>, vector<256x49xf32>
    %cst_22 = arith.constant dense<0.000000e+00> : vector<32x49xf32>
    %22 = tpu.matmul %20, %21, %cst_22 {dimension_numbers = #tpu.dot_dimension_numbers<[1], [0], [0], [1], [0, 0, 1, 1], [], []>} : vector<32x256xf32>, vector<256x49xf32>, vector<32x49xf32> -> vector<32x49xf32>
    %c32 = arith.constant 32 : index
    %c0_23 = arith.constant 0 : index
    %23 = vector.load %arg11[%c32, %c0_23] : memref<64x49xf32, #tpu.memory_space<vmem>>, vector<32x49xf32>
    tpu.vector_store %arg11[%c32, %c0_23], %22 {strides = array<i32>} : memref<64x49xf32, #tpu.memory_space<vmem>>, vector<32x49xf32>,
    %cst_24 = arith.constant 0.000000e+00 : f32
    %24 = vector.broadcast %cst_24 : f32 to vector<2x256xf32>
    %c0_25 = arith.constant 0 : index
    %c0_26 = arith.constant 0 : index
    %25 = vector.load %arg11[%c0_25, %c0_26] : memref<64x49xf32, #tpu.memory_space<vmem>>, vector<1x49xf32>
    %c32_27 = arith.constant 32 : index
    %c0_28 = arith.constant 0 : index
    %26 = vector.load %arg11[%c32_27, %c0_28] : memref<64x49xf32, #tpu.memory_space<vmem>>, vector<1x49xf32>
    %27 = tpu.concatenate %25, %26 in 0 : vector<1x49xf32>, vector<1x49xf32> -> vector<2x49xf32>
    %c0_29 = arith.constant 0 : index
    %c0_30 = arith.constant 0 : index
    %c0_31 = arith.constant 0 : index
    %28 = vector.load %arg4[%c0_29, %c0_30, %c0_31] : memref<32x49x256xf32, #tpu.memory_space<vmem>>, vector<1x49x256xf32>
    %29 = vector.shape_cast %28 : vector<1x49x256xf32> to vector<49x256xf32>
    %cst_32 = arith.constant dense<0.000000e+00> : vector<2x256xf32>
    %30 = tpu.matmul %27, %29, %cst_32 {dimension_numbers = #tpu.dot_dimension_numbers<[1], [0], [0], [1], [0, 0, 1, 1], [], []>} : vector<2x49xf32>, vector<49x256xf32>, vector<2x256xf32> -> vector<2x256xf32>
    %31 = arith.addf %24, %30 : vector<2x256xf32>
    %c1_33 = arith.constant 1 : index
    %c0_34 = arith.constant 0 : index
    %32 = vector.load %arg11[%c1_33, %c0_34] : memref<64x49xf32, #tpu.memory_space<vmem>>, vector<1x49xf32>
    %c33 = arith.constant 33 : index
    %c0_35 = arith.constant 0 : index
    %33 = vector.load %arg11[%c33, %c0_35] : memref<64x49xf32, #tpu.memory_space<vmem>>, vector<1x49xf32>
    %34 = tpu.concatenate %32, %33 in 0 : vector<1x49xf32>, vector<1x49xf32> -> vector<2x49xf32>
    %c1_36 = arith.constant 1 : index
    %c0_37 = arith.constant 0 : index
    %c0_38 = arith.constant 0 : index
    %35 = vector.load %arg4[%c1_36, %c0_37, %c0_38] : memref<32x49x256xf32, #tpu.memory_space<vmem>>, vector<1x49x256xf32>
    %36 = vector.shape_cast %35 : vector<1x49x256xf32> to vector<49x256xf32>
    %cst_39 = arith.constant dense<0.000000e+00> : vector<2x256xf32>
    %37 = tpu.matmul %34, %36, %cst_39 {dimension_numbers = #tpu.dot_dimension_numbers<[1], [0], [0], [1], [0, 0, 1, 1], [], []>} : vector<2x49xf32>, vector<49x256xf32>, vector<2x256xf32> -> vector<2x256xf32>
    %38 = arith.addf %31, %37 : vector<2x256xf32>
    %c2 = arith.constant 2 : index
    %c0_40 = arith.constant 0 : index
    %39 = vector.load %arg11[%c2, %c0_40] : memref<64x49xf32, #tpu.memory_space<vmem>>, vector<1x49xf32>
    %c34 = arith.constant 34 : index
    %c0_41 = arith.constant 0 : index
    %40 = vector.load %arg11[%c34, %c0_41] : memref<64x49xf32, #tpu.memory_space<vmem>>, vector<1x49xf32>
    %41 = tpu.concatenate %39, %40 in 0 : vector<1x49xf32>, vector<1x49xf32> -> vector<2x49xf32>
    %c2_42 = arith.constant 2 : index
    %c0_43 = arith.constant 0 : index
    %c0_44 = arith.constant 0 : index
    %42 = vector.load %arg4[%c2_42, %c0_43, %c0_44] : memref<32x49x256xf32, #tpu.memory_space<vmem>>, vector<1x49x256xf32>
    %43 = vector.shape_cast %42 : vector<1x49x256xf32> to vector<49x256xf32>
    %cst_45 = arith.constant dense<0.000000e+00> : vector<2x256xf32>
    %44 = tpu.matmul %41, %43, %cst_45 {dimension_numbers = #tpu.dot_dimension_numbers<[1], [0], [0], [1], [0, 0, 1, 1], [], []>} : vector<2x49xf32>, vector<49x256xf32>, vector<2x256xf32> -> vector<2x256xf32>
    %45 = arith.addf %38, %44 : vector<2x256xf32>
    %c3 = arith.constant 3 : index
    %c0_46 = arith.constant 0 : index
    %46 = vector.load %arg11[%c3, %c0_46] : memref<64x49xf32, #tpu.memory_space<vmem>>, vector<1x49xf32>
    %c35 = arith.constant 35 : index
    %c0_47 = arith.constant 0 : index
    %47 = vector.load %arg11[%c35, %c0_47] : memref<64x49xf32, #tpu.memory_space<vmem>>, vector<1x49xf32>
    %48 = tpu.concatenate %46, %47 in 0 : vector<1x49xf32>, vector<1x49xf32> -> vector<2x49xf32>
    %c3_48 = arith.constant 3 : index
    %c0_49 = arith.constant 0 : index
    %c0_50 = arith.constant 0 : index
    %49 = vector.load %arg4[%c3_48, %c0_49, %c0_50] : memref<32x49x256xf32, #tpu.memory_space<vmem>>, vector<1x49x256xf32>
    %50 = vector.shape_cast %49 : vector<1x49x256xf32> to vector<49x256xf32>
    %cst_51 = arith.constant dense<0.000000e+00> : vector<2x256xf32>
    %51 = tpu.matmul %48, %50, %cst_51 {dimension_numbers = #tpu.dot_dimension_numbers<[1], [0], [0], [1], [0, 0, 1, 1], [], []>} : vector<2x49xf32>, vector<49x256xf32>, vector<2x256xf32> -> vector<2x256xf32>
    %52 = arith.addf %45, %51 : vector<2x256xf32>
    %c4 = arith.constant 4 : index
    %c0_52 = arith.constant 0 : index
    %53 = vector.load %arg11[%c4, %c0_52] : memref<64x49xf32, #tpu.memory_space<vmem>>, vector<1x49xf32>
    %c36 = arith.constant 36 : index
    %c0_53 = arith.constant 0 : index
    %54 = vector.load %arg11[%c36, %c0_53] : memref<64x49xf32, #tpu.memory_space<vmem>>, vector<1x49xf32>
    %55 = tpu.concatenate %53, %54 in 0 : vector<1x49xf32>, vector<1x49xf32> -> vector<2x49xf32>
    %c4_54 = arith.constant 4 : index
    %c0_55 = arith.constant 0 : index
    %c0_56 = arith.constant 0 : index
    %56 = vector.load %arg4[%c4_54, %c0_55, %c0_56] : memref<32x49x256xf32, #tpu.memory_space<vmem>>, vector<1x49x256xf32>
    %57 = vector.shape_cast %56 : vector<1x49x256xf32> to vector<49x256xf32>
    %cst_57 = arith.constant dense<0.000000e+00> : vector<2x256xf32>
    %58 = tpu.matmul %55, %57, %cst_57 {dimension_numbers = #tpu.dot_dimension_numbers<[1], [0], [0], [1], [0, 0, 1, 1], [], []>} : vector<2x49xf32>, vector<49x256xf32>, vector<2x256xf32> -> vector<2x256xf32>
    %59 = arith.addf %52, %58 : vector<2x256xf32>
    %c5 = arith.constant 5 : index
    %c0_58 = arith.constant 0 : index
    %60 = vector.load %arg11[%c5, %c0_58] : memref<64x49xf32, #tpu.memory_space<vmem>>, vector<1x49xf32>
    %c37 = arith.constant 37 : index
    %c0_59 = arith.constant 0 : index
    %61 = vector.load %arg11[%c37, %c0_59] : memref<64x49xf32, #tpu.memory_space<vmem>>, vector<1x49xf32>
    %62 = tpu.concatenate %60, %61 in 0 : vector<1x49xf32>, vector<1x49xf32> -> vector<2x49xf32>
    %c5_60 = arith.constant 5 : index
    %c0_61 = arith.constant 0 : index
    %c0_62 = arith.constant 0 : index
    %63 = vector.load %arg4[%c5_60, %c0_61, %c0_62] : memref<32x49x256xf32, #tpu.memory_space<vmem>>, vector<1x49x256xf32>
    %64 = vector.shape_cast %63 : vector<1x49x256xf32> to vector<49x256xf32>
    %cst_63 = arith.constant dense<0.000000e+00> : vector<2x256xf32>
    %65 = tpu.matmul %62, %64, %cst_63 {dimension_numbers = #tpu.dot_dimension_numbers<[1], [0], [0], [1], [0, 0, 1, 1], [], []>} : vector<2x49xf32>, vector<49x256xf32>, vector<2x256xf32> -> vector<2x256xf32>
    %66 = arith.addf %59, %65 : vector<2x256xf32>
    %c6 = arith.constant 6 : index
    %c0_64 = arith.constant 0 : index
    %67 = vector.load %arg11[%c6, %c0_64] : memref<64x49xf32, #tpu.memory_space<vmem>>, vector<1x49xf32>
    %c38 = arith.constant 38 : index
    %c0_65 = arith.constant 0 : index
    %68 = vector.load %arg11[%c38, %c0_65] : memref<64x49xf32, #tpu.memory_space<vmem>>, vector<1x49xf32>
    %69 = tpu.concatenate %67, %68 in 0 : vector<1x49xf32>, vector<1x49xf32> -> vector<2x49xf32>
    %c6_66 = arith.constant 6 : index
    %c0_67 = arith.constant 0 : index
    %c0_68 = arith.constant 0 : index
    %70 = vector.load %arg4[%c6_66, %c0_67, %c0_68] : memref<32x49x256xf32, #tpu.memory_space<vmem>>, vector<1x49x256xf32>
    %71 = vector.shape_cast %70 : vector<1x49x256xf32> to vector<49x256xf32>
    %cst_69 = arith.constant dense<0.000000e+00> : vector<2x256xf32>
    %72 = tpu.matmul %69, %71, %cst_69 {dimension_numbers = #tpu.dot_dimension_numbers<[1], [0], [0], [1], [0, 0, 1, 1], [], []>} : vector<2x49xf32>, vector<49x256xf32>, vector<2x256xf32> -> vector<2x256xf32>
    %73 = arith.addf %66, %72 : vector<2x256xf32>
    %c7 = arith.constant 7 : index
    %c0_70 = arith.constant 0 : index
    %74 = vector.load %arg11[%c7, %c0_70] : memref<64x49xf32, #tpu.memory_space<vmem>>, vector<1x49xf32>
    %c39 = arith.constant 39 : index
    %c0_71 = arith.constant 0 : index
    %75 = vector.load %arg11[%c39, %c0_71] : memref<64x49xf32, #tpu.memory_space<vmem>>, vector<1x49xf32>
    %76 = tpu.concatenate %74, %75 in 0 : vector<1x49xf32>, vector<1x49xf32> -> vector<2x49xf32>
    %c7_72 = arith.constant 7 : index
    %c0_73 = arith.constant 0 : index
    %c0_74 = arith.constant 0 : index
    %77 = vector.load %arg4[%c7_72, %c0_73, %c0_74] : memref<32x49x256xf32, #tpu.memory_space<vmem>>, vector<1x49x256xf32>
    %78 = vector.shape_cast %77 : vector<1x49x256xf32> to vector<49x256xf32>
    %cst_75 = arith.constant dense<0.000000e+00> : vector<2x256xf32>
    %79 = tpu.matmul %76, %78, %cst_75 {dimension_numbers = #tpu.dot_dimension_numbers<[1], [0], [0], [1], [0, 0, 1, 1], [], []>} : vector<2x49xf32>, vector<49x256xf32>, vector<2x256xf32> -> vector<2x256xf32>
    %80 = arith.addf %73, %79 : vector<2x256xf32>
    %c8 = arith.constant 8 : index
    %c0_76 = arith.constant 0 : index
    %81 = vector.load %arg11[%c8, %c0_76] : memref<64x49xf32, #tpu.memory_space<vmem>>, vector<1x49xf32>
    %c40 = arith.constant 40 : index
    %c0_77 = arith.constant 0 : index
    %82 = vector.load %arg11[%c40, %c0_77] : memref<64x49xf32, #tpu.memory_space<vmem>>, vector<1x49xf32>
    %83 = tpu.concatenate %81, %82 in 0 : vector<1x49xf32>, vector<1x49xf32> -> vector<2x49xf32>
    %c8_78 = arith.constant 8 : index
    %c0_79 = arith.constant 0 : index
    %c0_80 = arith.constant 0 : index
    %84 = vector.load %arg4[%c8_78, %c0_79, %c0_80] : memref<32x49x256xf32, #tpu.memory_space<vmem>>, vector<1x49x256xf32>
    %85 = vector.shape_cast %84 : vector<1x49x256xf32> to vector<49x256xf32>
    %cst_81 = arith.constant dense<0.000000e+00> : vector<2x256xf32>
    %86 = tpu.matmul %83, %85, %cst_81 {dimension_numbers = #tpu.dot_dimension_numbers<[1], [0], [0], [1], [0, 0, 1, 1], [], []>} : vector<2x49xf32>, vector<49x256xf32>, vector<2x256xf32> -> vector<2x256xf32>
    %87 = arith.addf %80, %86 : vector<2x256xf32>
    %c9 = arith.constant 9 : index
    %c0_82 = arith.constant 0 : index
    %88 = vector.load %arg11[%c9, %c0_82] : memref<64x49xf32, #tpu.memory_space<vmem>>, vector<1x49xf32>
    %c41 = arith.constant 41 : index
    %c0_83 = arith.constant 0 : index
    %89 = vector.load %arg11[%c41, %c0_83] : memref<64x49xf32, #tpu.memory_space<vmem>>, vector<1x49xf32>
    %90 = tpu.concatenate %88, %89 in 0 : vector<1x49xf32>, vector<1x49xf32> -> vector<2x49xf32>
    %c9_84 = arith.constant 9 : index
    %c0_85 = arith.constant 0 : index
    %c0_86 = arith.constant 0 : index
    %91 = vector.load %arg4[%c9_84, %c0_85, %c0_86] : memref<32x49x256xf32, #tpu.memory_space<vmem>>, vector<1x49x256xf32>
    %92 = vector.shape_cast %91 : vector<1x49x256xf32> to vector<49x256xf32>
    %cst_87 = arith.constant dense<0.000000e+00> : vector<2x256xf32>
    %93 = tpu.matmul %90, %92, %cst_87 {dimension_numbers = #tpu.dot_dimension_numbers<[1], [0], [0], [1], [0, 0, 1, 1], [], []>} : vector<2x49xf32>, vector<49x256xf32>, vector<2x256xf32> -> vector<2x256xf32>
    %94 = arith.addf %87, %93 : vector<2x256xf32>
    %c10 = arith.constant 10 : index
    %c0_88 = arith.constant 0 : index
    %95 = vector.load %arg11[%c10, %c0_88] : memref<64x49xf32, #tpu.memory_space<vmem>>, vector<1x49xf32>
    %c42 = arith.constant 42 : index
    %c0_89 = arith.constant 0 : index
    %96 = vector.load %arg11[%c42, %c0_89] : memref<64x49xf32, #tpu.memory_space<vmem>>, vector<1x49xf32>
    %97 = tpu.concatenate %95, %96 in 0 : vector<1x49xf32>, vector<1x49xf32> -> vector<2x49xf32>
    %c10_90 = arith.constant 10 : index
    %c0_91 = arith.constant 0 : index
    %c0_92 = arith.constant 0 : index
    %98 = vector.load %arg4[%c10_90, %c0_91, %c0_92] : memref<32x49x256xf32, #tpu.memory_space<vmem>>, vector<1x49x256xf32>
    %99 = vector.shape_cast %98 : vector<1x49x256xf32> to vector<49x256xf32>
    %cst_93 = arith.constant dense<0.000000e+00> : vector<2x256xf32>
    %100 = tpu.matmul %97, %99, %cst_93 {dimension_numbers = #tpu.dot_dimension_numbers<[1], [0], [0], [1], [0, 0, 1, 1], [], []>} : vector<2x49xf32>, vector<49x256xf32>, vector<2x256xf32> -> vector<2x256xf32>
    %101 = arith.addf %94, %100 : vector<2x256xf32>
    %c11 = arith.constant 11 : index
    %c0_94 = arith.constant 0 : index
    %102 = vector.load %arg11[%c11, %c0_94] : memref<64x49xf32, #tpu.memory_space<vmem>>, vector<1x49xf32>
    %c43 = arith.constant 43 : index
    %c0_95 = arith.constant 0 : index
    %103 = vector.load %arg11[%c43, %c0_95] : memref<64x49xf32, #tpu.memory_space<vmem>>, vector<1x49xf32>
    %104 = tpu.concatenate %102, %103 in 0 : vector<1x49xf32>, vector<1x49xf32> -> vector<2x49xf32>
    %c11_96 = arith.constant 11 : index
    %c0_97 = arith.constant 0 : index
    %c0_98 = arith.constant 0 : index
    %105 = vector.load %arg4[%c11_96, %c0_97, %c0_98] : memref<32x49x256xf32, #tpu.memory_space<vmem>>, vector<1x49x256xf32>
    %106 = vector.shape_cast %105 : vector<1x49x256xf32> to vector<49x256xf32>
    %cst_99 = arith.constant dense<0.000000e+00> : vector<2x256xf32>
    %107 = tpu.matmul %104, %106, %cst_99 {dimension_numbers = #tpu.dot_dimension_numbers<[1], [0], [0], [1], [0, 0, 1, 1], [], []>} : vector<2x49xf32>, vector<49x256xf32>, vector<2x256xf32> -> vector<2x256xf32>
    %108 = arith.addf %101, %107 : vector<2x256xf32>
    %c12 = arith.constant 12 : index
    %c0_100 = arith.constant 0 : index
    %109 = vector.load %arg11[%c12, %c0_100] : memref<64x49xf32, #tpu.memory_space<vmem>>, vector<1x49xf32>
    %c44 = arith.constant 44 : index
    %c0_101 = arith.constant 0 : index
    %110 = vector.load %arg11[%c44, %c0_101] : memref<64x49xf32, #tpu.memory_space<vmem>>, vector<1x49xf32>
    %111 = tpu.concatenate %109, %110 in 0 : vector<1x49xf32>, vector<1x49xf32> -> vector<2x49xf32>
    %c12_102 = arith.constant 12 : index
    %c0_103 = arith.constant 0 : index
    %c0_104 = arith.constant 0 : index
    %112 = vector.load %arg4[%c12_102, %c0_103, %c0_104] : memref<32x49x256xf32, #tpu.memory_space<vmem>>, vector<1x49x256xf32>
    %113 = vector.shape_cast %112 : vector<1x49x256xf32> to vector<49x256xf32>
    %cst_105 = arith.constant dense<0.000000e+00> : vector<2x256xf32>
    %114 = tpu.matmul %111, %113, %cst_105 {dimension_numbers = #tpu.dot_dimension_numbers<[1], [0], [0], [1], [0, 0, 1, 1], [], []>} : vector<2x49xf32>, vector<49x256xf32>, vector<2x256xf32> -> vector<2x256xf32>
    %115 = arith.addf %108, %114 : vector<2x256xf32>
    %c13 = arith.constant 13 : index
    %c0_106 = arith.constant 0 : index
    %116 = vector.load %arg11[%c13, %c0_106] : memref<64x49xf32, #tpu.memory_space<vmem>>, vector<1x49xf32>
    %c45 = arith.constant 45 : index
    %c0_107 = arith.constant 0 : index
    %117 = vector.load %arg11[%c45, %c0_107] : memref<64x49xf32, #tpu.memory_space<vmem>>, vector<1x49xf32>
    %118 = tpu.concatenate %116, %117 in 0 : vector<1x49xf32>, vector<1x49xf32> -> vector<2x49xf32>
    %c13_108 = arith.constant 13 : index
    %c0_109 = arith.constant 0 : index
    %c0_110 = arith.constant 0 : index
    %119 = vector.load %arg4[%c13_108, %c0_109, %c0_110] : memref<32x49x256xf32, #tpu.memory_space<vmem>>, vector<1x49x256xf32>
    %120 = vector.shape_cast %119 : vector<1x49x256xf32> to vector<49x256xf32>
    %cst_111 = arith.constant dense<0.000000e+00> : vector<2x256xf32>
    %121 = tpu.matmul %118, %120, %cst_111 {dimension_numbers = #tpu.dot_dimension_numbers<[1], [0], [0], [1], [0, 0, 1, 1], [], []>} : vector<2x49xf32>, vector<49x256xf32>, vector<2x256xf32> -> vector<2x256xf32>
    %122 = arith.addf %115, %121 : vector<2x256xf32>
    %c14 = arith.constant 14 : index
    %c0_112 = arith.constant 0 : index
    %123 = vector.load %arg11[%c14, %c0_112] : memref<64x49xf32, #tpu.memory_space<vmem>>, vector<1x49xf32>
    %c46 = arith.constant 46 : index
    %c0_113 = arith.constant 0 : index
    %124 = vector.load %arg11[%c46, %c0_113] : memref<64x49xf32, #tpu.memory_space<vmem>>, vector<1x49xf32>
    %125 = tpu.concatenate %123, %124 in 0 : vector<1x49xf32>, vector<1x49xf32> -> vector<2x49xf32>
    %c14_114 = arith.constant 14 : index
    %c0_115 = arith.constant 0 : index
    %c0_116 = arith.constant 0 : index
    %126 = vector.load %arg4[%c14_114, %c0_115, %c0_116] : memref<32x49x256xf32, #tpu.memory_space<vmem>>, vector<1x49x256xf32>
    %127 = vector.shape_cast %126 : vector<1x49x256xf32> to vector<49x256xf32>
    %cst_117 = arith.constant dense<0.000000e+00> : vector<2x256xf32>
    %128 = tpu.matmul %125, %127, %cst_117 {dimension_numbers = #tpu.dot_dimension_numbers<[1], [0], [0], [1], [0, 0, 1, 1], [], []>} : vector<2x49xf32>, vector<49x256xf32>, vector<2x256xf32> -> vector<2x256xf32>
    %129 = arith.addf %122, %128 : vector<2x256xf32>
    %c15 = arith.constant 15 : index
    %c0_118 = arith.constant 0 : index
    %130 = vector.load %arg11[%c15, %c0_118] : memref<64x49xf32, #tpu.memory_space<vmem>>, vector<1x49xf32>
    %c47 = arith.constant 47 : index
    %c0_119 = arith.constant 0 : index
    %131 = vector.load %arg11[%c47, %c0_119] : memref<64x49xf32, #tpu.memory_space<vmem>>, vector<1x49xf32>
    %132 = tpu.concatenate %130, %131 in 0 : vector<1x49xf32>, vector<1x49xf32> -> vector<2x49xf32>
    %c15_120 = arith.constant 15 : index
    %c0_121 = arith.constant 0 : index
    %c0_122 = arith.constant 0 : index
    %133 = vector.load %arg4[%c15_120, %c0_121, %c0_122] : memref<32x49x256xf32, #tpu.memory_space<vmem>>, vector<1x49x256xf32>
    %134 = vector.shape_cast %133 : vector<1x49x256xf32> to vector<49x256xf32>
    %cst_123 = arith.constant dense<0.000000e+00> : vector<2x256xf32>
    %135 = tpu.matmul %132, %134, %cst_123 {dimension_numbers = #tpu.dot_dimension_numbers<[1], [0], [0], [1], [0, 0, 1, 1], [], []>} : vector<2x49xf32>, vector<49x256xf32>, vector<2x256xf32> -> vector<2x256xf32>
    %136 = arith.addf %129, %135 : vector<2x256xf32>
    %c16 = arith.constant 16 : index
    %c0_124 = arith.constant 0 : index
    %137 = vector.load %arg11[%c16, %c0_124] : memref<64x49xf32, #tpu.memory_space<vmem>>, vector<1x49xf32>
    %c48 = arith.constant 48 : index
    %c0_125 = arith.constant 0 : index
    %138 = vector.load %arg11[%c48, %c0_125] : memref<64x49xf32, #tpu.memory_space<vmem>>, vector<1x49xf32>
    %139 = tpu.concatenate %137, %138 in 0 : vector<1x49xf32>, vector<1x49xf32> -> vector<2x49xf32>
    %c16_126 = arith.constant 16 : index
    %c0_127 = arith.constant 0 : index
    %c0_128 = arith.constant 0 : index
    %140 = vector.load %arg4[%c16_126, %c0_127, %c0_128] : memref<32x49x256xf32, #tpu.memory_space<vmem>>, vector<1x49x256xf32>
    %141 = vector.shape_cast %140 : vector<1x49x256xf32> to vector<49x256xf32>
    %cst_129 = arith.constant dense<0.000000e+00> : vector<2x256xf32>
    %142 = tpu.matmul %139, %141, %cst_129 {dimension_numbers = #tpu.dot_dimension_numbers<[1], [0], [0], [1], [0, 0, 1, 1], [], []>} : vector<2x49xf32>, vector<49x256xf32>, vector<2x256xf32> -> vector<2x256xf32>
    %143 = arith.addf %136, %142 : vector<2x256xf32>
    %c17 = arith.constant 17 : index
    %c0_130 = arith.constant 0 : index
    %144 = vector.load %arg11[%c17, %c0_130] : memref<64x49xf32, #tpu.memory_space<vmem>>, vector<1x49xf32>
    %c49 = arith.constant 49 : index
    %c0_131 = arith.constant 0 : index
    %145 = vector.load %arg11[%c49, %c0_131] : memref<64x49xf32, #tpu.memory_space<vmem>>, vector<1x49xf32>
    %146 = tpu.concatenate %144, %145 in 0 : vector<1x49xf32>, vector<1x49xf32> -> vector<2x49xf32>
    %c17_132 = arith.constant 17 : index
    %c0_133 = arith.constant 0 : index
    %c0_134 = arith.constant 0 : index
    %147 = vector.load %arg4[%c17_132, %c0_133, %c0_134] : memref<32x49x256xf32, #tpu.memory_space<vmem>>, vector<1x49x256xf32>
    %148 = vector.shape_cast %147 : vector<1x49x256xf32> to vector<49x256xf32>
    %cst_135 = arith.constant dense<0.000000e+00> : vector<2x256xf32>
    %149 = tpu.matmul %146, %148, %cst_135 {dimension_numbers = #tpu.dot_dimension_numbers<[1], [0], [0], [1], [0, 0, 1, 1], [], []>} : vector<2x49xf32>, vector<49x256xf32>, vector<2x256xf32> -> vector<2x256xf32>
    %150 = arith.addf %143, %149 : vector<2x256xf32>
    %c18 = arith.constant 18 : index
    %c0_136 = arith.constant 0 : index
    %151 = vector.load %arg11[%c18, %c0_136] : memref<64x49xf32, #tpu.memory_space<vmem>>, vector<1x49xf32>
    %c50 = arith.constant 50 : index
    %c0_137 = arith.constant 0 : index
    %152 = vector.load %arg11[%c50, %c0_137] : memref<64x49xf32, #tpu.memory_space<vmem>>, vector<1x49xf32>
    %153 = tpu.concatenate %151, %152 in 0 : vector<1x49xf32>, vector<1x49xf32> -> vector<2x49xf32>
    %c18_138 = arith.constant 18 : index
    %c0_139 = arith.constant 0 : index
    %c0_140 = arith.constant 0 : index
    %154 = vector.load %arg4[%c18_138, %c0_139, %c0_140] : memref<32x49x256xf32, #tpu.memory_space<vmem>>, vector<1x49x256xf32>
    %155 = vector.shape_cast %154 : vector<1x49x256xf32> to vector<49x256xf32>
    %cst_141 = arith.constant dense<0.000000e+00> : vector<2x256xf32>
    %156 = tpu.matmul %153, %155, %cst_141 {dimension_numbers = #tpu.dot_dimension_numbers<[1], [0], [0], [1], [0, 0, 1, 1], [], []>} : vector<2x49xf32>, vector<49x256xf32>, vector<2x256xf32> -> vector<2x256xf32>
    %157 = arith.addf %150, %156 : vector<2x256xf32>
    %c19 = arith.constant 19 : index
    %c0_142 = arith.constant 0 : index
    %158 = vector.load %arg11[%c19, %c0_142] : memref<64x49xf32, #tpu.memory_space<vmem>>, vector<1x49xf32>
    %c51 = arith.constant 51 : index
    %c0_143 = arith.constant 0 : index
    %159 = vector.load %arg11[%c51, %c0_143] : memref<64x49xf32, #tpu.memory_space<vmem>>, vector<1x49xf32>
    %160 = tpu.concatenate %158, %159 in 0 : vector<1x49xf32>, vector<1x49xf32> -> vector<2x49xf32>
    %c19_144 = arith.constant 19 : index
    %c0_145 = arith.constant 0 : index
    %c0_146 = arith.constant 0 : index
    %161 = vector.load %arg4[%c19_144, %c0_145, %c0_146] : memref<32x49x256xf32, #tpu.memory_space<vmem>>, vector<1x49x256xf32>
    %162 = vector.shape_cast %161 : vector<1x49x256xf32> to vector<49x256xf32>
    %cst_147 = arith.constant dense<0.000000e+00> : vector<2x256xf32>
    %163 = tpu.matmul %160, %162, %cst_147 {dimension_numbers = #tpu.dot_dimension_numbers<[1], [0], [0], [1], [0, 0, 1, 1], [], []>} : vector<2x49xf32>, vector<49x256xf32>, vector<2x256xf32> -> vector<2x256xf32>
    %164 = arith.addf %157, %163 : vector<2x256xf32>
    %c20 = arith.constant 20 : index
    %c0_148 = arith.constant 0 : index
    %165 = vector.load %arg11[%c20, %c0_148] : memref<64x49xf32, #tpu.memory_space<vmem>>, vector<1x49xf32>
    %c52 = arith.constant 52 : index
    %c0_149 = arith.constant 0 : index
    %166 = vector.load %arg11[%c52, %c0_149] : memref<64x49xf32, #tpu.memory_space<vmem>>, vector<1x49xf32>
    %167 = tpu.concatenate %165, %166 in 0 : vector<1x49xf32>, vector<1x49xf32> -> vector<2x49xf32>
    %c20_150 = arith.constant 20 : index
    %c0_151 = arith.constant 0 : index
    %c0_152 = arith.constant 0 : index
    %168 = vector.load %arg4[%c20_150, %c0_151, %c0_152] : memref<32x49x256xf32, #tpu.memory_space<vmem>>, vector<1x49x256xf32>
    %169 = vector.shape_cast %168 : vector<1x49x256xf32> to vector<49x256xf32>
    %cst_153 = arith.constant dense<0.000000e+00> : vector<2x256xf32>
    %170 = tpu.matmul %167, %169, %cst_153 {dimension_numbers = #tpu.dot_dimension_numbers<[1], [0], [0], [1], [0, 0, 1, 1], [], []>} : vector<2x49xf32>, vector<49x256xf32>, vector<2x256xf32> -> vector<2x256xf32>
    %171 = arith.addf %164, %170 : vector<2x256xf32>
    %c21 = arith.constant 21 : index
    %c0_154 = arith.constant 0 : index
    %172 = vector.load %arg11[%c21, %c0_154] : memref<64x49xf32, #tpu.memory_space<vmem>>, vector<1x49xf32>
    %c53 = arith.constant 53 : index
    %c0_155 = arith.constant 0 : index
    %173 = vector.load %arg11[%c53, %c0_155] : memref<64x49xf32, #tpu.memory_space<vmem>>, vector<1x49xf32>
    %174 = tpu.concatenate %172, %173 in 0 : vector<1x49xf32>, vector<1x49xf32> -> vector<2x49xf32>
    %c21_156 = arith.constant 21 : index
    %c0_157 = arith.constant 0 : index
    %c0_158 = arith.constant 0 : index
    %175 = vector.load %arg4[%c21_156, %c0_157, %c0_158] : memref<32x49x256xf32, #tpu.memory_space<vmem>>, vector<1x49x256xf32>
    %176 = vector.shape_cast %175 : vector<1x49x256xf32> to vector<49x256xf32>
    %cst_159 = arith.constant dense<0.000000e+00> : vector<2x256xf32>
    %177 = tpu.matmul %174, %176, %cst_159 {dimension_numbers = #tpu.dot_dimension_numbers<[1], [0], [0], [1], [0, 0, 1, 1], [], []>} : vector<2x49xf32>, vector<49x256xf32>, vector<2x256xf32> -> vector<2x256xf32>
    %178 = arith.addf %171, %177 : vector<2x256xf32>
    %c22 = arith.constant 22 : index
    %c0_160 = arith.constant 0 : index
    %179 = vector.load %arg11[%c22, %c0_160] : memref<64x49xf32, #tpu.memory_space<vmem>>, vector<1x49xf32>
    %c54 = arith.constant 54 : index
    %c0_161 = arith.constant 0 : index
    %180 = vector.load %arg11[%c54, %c0_161] : memref<64x49xf32, #tpu.memory_space<vmem>>, vector<1x49xf32>
    %181 = tpu.concatenate %179, %180 in 0 : vector<1x49xf32>, vector<1x49xf32> -> vector<2x49xf32>
    %c22_162 = arith.constant 22 : index
    %c0_163 = arith.constant 0 : index
    %c0_164 = arith.constant 0 : index
    %182 = vector.load %arg4[%c22_162, %c0_163, %c0_164] : memref<32x49x256xf32, #tpu.memory_space<vmem>>, vector<1x49x256xf32>
    %183 = vector.shape_cast %182 : vector<1x49x256xf32> to vector<49x256xf32>
    %cst_165 = arith.constant dense<0.000000e+00> : vector<2x256xf32>
    %184 = tpu.matmul %181, %183, %cst_165 {dimension_numbers = #tpu.dot_dimension_numbers<[1], [0], [0], [1], [0, 0, 1, 1], [], []>} : vector<2x49xf32>, vector<49x256xf32>, vector<2x256xf32> -> vector<2x256xf32>
    %185 = arith.addf %178, %184 : vector<2x256xf32>
    %c23 = arith.constant 23 : index
    %c0_166 = arith.constant 0 : index
    %186 = vector.load %arg11[%c23, %c0_166] : memref<64x49xf32, #tpu.memory_space<vmem>>, vector<1x49xf32>
    %c55 = arith.constant 55 : index
    %c0_167 = arith.constant 0 : index
    %187 = vector.load %arg11[%c55, %c0_167] : memref<64x49xf32, #tpu.memory_space<vmem>>, vector<1x49xf32>
    %188 = tpu.concatenate %186, %187 in 0 : vector<1x49xf32>, vector<1x49xf32> -> vector<2x49xf32>
    %c23_168 = arith.constant 23 : index
    %c0_169 = arith.constant 0 : index
    %c0_170 = arith.constant 0 : index
    %189 = vector.load %arg4[%c23_168, %c0_169, %c0_170] : memref<32x49x256xf32, #tpu.memory_space<vmem>>, vector<1x49x256xf32>
    %190 = vector.shape_cast %189 : vector<1x49x256xf32> to vector<49x256xf32>
    %cst_171 = arith.constant dense<0.000000e+00> : vector<2x256xf32>
    %191 = tpu.matmul %188, %190, %cst_171 {dimension_numbers = #tpu.dot_dimension_numbers<[1], [0], [0], [1], [0, 0, 1, 1], [], []>} : vector<2x49xf32>, vector<49x256xf32>, vector<2x256xf32> -> vector<2x256xf32>
    %192 = arith.addf %185, %191 : vector<2x256xf32>
    %c24 = arith.constant 24 : index
    %c0_172 = arith.constant 0 : index
    %193 = vector.load %arg11[%c24, %c0_172] : memref<64x49xf32, #tpu.memory_space<vmem>>, vector<1x49xf32>
    %c56 = arith.constant 56 : index
    %c0_173 = arith.constant 0 : index
    %194 = vector.load %arg11[%c56, %c0_173] : memref<64x49xf32, #tpu.memory_space<vmem>>, vector<1x49xf32>
    %195 = tpu.concatenate %193, %194 in 0 : vector<1x49xf32>, vector<1x49xf32> -> vector<2x49xf32>
    %c24_174 = arith.constant 24 : index
    %c0_175 = arith.constant 0 : index
    %c0_176 = arith.constant 0 : index
    %196 = vector.load %arg4[%c24_174, %c0_175, %c0_176] : memref<32x49x256xf32, #tpu.memory_space<vmem>>, vector<1x49x256xf32>
    %197 = vector.shape_cast %196 : vector<1x49x256xf32> to vector<49x256xf32>
    %cst_177 = arith.constant dense<0.000000e+00> : vector<2x256xf32>
    %198 = tpu.matmul %195, %197, %cst_177 {dimension_numbers = #tpu.dot_dimension_numbers<[1], [0], [0], [1], [0, 0, 1, 1], [], []>} : vector<2x49xf32>, vector<49x256xf32>, vector<2x256xf32> -> vector<2x256xf32>
    %199 = arith.addf %192, %198 : vector<2x256xf32>
    %c25 = arith.constant 25 : index
    %c0_178 = arith.constant 0 : index
    %200 = vector.load %arg11[%c25, %c0_178] : memref<64x49xf32, #tpu.memory_space<vmem>>, vector<1x49xf32>
    %c57 = arith.constant 57 : index
    %c0_179 = arith.constant 0 : index
    %201 = vector.load %arg11[%c57, %c0_179] : memref<64x49xf32, #tpu.memory_space<vmem>>, vector<1x49xf32>
    %202 = tpu.concatenate %200, %201 in 0 : vector<1x49xf32>, vector<1x49xf32> -> vector<2x49xf32>
    %c25_180 = arith.constant 25 : index
    %c0_181 = arith.constant 0 : index
    %c0_182 = arith.constant 0 : index
    %203 = vector.load %arg4[%c25_180, %c0_181, %c0_182] : memref<32x49x256xf32, #tpu.memory_space<vmem>>, vector<1x49x256xf32>
    %204 = vector.shape_cast %203 : vector<1x49x256xf32> to vector<49x256xf32>
    %cst_183 = arith.constant dense<0.000000e+00> : vector<2x256xf32>
    %205 = tpu.matmul %202, %204, %cst_183 {dimension_numbers = #tpu.dot_dimension_numbers<[1], [0], [0], [1], [0, 0, 1, 1], [], []>} : vector<2x49xf32>, vector<49x256xf32>, vector<2x256xf32> -> vector<2x256xf32>
    %206 = arith.addf %199, %205 : vector<2x256xf32>
    %c26 = arith.constant 26 : index
    %c0_184 = arith.constant 0 : index
    %207 = vector.load %arg11[%c26, %c0_184] : memref<64x49xf32, #tpu.memory_space<vmem>>, vector<1x49xf32>
    %c58 = arith.constant 58 : index
    %c0_185 = arith.constant 0 : index
    %208 = vector.load %arg11[%c58, %c0_185] : memref<64x49xf32, #tpu.memory_space<vmem>>, vector<1x49xf32>
    %209 = tpu.concatenate %207, %208 in 0 : vector<1x49xf32>, vector<1x49xf32> -> vector<2x49xf32>
    %c26_186 = arith.constant 26 : index
    %c0_187 = arith.constant 0 : index
    %c0_188 = arith.constant 0 : index
    %210 = vector.load %arg4[%c26_186, %c0_187, %c0_188] : memref<32x49x256xf32, #tpu.memory_space<vmem>>, vector<1x49x256xf32>
    %211 = vector.shape_cast %210 : vector<1x49x256xf32> to vector<49x256xf32>
    %cst_189 = arith.constant dense<0.000000e+00> : vector<2x256xf32>
    %212 = tpu.matmul %209, %211, %cst_189 {dimension_numbers = #tpu.dot_dimension_numbers<[1], [0], [0], [1], [0, 0, 1, 1], [], []>} : vector<2x49xf32>, vector<49x256xf32>, vector<2x256xf32> -> vector<2x256xf32>
    %213 = arith.addf %206, %212 : vector<2x256xf32>
    %c27 = arith.constant 27 : index
    %c0_190 = arith.constant 0 : index
    %214 = vector.load %arg11[%c27, %c0_190] : memref<64x49xf32, #tpu.memory_space<vmem>>, vector<1x49xf32>
    %c59 = arith.constant 59 : index
    %c0_191 = arith.constant 0 : index
    %215 = vector.load %arg11[%c59, %c0_191] : memref<64x49xf32, #tpu.memory_space<vmem>>, vector<1x49xf32>
    %216 = tpu.concatenate %214, %215 in 0 : vector<1x49xf32>, vector<1x49xf32> -> vector<2x49xf32>
    %c27_192 = arith.constant 27 : index
    %c0_193 = arith.constant 0 : index
    %c0_194 = arith.constant 0 : index
    %217 = vector.load %arg4[%c27_192, %c0_193, %c0_194] : memref<32x49x256xf32, #tpu.memory_space<vmem>>, vector<1x49x256xf32>
    %218 = vector.shape_cast %217 : vector<1x49x256xf32> to vector<49x256xf32>
    %cst_195 = arith.constant dense<0.000000e+00> : vector<2x256xf32>
    %219 = tpu.matmul %216, %218, %cst_195 {dimension_numbers = #tpu.dot_dimension_numbers<[1], [0], [0], [1], [0, 0, 1, 1], [], []>} : vector<2x49xf32>, vector<49x256xf32>, vector<2x256xf32> -> vector<2x256xf32>
    %220 = arith.addf %213, %219 : vector<2x256xf32>
    %c28 = arith.constant 28 : index
    %c0_196 = arith.constant 0 : index
    %221 = vector.load %arg11[%c28, %c0_196] : memref<64x49xf32, #tpu.memory_space<vmem>>, vector<1x49xf32>
    %c60 = arith.constant 60 : index
    %c0_197 = arith.constant 0 : index
    %222 = vector.load %arg11[%c60, %c0_197] : memref<64x49xf32, #tpu.memory_space<vmem>>, vector<1x49xf32>
    %223 = tpu.concatenate %221, %222 in 0 : vector<1x49xf32>, vector<1x49xf32> -> vector<2x49xf32>
    %c28_198 = arith.constant 28 : index
    %c0_199 = arith.constant 0 : index
    %c0_200 = arith.constant 0 : index
    %224 = vector.load %arg4[%c28_198, %c0_199, %c0_200] : memref<32x49x256xf32, #tpu.memory_space<vmem>>, vector<1x49x256xf32>
    %225 = vector.shape_cast %224 : vector<1x49x256xf32> to vector<49x256xf32>
    %cst_201 = arith.constant dense<0.000000e+00> : vector<2x256xf32>
    %226 = tpu.matmul %223, %225, %cst_201 {dimension_numbers = #tpu.dot_dimension_numbers<[1], [0], [0], [1], [0, 0, 1, 1], [], []>} : vector<2x49xf32>, vector<49x256xf32>, vector<2x256xf32> -> vector<2x256xf32>
    %227 = arith.addf %220, %226 : vector<2x256xf32>
    %c29 = arith.constant 29 : index
    %c0_202 = arith.constant 0 : index
    %228 = vector.load %arg11[%c29, %c0_202] : memref<64x49xf32, #tpu.memory_space<vmem>>, vector<1x49xf32>
    %c61 = arith.constant 61 : index
    %c0_203 = arith.constant 0 : index
    %229 = vector.load %arg11[%c61, %c0_203] : memref<64x49xf32, #tpu.memory_space<vmem>>, vector<1x49xf32>
    %230 = tpu.concatenate %228, %229 in 0 : vector<1x49xf32>, vector<1x49xf32> -> vector<2x49xf32>
    %c29_204 = arith.constant 29 : index
    %c0_205 = arith.constant 0 : index
    %c0_206 = arith.constant 0 : index
    %231 = vector.load %arg4[%c29_204, %c0_205, %c0_206] : memref<32x49x256xf32, #tpu.memory_space<vmem>>, vector<1x49x256xf32>
    %232 = vector.shape_cast %231 : vector<1x49x256xf32> to vector<49x256xf32>
    %cst_207 = arith.constant dense<0.000000e+00> : vector<2x256xf32>
    %233 = tpu.matmul %230, %232, %cst_207 {dimension_numbers = #tpu.dot_dimension_numbers<[1], [0], [0], [1], [0, 0, 1, 1], [], []>} : vector<2x49xf32>, vector<49x256xf32>, vector<2x256xf32> -> vector<2x256xf32>
    %234 = arith.addf %227, %233 : vector<2x256xf32>
    %c30 = arith.constant 30 : index
    %c0_208 = arith.constant 0 : index
    %235 = vector.load %arg11[%c30, %c0_208] : memref<64x49xf32, #tpu.memory_space<vmem>>, vector<1x49xf32>
    %c62 = arith.constant 62 : index
    %c0_209 = arith.constant 0 : index
    %236 = vector.load %arg11[%c62, %c0_209] : memref<64x49xf32, #tpu.memory_space<vmem>>, vector<1x49xf32>
    %237 = tpu.concatenate %235, %236 in 0 : vector<1x49xf32>, vector<1x49xf32> -> vector<2x49xf32>
    %c30_210 = arith.constant 30 : index
    %c0_211 = arith.constant 0 : index
    %c0_212 = arith.constant 0 : index
    %238 = vector.load %arg4[%c30_210, %c0_211, %c0_212] : memref<32x49x256xf32, #tpu.memory_space<vmem>>, vector<1x49x256xf32>
    %239 = vector.shape_cast %238 : vector<1x49x256xf32> to vector<49x256xf32>
    %cst_213 = arith.constant dense<0.000000e+00> : vector<2x256xf32>
    %240 = tpu.matmul %237, %239, %cst_213 {dimension_numbers = #tpu.dot_dimension_numbers<[1], [0], [0], [1], [0, 0, 1, 1], [], []>} : vector<2x49xf32>, vector<49x256xf32>, vector<2x256xf32> -> vector<2x256xf32>
    %241 = arith.addf %234, %240 : vector<2x256xf32>
    %c31 = arith.constant 31 : index
    %c0_214 = arith.constant 0 : index
    %242 = vector.load %arg11[%c31, %c0_214] : memref<64x49xf32, #tpu.memory_space<vmem>>, vector<1x49xf32>
    %c63 = arith.constant 63 : index
    %c0_215 = arith.constant 0 : index
    %243 = vector.load %arg11[%c63, %c0_215] : memref<64x49xf32, #tpu.memory_space<vmem>>, vector<1x49xf32>
    %244 = tpu.concatenate %242, %243 in 0 : vector<1x49xf32>, vector<1x49xf32> -> vector<2x49xf32>
    %c31_216 = arith.constant 31 : index
    %c0_217 = arith.constant 0 : index
    %c0_218 = arith.constant 0 : index
    %245 = vector.load %arg4[%c31_216, %c0_217, %c0_218] : memref<32x49x256xf32, #tpu.memory_space<vmem>>, vector<1x49x256xf32>
    %246 = vector.shape_cast %245 : vector<1x49x256xf32> to vector<49x256xf32>
    %cst_219 = arith.constant dense<0.000000e+00> : vector<2x256xf32>
    %247 = tpu.matmul %244, %246, %cst_219 {dimension_numbers = #tpu.dot_dimension_numbers<[1], [0], [0], [1], [0, 0, 1, 1], [], []>} : vector<2x49xf32>, vector<49x256xf32>, vector<2x256xf32> -> vector<2x256xf32>
    %248 = arith.addf %241, %247 : vector<2x256xf32>
    %c0_220 = arith.constant 0 : index
    %c0_221 = arith.constant 0 : index
    %249 = vector.load %arg5[%c0_220, %c0_221] : memref<1x256xf32, #tpu.memory_space<vmem>>, vector<1x256xf32>
    %250 = vector.broadcast %249 : vector<1x256xf32> to vector<2x256xf32>
    %251 = arith.addf %248, %250 : vector<2x256xf32>
    %cst_222 = arith.constant 0.000000e+00 : f32
    %252 = vector.broadcast %cst_222 : f32 to vector<2x256xf32>
    %253 = arith.maximumf %251, %252 : vector<2x256xf32>
    %c0_223 = arith.constant 0 : index
    %c0_224 = arith.constant 0 : index
    %254 = vector.load %arg6[%c0_223, %c0_224] : memref<256x256xf32, #tpu.memory_space<vmem>>, vector<256x256xf32>
    %cst_225 = arith.constant dense<0.000000e+00> : vector<2x256xf32>
    %255 = tpu.matmul %253, %254, %cst_225 {dimension_numbers = #tpu.dot_dimension_numbers<[1], [0], [0], [1], [0, 0, 1, 1], [], []>} : vector<2x256xf32>, vector<256x256xf32>, vector<2x256xf32> -> vector<2x256xf32>
    %c0_226 = arith.constant 0 : index
    %c0_227 = arith.constant 0 : index
    %256 = vector.load %arg7[%c0_226, %c0_227] : memref<1x256xf32, #tpu.memory_space<vmem>>, vector<1x256xf32>
    %257 = vector.broadcast %256 : vector<1x256xf32> to vector<2x256xf32>
    %258 = arith.addf %255, %257 : vector<2x256xf32>
    %cst_228 = arith.constant 0.000000e+00 : f32
    %259 = vector.broadcast %cst_228 : f32 to vector<2x256xf32>
    %260 = arith.maximumf %258, %259 : vector<2x256xf32>
    %c0_229 = arith.constant 0 : index
    %c0_230 = arith.constant 0 : index
    %261 = vector.load %arg8[%c0_229, %c0_230] : memref<256x12xf32, #tpu.memory_space<vmem>>, vector<256x12xf32>
    %cst_231 = arith.constant dense<0.000000e+00> : vector<2x12xf32>
    %262 = tpu.matmul %260, %261, %cst_231 {dimension_numbers = #tpu.dot_dimension_numbers<[1], [0], [0], [1], [0, 0, 1, 1], [], []>} : vector<2x256xf32>, vector<256x12xf32>, vector<2x12xf32> -> vector<2x12xf32>
    %c0_232 = arith.constant 0 : index
    %c0_233 = arith.constant 0 : index
    %263 = vector.load %arg9[%c0_232, %c0_233] : memref<1x12xf32, #tpu.memory_space<vmem>>, vector<1x12xf32>
    %264 = vector.broadcast %263 : vector<1x12xf32> to vector<2x12xf32>
    %265 = arith.addf %262, %264 : vector<2x12xf32>
    %c0_234 = arith.constant 0 : index
    %c0_235 = arith.constant 0 : index
    %266 = vector.load %arg10[%c0_234, %c0_235] : memref<2x12xf32, #tpu.memory_space<vmem>>, vector<2x12xf32>
    tpu.vector_store %arg10[%c0_234, %c0_235], %265 {strides = array<i32>} : memref<2x12xf32, #tpu.memory_space<vmem>>, vector<2x12xf32>,
    return
  }
}

</mosaic_0001>

<llo_original>
// kernel: cnn_forward.1
$region0: #{cnn_forward.1}
  #allocation0 [shape = 'u32[]', space=smem, size = 0x4, offset = 0x4, fixed_abs, tag = 'smem constant byte address 0x4 - core index']
  #allocation1 [shape = 'u32[144,128]{1,0:T(1,128)}', space=vmem, size = 0x12000, scoped, tag = 'internal scratch']
  #allocation2 [shape = 'f32[64,49]{1,0:T(8,128)}', space=vmem, size = 0x8000, scoped, tag = 'scratch operand']
  %s0 = inlined_call_operand.vmem [shape: f32[2,32,256], index: 0, kind: input, shape index: {}]
  %s1 = inlined_call_operand.vmem [shape: f32[32,32], index: 1, kind: input, shape index: {}]
  %s2 = inlined_call_operand.vmem [shape: f32[32,1], index: 2, kind: input, shape index: {}]
  %s3 = inlined_call_operand.vmem [shape: f32[256,49], index: 3, kind: input, shape index: {}]
  %s4 = inlined_call_operand.vmem [shape: f32[32,49,256], index: 4, kind: input, shape index: {}]
  %s5 = inlined_call_operand.vmem [shape: f32[1,256], index: 5, kind: input, shape index: {}]
  %s6 = inlined_call_operand.vmem [shape: f32[256,256], index: 6, kind: input, shape index: {}]
  %s7 = inlined_call_operand.vmem [shape: f32[1,256], index: 7, kind: input, shape index: {}]
  %s8 = inlined_call_operand.vmem [shape: f32[256,12], index: 8, kind: input, shape index: {}]
  %s9 = inlined_call_operand.vmem [shape: f32[1,12], index: 9, kind: input, shape index: {}]
  %s10 = inlined_call_operand.hbm [shape: f32[2,12], index: 10, kind: output, shape index: {}]
  %s11 = sld [smem:[#allocation0]]
  $region50: #{cnn_forward.1} parent=0
    _
  %s13 = ssub.s32 1, %s11
  %s14 = scalar_select 0, %s13, %s11
  $region1: #{cnn_forward.1} parent=0
    #allocation3 [shape = 'u8[1024]{0}', space=vmem, size = 0x400, scoped, tag = 'output window, operand 0, single buffered']
    #allocation4 [shape = 's32[1]{0}', space=sflag, size = 0x4, scoped, tag = 'scoped memory for cnn_forward.1']
    %15 = vsyncpa [#allocation4], 0
    // Predicated region
    $region2: #{cnn_forward.1} parent=1 // pred_check
      _
    $region3: #{cnn_forward.1} parent=1 // pred_check_branch
      %17 = sbr.rel (0) target = $region5
    $region4: #{cnn_forward.1} parent=1 // pred_region
      _
    $region5: #{cnn_forward.1} parent=1 // pred_fallthru
      _
    // Predicated region
    $region6: #{cnn_forward.1} parent=1 // pred_check
      _
    $region7: #{cnn_forward.1} parent=1 // pred_check_branch
      %19 = sbr.rel (0) target = $region9
    $region8: #{cnn_forward.1} parent=1 // pred_region
      _
    $region9: #{cnn_forward.1} parent=1 // pred_fallthru
      _
    // Predicated region
    $region10: #{cnn_forward.1} parent=1 // pred_check
      _
    $region11: #{cnn_forward.1} parent=1 // pred_check_branch
      %21 = sbr.rel (0) target = $region13
    $region12: #{cnn_forward.1} parent=1 // pred_region
      _
    $region13: #{cnn_forward.1} parent=1 // pred_fallthru
      _
    // Predicated region
    $region14: #{cnn_forward.1} parent=1 // pred_check
      _
    $region15: #{cnn_forward.1} parent=1 // pred_check_branch
      %23 = sbr.rel (0) target = $region17
    $region16: #{cnn_forward.1} parent=1 // pred_region
      _
    $region17: #{cnn_forward.1} parent=1 // pred_fallthru
      _
    // Predicated region
    $region18: #{cnn_forward.1} parent=1 // pred_check
      _
    $region19: #{cnn_forward.1} parent=1 // pred_check_branch
      %25 = sbr.rel (0) target = $region21
    $region20: #{cnn_forward.1} parent=1 // pred_region
      _
    $region21: #{cnn_forward.1} parent=1 // pred_fallthru
      _
    // Predicated region
    $region22: #{cnn_forward.1} parent=1 // pred_check
      _
    $region23: #{cnn_forward.1} parent=1 // pred_check_branch
      %27 = sbr.rel (0) target = $region25
    $region24: #{cnn_forward.1} parent=1 // pred_region
      _
    $region25: #{cnn_forward.1} parent=1 // pred_fallthru
      _
    // Predicated region
    $region26: #{cnn_forward.1} parent=1 // pred_check
      _
    $region27: #{cnn_forward.1} parent=1 // pred_check_branch
      %29 = sbr.rel (0) target = $region29
    $region28: #{cnn_forward.1} parent=1 // pred_region
      _
    $region29: #{cnn_forward.1} parent=1 // pred_fallthru
      _
    // Predicated region
    $region30: #{cnn_forward.1} parent=1 // pred_check
      _
    $region31: #{cnn_forward.1} parent=1 // pred_check_branch
      %31 = sbr.rel (0) target = $region33
    $region32: #{cnn_forward.1} parent=1 // pred_region
      _
    $region33: #{cnn_forward.1} parent=1 // pred_fallthru
      _
    // Predicated region
    $region34: #{cnn_forward.1} parent=1 // pred_check
      _
    $region35: #{cnn_forward.1} parent=1 // pred_check_branch
      %33 = sbr.rel (0) target = $region37
    $region36: #{cnn_forward.1} parent=1 // pred_region
      _
    $region37: #{cnn_forward.1} parent=1 // pred_fallthru
      _
    // Predicated region
    $region38: #{cnn_forward.1} parent=1 // pred_check
      _
    $region39: #{cnn_forward.1} parent=1 // pred_check_branch
      %35 = sbr.rel (0) target = $region41
    $region40: #{cnn_forward.1} parent=1 // pred_region
      _
    $region41: #{cnn_forward.1} parent=1 // pred_fallthru
      _
    %v36 = vld [vmem:[%s1] sm:$0xff]
    %v37 = vld [vmem:[%s1 + $0x8] sm:$0xff]
    %v38 = vld [vmem:[%s1 + $0x10] sm:$0xff]
    %v39 = vld [vmem:[%s1 + $0x18] sm:$0xff]
    %v40 = vld [vmem:[%s0] sm:$0xff]
    %v41 = vld [vmem:[%s0 + $0x8] sm:$0xff]
    %v42 = vld [vmem:[%s0 + $0x10] sm:$0xff]
    %v43 = vld [vmem:[%s0 + $0x18] sm:$0xff]
    %v44 = vld [vmem:[%s0 + $0x20] sm:$0xff]
    %v45 = vld [vmem:[%s0 + $0x28] sm:$0xff]
    %v46 = vld [vmem:[%s0 + $0x30] sm:$0xff]
    %v47 = vld [vmem:[%s0 + $0x38] sm:$0xff]
    %v48 = vld [vmem:[%s2] sm:$0xff]
    %v49 = vld [vmem:[%s2 + $0x8] sm:$0xff]
    %v50 = vld [vmem:[%s2 + $0x10] sm:$0xff]
    %v51 = vld [vmem:[%s2 + $0x18] sm:$0xff]
    %53 = vset.pattern.permute.xlu0 0
    %54 = vperm.xlu0 %53, %v48
    %v55 = vpop.permute.xlu0 %54
    %58 = vset.pattern.permute.xlu0 0
    %59 = vperm.xlu0 %58, %v49
    %v60 = vpop.permute.xlu0 %59
    %63 = vset.pattern.permute.xlu0 0
    %64 = vperm.xlu0 %63, %v50
    %v65 = vpop.permute.xlu0 %64
    %68 = vset.pattern.permute.xlu0 0
    %69 = vperm.xlu0 %68, %v51
    %v70 = vpop.permute.xlu0 %69
    %vm72 = vcmask 261120
    %v74 = vsel %vm72, %v36, 0
    %v77 = vsel %vm72, %v37, 0
    %v80 = vsel %vm72, %v38, 0
    %v83 = vsel %vm72, %v39, 0
    %85 = vmatprep.subr.mxu0 %v41
    %86 = vmatpush1.msra.mxu0 %v40
    %87 = vmatprep.subr.mxu0 %v43
    %88 = vmatpush1.msra.mxu0 %v42
    %89 = vmatprep.subr.mxu0 %v45
    %90 = vmatpush1.msra.mxu0 %v44
    %91 = vmatprep.subr.mxu0 %v47
    %92 = vmatpush1.msra.mxu0 %v46
    %93 = vmatprep.subr.mxu0 0.0
    %94 = vmatpush1.msra.mxu0 0.0
    %95 = vmatprep.subr.mxu0 0.0
    %96 = vmatpush1.msra.mxu0 0.0
    %97 = vmatprep.subr.mxu0 0.0
    %98 = vmatpush1.msra.mxu0 0.0
    %99 = vmatprep.subr.mxu0 0.0
    %100 = vmatpush1.msra.mxu0 0.0
    %101 = vmatprep.subr.mxu0 0.0
    %102 = vmatpush1.msra.mxu0 0.0
    %103 = vmatprep.subr.mxu0 0.0
    %104 = vmatpush1.msra.mxu0 0.0
    %105 = vmatprep.subr.mxu0 0.0
    %106 = vmatpush1.msra.mxu0 0.0
    %107 = vmatprep.subr.mxu0 0.0
    %108 = vmatpush1.msra.mxu0 0.0
    %109 = vmatprep.subr.mxu0 0.0
    %110 = vmatpush1.msra.mxu0 0.0
    %111 = vmatprep.subr.mxu0 0.0
    %112 = vmatpush1.msra.mxu0 0.0
    %113 = vmatprep.subr.mxu0 0.0
    %114 = vmatpush1.msra.mxu0 0.0
    %115 = vmatprep.subr.mxu0 0.0
    %116 = vmatpush1.msra.mxu0 0.0
    %117 = vmatprep.subr.mxu0 0.0
    %118 = vmatpush1.msra.mxu0 0.0
    %119 = vmatprep.subr.mxu0 0.0
    %120 = vmatpush1.msra.mxu0 0.0
    %121 = vmatprep.subr.mxu0 0.0
    %122 = vmatpush1.msra.mxu0 0.0
    %123 = vmatprep.subr.mxu0 0.0
    %124 = vmatpush1.msra.mxu0 0.0
    %125 = vmatprep.subr.mxu0 0.0
    %126 = vmatpush1.msra.mxu0 0.0
    %127 = vmatprep.subr.mxu0 0.0
    %128 = vmatpush1.msra.mxu0 0.0
    %129 = vmatprep.subr.mxu0 0.0
    %130 = vmatpush1.msra.mxu0 0.0
    %131 = vmatprep.subr.mxu0 0.0
    %132 = vmatpush1.msra.mxu0 0.0
    %133 = vmatprep.subr.mxu0 0.0
    %134 = vmatpush1.msra.mxu0 0.0
    %135 = vmatprep.subr.mxu0 0.0
    %136 = vmatpush1.msra.mxu0 0.0
    %137 = vmatprep.subr.mxu0 0.0
    %138 = vmatpush1.msra.mxu0 0.0
    %139 = vmatprep.subr.mxu0 0.0
    %140 = vmatpush1.msra.mxu0 0.0
    %141 = vmatprep.subr.mxu0 0.0
    %142 = vmatpush1.msra.mxu0 0.0
    %143 = vmatprep.subr.mxu0 0.0
    %144 = vmatpush1.msra.mxu0 0.0
    %145 = vmatprep.subr.mxu0 0.0
    %146 = vmatpush1.msra.mxu0 0.0
    %147 = vmatprep.subr.mxu0 0.0
    %148 = vmatpush1.msra.mxu0 0.0
    %149 = vmatprep.mubr.f32.mxu0 0.0
    %150 = vmatmul.mubr.f32.gmra.mrb[0].mxu0 %v74
    %v151 = vpop.f32.mrb[0].mxu0
    %v152 = vadd.f32 %v55, %v151
    %v153 = vpop.f32.mrb[0].mxu0
    %v154 = vadd.f32 %v55, %v153
    %155 = vmatprep.mubr.f32.mxu0 0.0
    %156 = vmatmul.mubr.f32.gmra.mrb[0].mxu0 %v77
    %v157 = vpop.f32.mrb[0].mxu0
    %v158 = vadd.f32 %v60, %v157
    %v159 = vpop.f32.mrb[0].mxu0
    %v160 = vadd.f32 %v60, %v159
    %161 = vmatprep.mubr.f32.mxu0 0.0
    %162 = vmatmul.mubr.f32.gmra.mrb[0].mxu0 %v80
    %v163 = vpop.f32.mrb[0].mxu0
    %v164 = vadd.f32 %v65, %v163
    %v165 = vpop.f32.mrb[0].mxu0
    %v166 = vadd.f32 %v65, %v165
    %167 = vmatprep.mubr.f32.mxu0 0.0
    %168 = vmatmul.mubr.f32.gmra.mrb[0].mxu0 %v83
    %v169 = vpop.f32.mrb[0].mxu0
    %v170 = vadd.f32 %v70, %v169
    %v171 = vpop.f32.mrb[0].mxu0
    %v172 = vadd.f32 %v70, %v171
    %173 = vdwg.mxu0
    %v174 = vmax.f32 %v152, 0.0
    %v175 = vmax.f32 %v154, 0.0
    %v176 = vmax.f32 %v158, 0.0
    %v177 = vmax.f32 %v160, 0.0
    %v178 = vmax.f32 %v164, 0.0
    %v179 = vmax.f32 %v166, 0.0
    %v180 = vmax.f32 %v170, 0.0
    %v181 = vmax.f32 %v172, 0.0
    %v182 = vld [vmem:[%s3] sm:$0xff]
    %v183 = vld [vmem:[%s3 + $0x8] sm:$0xff]
    %v184 = vld [vmem:[%s3 + $0x10] sm:$0xff]
    %v185 = vld [vmem:[%s3 + $0x18] sm:$0xff]
    %v186 = vld [vmem:[%s3 + $0x20] sm:$0xff]
    %v187 = vld [vmem:[%s3 + $0x28] sm:$0xff]
    %v188 = vld [vmem:[%s3 + $0x30] sm:$0xff]
    %v189 = vld [vmem:[%s3 + $0x38] sm:$0xff]
    %v190 = vld [vmem:[%s3 + $0x40] sm:$0xff]
    %v191 = vld [vmem:[%s3 + $0x48] sm:$0xff]
    %v192 = vld [vmem:[%s3 + $0x50] sm:$0xff]
    %v193 = vld [vmem:[%s3 + $0x58] sm:$0xff]
    %v194 = vld [vmem:[%s3 + $0x60] sm:$0xff]
    %v195 = vld [vmem:[%s3 + $0x68] sm:$0xff]
    %v196 = vld [vmem:[%s3 + $0x70] sm:$0xff]
    %v197 = vld [vmem:[%s3 + $0x78] sm:$0xff]
    %v198 = vld [vmem:[%s3 + $0x80] sm:$0xff]
    %v199 = vld [vmem:[%s3 + $0x88] sm:$0xff]
    %v200 = vld [vmem:[%s3 + $0x90] sm:$0xff]
    %v201 = vld [vmem:[%s3 + $0x98] sm:$0xff]
    %v202 = vld [vmem:[%s3 + $0xa0] sm:$0xff]
    %v203 = vld [vmem:[%s3 + $0xa8] sm:$0xff]
    %v204 = vld [vmem:[%s3 + $0xb0] sm:$0xff]
    %v205 = vld [vmem:[%s3 + $0xb8] sm:$0xff]
    %v206 = vld [vmem:[%s3 + $0xc0] sm:$0xff]
    %v207 = vld [vmem:[%s3 + $0xc8] sm:$0xff]
    %v208 = vld [vmem:[%s3 + $0xd0] sm:$0xff]
    %v209 = vld [vmem:[%s3 + $0xd8] sm:$0xff]
    %v210 = vld [vmem:[%s3 + $0xe0] sm:$0xff]
    %v211 = vld [vmem:[%s3 + $0xe8] sm:$0xff]
    %v212 = vld [vmem:[%s3 + $0xf0] sm:$0xff]
    %v213 = vld [vmem:[%s3 + $0xf8] sm:$0xff]
    %214 = vmatprep.subr.mxu0 0.0
    %215 = vmatpush1.msra.mxu0 %v182
    %216 = vmatprep.subr.mxu0 0.0
    %217 = vmatpush1.msra.mxu0 %v183
    %218 = vmatprep.subr.mxu0 0.0
    %219 = vmatpush1.msra.mxu0 %v184
    %220 = vmatprep.subr.mxu0 0.0
    %221 = vmatpush1.msra.mxu0 %v185
    %222 = vmatprep.subr.mxu0 0.0
    %223 = vmatpush1.msra.mxu0 %v186
    %224 = vmatprep.subr.mxu0 0.0
    %225 = vmatpush1.msra.mxu0 %v187
    %226 = vmatprep.subr.mxu0 0.0
    %227 = vmatpush1.msra.mxu0 %v188
    %228 = vmatprep.subr.mxu0 0.0
    %229 = vmatpush1.msra.mxu0 %v189
    %230 = vmatprep.subr.mxu0 0.0
    %231 = vmatpush1.msra.mxu0 %v190
    %232 = vmatprep.subr.mxu0 0.0
    %233 = vmatpush1.msra.mxu0 %v191
    %234 = vmatprep.subr.mxu0 0.0
    %235 = vmatpush1.msra.mxu0 %v192
    %236 = vmatprep.subr.mxu0 0.0
    %237 = vmatpush1.msra.mxu0 %v193
    %238 = vmatprep.subr.mxu0 0.0
    %239 = vmatpush1.msra.mxu0 %v194
    %240 = vmatprep.subr.mxu0 0.0
    %241 = vmatpush1.msra.mxu0 %v195
    %242 = vmatprep.subr.mxu0 0.0
    %243 = vmatpush1.msra.mxu0 %v196
    %244 = vmatprep.subr.mxu0 0.0
    %245 = vmatpush1.msra.mxu0 %v197
    %246 = vmatprep.subr.mxu0 0.0
    %247 = vmatpush1.msra.mxu0 %v198
    %248 = vmatprep.subr.mxu0 0.0
    %249 = vmatpush1.msra.mxu0 %v199
    %250 = vmatprep.subr.mxu0 0.0
    %251 = vmatpush1.msra.mxu0 %v200
    %252 = vmatprep.subr.mxu0 0.0
    %253 = vmatpush1.msra.mxu0 %v201
    %254 = vmatprep.subr.mxu0 0.0
    %255 = vmatpush1.msra.mxu0 %v202
    %256 = vmatprep.subr.mxu0 0.0
    %257 = vmatpush1.msra.mxu0 %v203
    %258 = vmatprep.subr.mxu0 0.0
    %259 = vmatpush1.msra.mxu0 %v204
    %260 = vmatprep.subr.mxu0 0.0
    %261 = vmatpush1.msra.mxu0 %v205
    %262 = vmatprep.subr.mxu0 0.0
    %263 = vmatpush1.msra.mxu0 %v206
    %264 = vmatprep.subr.mxu0 0.0
    %265 = vmatpush1.msra.mxu0 %v207
    %266 = vmatprep.subr.mxu0 0.0
    %267 = vmatpush1.msra.mxu0 %v208
    %268 = vmatprep.subr.mxu0 0.0
    %269 = vmatpush1.msra.mxu0 %v209
    %270 = vmatprep.subr.mxu0 0.0
    %271 = vmatpush1.msra.mxu0 %v210
    %272 = vmatprep.subr.mxu0 0.0
    %273 = vmatpush1.msra.mxu0 %v211
    %274 = vmatprep.subr.mxu0 0.0
    %275 = vmatpush1.msra.mxu0 %v212
    %276 = vmatprep.subr.mxu0 0.0
    %277 = vmatpush1.msra.mxu0 %v213
    %278 = vmatprep.mubr.f32.mxu0 %v175
    %279 = vmatmul.mubr.f32.gmra.mrb[0].mxu0 %v174
    %v280 = vpop.f32.mrb[0].mxu0
    %v281 = vadd.f32 0.0, %v280
    %v282 = vpop.f32.mrb[0].mxu0
    %283 = vmatprep.mubr.f32.mxu0 %v177
    %284 = vmatmul.mubr.f32.gmra.mrb[0].mxu0 %v176
    %v285 = vpop.f32.mrb[0].mxu0
    %v286 = vadd.f32 0.0, %v285
    %v287 = vpop.f32.mrb[0].mxu0
    %288 = vmatprep.mubr.f32.mxu0 %v179
    %289 = vmatmul.mubr.f32.gmra.mrb[0].mxu0 %v178
    %v290 = vpop.f32.mrb[0].mxu0
    %v291 = vadd.f32 0.0, %v290
    %v292 = vpop.f32.mrb[0].mxu0
    %293 = vmatprep.mubr.f32.mxu0 %v181
    %294 = vmatmul.mubr.f32.gmra.mrb[0].mxu0 %v180
    %v295 = vpop.f32.mrb[0].mxu0
    %v296 = vadd.f32 0.0, %v295
    %v297 = vpop.f32.mrb[0].mxu0
    %298 = vdwg.mxu0
    %vm299 = vcmask 400384
    %300 = vst.msk [vmem:[#allocation2] sm:$0xff] %vm299, %v281
    %301 = vst.msk [vmem:[#allocation2 + $0x8] sm:$0xff] %vm299, %v286
    %302 = vst.msk [vmem:[#allocation2 + $0x10] sm:$0xff] %vm299, %v291
    %303 = vst.msk [vmem:[#allocation2 + $0x18] sm:$0xff] %vm299, %v296
    %v304 = vld [vmem:[%s1] sm:$0xff]
    %v305 = vld [vmem:[%s1 + $0x8] sm:$0xff]
    %v306 = vld [vmem:[%s1 + $0x10] sm:$0xff]
    %v307 = vld [vmem:[%s1 + $0x18] sm:$0xff]
    %s308 = scalar_lea.vmem %s0, 64
    %v309 = vld [vmem:[%s308] sm:$0xff]
    %v310 = vld [vmem:[%s308 + $0x8] sm:$0xff]
    %v311 = vld [vmem:[%s308 + $0x10] sm:$0xff]
    %v312 = vld [vmem:[%s308 + $0x18] sm:$0xff]
    %v313 = vld [vmem:[%s308 + $0x20] sm:$0xff]
    %v314 = vld [vmem:[%s308 + $0x28] sm:$0xff]
    %v315 = vld [vmem:[%s308 + $0x30] sm:$0xff]
    %v316 = vld [vmem:[%s308 + $0x38] sm:$0xff]
    %v317 = vld [vmem:[%s2] sm:$0xff]
    %v318 = vld [vmem:[%s2 + $0x8] sm:$0xff]
    %v319 = vld [vmem:[%s2 + $0x10] sm:$0xff]
    %v320 = vld [vmem:[%s2 + $0x18] sm:$0xff]
    %322 = vset.pattern.permute.xlu0 0
    %323 = vperm.xlu0 %322, %v317
    %v324 = vpop.permute.xlu0 %323
    %327 = vset.pattern.permute.xlu0 0
    %328 = vperm.xlu0 %327, %v318
    %v329 = vpop.permute.xlu0 %328
    %332 = vset.pattern.permute.xlu0 0
    %333 = vperm.xlu0 %332, %v319
    %v334 = vpop.permute.xlu0 %333
    %337 = vset.pattern.permute.xlu0 0
    %338 = vperm.xlu0 %337, %v320
    %v339 = vpop.permute.xlu0 %338
    %v342 = vsel %vm72, %v304, 0
    %v345 = vsel %vm72, %v305, 0
    %v348 = vsel %vm72, %v306, 0
    %v351 = vsel %vm72, %v307, 0
    %353 = vmatprep.subr.mxu0 %v310
    %354 = vmatpush1.msra.mxu0 %v309
    %355 = vmatprep.subr.mxu0 %v312
    %356 = vmatpush1.msra.mxu0 %v311
    %357 = vmatprep.subr.mxu0 %v314
    %358 = vmatpush1.msra.mxu0 %v313
    %359 = vmatprep.subr.mxu0 %v316
    %360 = vmatpush1.msra.mxu0 %v315
    %361 = vmatprep.subr.mxu0 0.0
    %362 = vmatpush1.msra.mxu0 0.0
    %363 = vmatprep.subr.mxu0 0.0
    %364 = vmatpush1.msra.mxu0 0.0
    %365 = vmatprep.subr.mxu0 0.0
    %366 = vmatpush1.msra.mxu0 0.0
    %367 = vmatprep.subr.mxu0 0.0
    %368 = vmatpush1.msra.mxu0 0.0
    %369 = vmatprep.subr.mxu0 0.0
    %370 = vmatpush1.msra.mxu0 0.0
    %371 = vmatprep.subr.mxu0 0.0
    %372 = vmatpush1.msra.mxu0 0.0
    %373 = vmatprep.subr.mxu0 0.0
    %374 = vmatpush1.msra.mxu0 0.0
    %375 = vmatprep.subr.mxu0 0.0
    %376 = vmatpush1.msra.mxu0 0.0
    %377 = vmatprep.subr.mxu0 0.0
    %378 = vmatpush1.msra.mxu0 0.0
    %379 = vmatprep.subr.mxu0 0.0
    %380 = vmatpush1.msra.mxu0 0.0
    %381 = vmatprep.subr.mxu0 0.0
    %382 = vmatpush1.msra.mxu0 0.0
    %383 = vmatprep.subr.mxu0 0.0
    %384 = vmatpush1.msra.mxu0 0.0
    %385 = vmatprep.subr.mxu0 0.0
    %386 = vmatpush1.msra.mxu0 0.0
    %387 = vmatprep.subr.mxu0 0.0
    %388 = vmatpush1.msra.mxu0 0.0
    %389 = vmatprep.subr.mxu0 0.0
    %390 = vmatpush1.msra.mxu0 0.0
    %391 = vmatprep.subr.mxu0 0.0
    %392 = vmatpush1.msra.mxu0 0.0
    %393 = vmatprep.subr.mxu0 0.0
    %394 = vmatpush1.msra.mxu0 0.0
    %395 = vmatprep.subr.mxu0 0.0
    %396 = vmatpush1.msra.mxu0 0.0
    %397 = vmatprep.subr.mxu0 0.0
    %398 = vmatpush1.msra.mxu0 0.0
    %399 = vmatprep.subr.mxu0 0.0
    %400 = vmatpush1.msra.mxu0 0.0
    %401 = vmatprep.subr.mxu0 0.0
    %402 = vmatpush1.msra.mxu0 0.0
    %403 = vmatprep.subr.mxu0 0.0
    %404 = vmatpush1.msra.mxu0 0.0
    %405 = vmatprep.subr.mxu0 0.0
    %406 = vmatpush1.msra.mxu0 0.0
    %407 = vmatprep.subr.mxu0 0.0
    %408 = vmatpush1.msra.mxu0 0.0
    %409 = vmatprep.subr.mxu0 0.0
    %410 = vmatpush1.msra.mxu0 0.0
    %411 = vmatprep.subr.mxu0 0.0
    %412 = vmatpush1.msra.mxu0 0.0
    %413 = vmatprep.subr.mxu0 0.0
    %414 = vmatpush1.msra.mxu0 0.0
    %415 = vmatprep.subr.mxu0 0.0
    %416 = vmatpush1.msra.mxu0 0.0
    %417 = vmatprep.mubr.f32.mxu0 0.0
    %418 = vmatmul.mubr.f32.gmra.mrb[0].mxu0 %v342
    %v419 = vpop.f32.mrb[0].mxu0
    %v420 = vadd.f32 %v324, %v419
    %v421 = vpop.f32.mrb[0].mxu0
    %v422 = vadd.f32 %v324, %v421
    %423 = vmatprep.mubr.f32.mxu0 0.0
    %424 = vmatmul.mubr.f32.gmra.mrb[0].mxu0 %v345
    %v425 = vpop.f32.mrb[0].mxu0
    %v426 = vadd.f32 %v329, %v425
    %v427 = vpop.f32.mrb[0].mxu0
    %v428 = vadd.f32 %v329, %v427
    %429 = vmatprep.mubr.f32.mxu0 0.0
    %430 = vmatmul.mubr.f32.gmra.mrb[0].mxu0 %v348
    %v431 = vpop.f32.mrb[0].mxu0
    %v432 = vadd.f32 %v334, %v431
    %v433 = vpop.f32.mrb[0].mxu0
    %v434 = vadd.f32 %v334, %v433
    %435 = vmatprep.mubr.f32.mxu0 0.0
    %436 = vmatmul.mubr.f32.gmra.mrb[0].mxu0 %v351
    %v437 = vpop.f32.mrb[0].mxu0
    %v438 = vadd.f32 %v339, %v437
    %v439 = vpop.f32.mrb[0].mxu0
    %v440 = vadd.f32 %v339, %v439
    %441 = vdwg.mxu0
    %v442 = vmax.f32 %v420, 0.0
    %v443 = vmax.f32 %v422, 0.0
    %v444 = vmax.f32 %v426, 0.0
    %v445 = vmax.f32 %v428, 0.0
    %v446 = vmax.f32 %v432, 0.0
    %v447 = vmax.f32 %v434, 0.0
    %v448 = vmax.f32 %v438, 0.0
    %v449 = vmax.f32 %v440, 0.0
    %v450 = vld [vmem:[%s3] sm:$0xff]
    %v451 = vld [vmem:[%s3 + $0x8] sm:$0xff]
    %v452 = vld [vmem:[%s3 + $0x10] sm:$0xff]
    %v453 = vld [vmem:[%s3 + $0x18] sm:$0xff]
    %v454 = vld [vmem:[%s3 + $0x20] sm:$0xff]
    %v455 = vld [vmem:[%s3 + $0x28] sm:$0xff]
    %v456 = vld [vmem:[%s3 + $0x30] sm:$0xff]
    %v457 = vld [vmem:[%s3 + $0x38] sm:$0xff]
    %v458 = vld [vmem:[%s3 + $0x40] sm:$0xff]
    %v459 = vld [vmem:[%s3 + $0x48] sm:$0xff]
    %v460 = vld [vmem:[%s3 + $0x50] sm:$0xff]
    %v461 = vld [vmem:[%s3 + $0x58] sm:$0xff]
    %v462 = vld [vmem:[%s3 + $0x60] sm:$0xff]
    %v463 = vld [vmem:[%s3 + $0x68] sm:$0xff]
    %v464 = vld [vmem:[%s3 + $0x70] sm:$0xff]
    %v465 = vld [vmem:[%s3 + $0x78] sm:$0xff]
    %v466 = vld [vmem:[%s3 + $0x80] sm:$0xff]
    %v467 = vld [vmem:[%s3 + $0x88] sm:$0xff]
    %v468 = vld [vmem:[%s3 + $0x90] sm:$0xff]
    %v469 = vld [vmem:[%s3 + $0x98] sm:$0xff]
    %v470 = vld [vmem:[%s3 + $0xa0] sm:$0xff]
    %v471 = vld [vmem:[%s3 + $0xa8] sm:$0xff]
    %v472 = vld [vmem:[%s3 + $0xb0] sm:$0xff]
    %v473 = vld [vmem:[%s3 + $0xb8] sm:$0xff]
    %v474 = vld [vmem:[%s3 + $0xc0] sm:$0xff]
    %v475 = vld [vmem:[%s3 + $0xc8] sm:$0xff]
    %v476 = vld [vmem:[%s3 + $0xd0] sm:$0xff]
    %v477 = vld [vmem:[%s3 + $0xd8] sm:$0xff]
    %v478 = vld [vmem:[%s3 + $0xe0] sm:$0xff]
    %v479 = vld [vmem:[%s3 + $0xe8] sm:$0xff]
    %v480 = vld [vmem:[%s3 + $0xf0] sm:$0xff]
    %v481 = vld [vmem:[%s3 + $0xf8] sm:$0xff]
    %482 = vmatprep.subr.mxu0 0.0
    %483 = vmatpush1.msra.mxu0 %v450
    %484 = vmatprep.subr.mxu0 0.0
    %485 = vmatpush1.msra.mxu0 %v451
    %486 = vmatprep.subr.mxu0 0.0
    %487 = vmatpush1.msra.mxu0 %v452
    %488 = vmatprep.subr.mxu0 0.0
    %489 = vmatpush1.msra.mxu0 %v453
    %490 = vmatprep.subr.mxu0 0.0
    %491 = vmatpush1.msra.mxu0 %v454
    %492 = vmatprep.subr.mxu0 0.0
    %493 = vmatpush1.msra.mxu0 %v455
    %494 = vmatprep.subr.mxu0 0.0
    %495 = vmatpush1.msra.mxu0 %v456
    %496 = vmatprep.subr.mxu0 0.0
    %497 = vmatpush1.msra.mxu0 %v457
    %498 = vmatprep.subr.mxu0 0.0
    %499 = vmatpush1.msra.mxu0 %v458
    %500 = vmatprep.subr.mxu0 0.0
    %501 = vmatpush1.msra.mxu0 %v459
    %502 = vmatprep.subr.mxu0 0.0
    %503 = vmatpush1.msra.mxu0 %v460
    %504 = vmatprep.subr.mxu0 0.0
    %505 = vmatpush1.msra.mxu0 %v461
    %506 = vmatprep.subr.mxu0 0.0
    %507 = vmatpush1.msra.mxu0 %v462
    %508 = vmatprep.subr.mxu0 0.0
    %509 = vmatpush1.msra.mxu0 %v463
    %510 = vmatprep.subr.mxu0 0.0
    %511 = vmatpush1.msra.mxu0 %v464
    %512 = vmatprep.subr.mxu0 0.0
    %513 = vmatpush1.msra.mxu0 %v465
    %514 = vmatprep.subr.mxu0 0.0
    %515 = vmatpush1.msra.mxu0 %v466
    %516 = vmatprep.subr.mxu0 0.0
    %517 = vmatpush1.msra.mxu0 %v467
    %518 = vmatprep.subr.mxu0 0.0
    %519 = vmatpush1.msra.mxu0 %v468
    %520 = vmatprep.subr.mxu0 0.0
    %521 = vmatpush1.msra.mxu0 %v469
    %522 = vmatprep.subr.mxu0 0.0
    %523 = vmatpush1.msra.mxu0 %v470
    %524 = vmatprep.subr.mxu0 0.0
    %525 = vmatpush1.msra.mxu0 %v471
    %526 = vmatprep.subr.mxu0 0.0
    %527 = vmatpush1.msra.mxu0 %v472
    %528 = vmatprep.subr.mxu0 0.0
    %529 = vmatpush1.msra.mxu0 %v473
    %530 = vmatprep.subr.mxu0 0.0
    %531 = vmatpush1.msra.mxu0 %v474
    %532 = vmatprep.subr.mxu0 0.0
    %533 = vmatpush1.msra.mxu0 %v475
    %534 = vmatprep.subr.mxu0 0.0
    %535 = vmatpush1.msra.mxu0 %v476
    %536 = vmatprep.subr.mxu0 0.0
    %537 = vmatpush1.msra.mxu0 %v477
    %538 = vmatprep.subr.mxu0 0.0
    %539 = vmatpush1.msra.mxu0 %v478
    %540 = vmatprep.subr.mxu0 0.0
    %541 = vmatpush1.msra.mxu0 %v479
    %542 = vmatprep.subr.mxu0 0.0
    %543 = vmatpush1.msra.mxu0 %v480
    %544 = vmatprep.subr.mxu0 0.0
    %545 = vmatpush1.msra.mxu0 %v481
    %546 = vmatprep.mubr.f32.mxu0 %v443
    %547 = vmatmul.mubr.f32.gmra.mrb[0].mxu0 %v442
    %v548 = vpop.f32.mrb[0].mxu0
    %v549 = vadd.f32 0.0, %v548
    %v550 = vpop.f32.mrb[0].mxu0
    %551 = vmatprep.mubr.f32.mxu0 %v445
    %552 = vmatmul.mubr.f32.gmra.mrb[0].mxu0 %v444
    %v553 = vpop.f32.mrb[0].mxu0
    %v554 = vadd.f32 0.0, %v553
    %v555 = vpop.f32.mrb[0].mxu0
    %556 = vmatprep.mubr.f32.mxu0 %v447
    %557 = vmatmul.mubr.f32.gmra.mrb[0].mxu0 %v446
    %v558 = vpop.f32.mrb[0].mxu0
    %v559 = vadd.f32 0.0, %v558
    %v560 = vpop.f32.mrb[0].mxu0
    %561 = vmatprep.mubr.f32.mxu0 %v449
    %562 = vmatmul.mubr.f32.gmra.mrb[0].mxu0 %v448
    %v563 = vpop.f32.mrb[0].mxu0
    %v564 = vadd.f32 0.0, %v563
    %v565 = vpop.f32.mrb[0].mxu0
    %566 = vdwg.mxu0
    %567 = vst.msk [vmem:[#allocation2 + $0x20] sm:$0xff] %vm299, %v549
    %568 = vst.msk [vmem:[#allocation2 + $0x28] sm:$0xff] %vm299, %v554
    %569 = vst.msk [vmem:[#allocation2 + $0x30] sm:$0xff] %vm299, %v559
    %570 = vst.msk [vmem:[#allocation2 + $0x38] sm:$0xff] %vm299, %v564
    %v571 = vld [vmem:[#allocation2] sm:$0x1]
    %v572 = vld [vmem:[#allocation2 + $0x20] sm:$0x1]
    %v574 = vrot.slane %v572, 7
    %vm576 = vcmask 1040384
    %v577 = vsel %vm576, %v571, %v574
    %v578 = vld [vmem:[%s4] sm:$0xff]
    %v579 = vld [vmem:[%s4 + $0x8] sm:$0xff]
    %v580 = vld [vmem:[%s4 + $0x10] sm:$0xff]
    %v581 = vld [vmem:[%s4 + $0x18] sm:$0xff]
    %v582 = vld [vmem:[%s4 + $0x20] sm:$0xff]
    %v583 = vld [vmem:[%s4 + $0x28] sm:$0xff]
    %v584 = vld [vmem:[%s4 + $0x30] sm:$0xff]
    %v585 = vld [vmem:[%s4 + $0x38] sm:$0xff]
    %v586 = vld [vmem:[%s4 + $0x40] sm:$0xff]
    %v587 = vld [vmem:[%s4 + $0x48] sm:$0xff]
    %v588 = vld [vmem:[%s4 + $0x50] sm:$0xff]
    %v589 = vld [vmem:[%s4 + $0x58] sm:$0xff]
    %v590 = vld [vmem:[%s4 + $0x60] sm:$0x1]
    %v591 = vld [vmem:[%s4 + $0x68] sm:$0x1]
    %v592 = vld [vmem:[#allocation2 + $0x1] sm:$0x1]
    %v593 = vld [vmem:[#allocation2 + $0x21] sm:$0x1]
    %v595 = vrot.slane %v593, 7
    %v597 = vsel %vm576, %v592, %v595
    %s598 = scalar_lea.vmem %s4, 112
    %v599 = vld [vmem:[%s598] sm:$0xff]
    %v600 = vld [vmem:[%s598 + $0x8] sm:$0xff]
    %v601 = vld [vmem:[%s598 + $0x10] sm:$0xff]
    %v602 = vld [vmem:[%s598 + $0x18] sm:$0xff]
    %v603 = vld [vmem:[%s598 + $0x20] sm:$0xff]
    %v604 = vld [vmem:[%s598 + $0x28] sm:$0xff]
    %v605 = vld [vmem:[%s598 + $0x30] sm:$0xff]
    %v606 = vld [vmem:[%s598 + $0x38] sm:$0xff]
    %v607 = vld [vmem:[%s598 + $0x40] sm:$0xff]
    %v608 = vld [vmem:[%s598 + $0x48] sm:$0xff]
    %v609 = vld [vmem:[%s598 + $0x50] sm:$0xff]
    %v610 = vld [vmem:[%s598 + $0x58] sm:$0xff]
    %v611 = vld [vmem:[%s598 + $0x60] sm:$0x1]
    %v612 = vld [vmem:[%s598 + $0x68] sm:$0x1]
    %v614 = vsel %vm299, %v597, 0
    %v617 = vsel %vm576, %v611, 0
    %v620 = vsel %vm576, %v612, 0
    %622 = vmatprep.subr.mxu0 %v600
    %623 = vmatpush1.msra.mxu0 %v599
    %624 = vmatprep.subr.mxu0 %v602
    %625 = vmatpush1.msra.mxu0 %v601
    %626 = vmatprep.subr.mxu0 %v604
    %627 = vmatpush1.msra.mxu0 %v603
    %628 = vmatprep.subr.mxu0 %v606
    %629 = vmatpush1.msra.mxu0 %v605
    %630 = vmatprep.subr.mxu0 %v608
    %631 = vmatpush1.msra.mxu0 %v607
    %632 = vmatprep.subr.mxu0 %v610
    %633 = vmatpush1.msra.mxu0 %v609
    %634 = vmatprep.subr.mxu0 %v620
    %635 = vmatpush1.msra.mxu0 %v617
    %636 = vmatprep.subr.mxu0 0.0
    %637 = vmatpush1.msra.mxu0 0.0
    %638 = vmatprep.subr.mxu0 0.0
    %639 = vmatpush1.msra.mxu0 0.0
    %640 = vmatprep.subr.mxu0 0.0
    %641 = vmatpush1.msra.mxu0 0.0
    %642 = vmatprep.subr.mxu0 0.0
    %643 = vmatpush1.msra.mxu0 0.0
    %644 = vmatprep.subr.mxu0 0.0
    %645 = vmatpush1.msra.mxu0 0.0
    %646 = vmatprep.subr.mxu0 0.0
    %647 = vmatpush1.msra.mxu0 0.0
    %648 = vmatprep.subr.mxu0 0.0
    %649 = vmatpush1.msra.mxu0 0.0
    %650 = vmatprep.subr.mxu0 0.0
    %651 = vmatpush1.msra.mxu0 0.0
    %652 = vmatprep.subr.mxu0 0.0
    %653 = vmatpush1.msra.mxu0 0.0
    %654 = vmatprep.subr.mxu0 0.0
    %655 = vmatpush1.msra.mxu0 0.0
    %656 = vmatprep.subr.mxu0 0.0
    %657 = vmatpush1.msra.mxu0 0.0
    %658 = vmatprep.subr.mxu0 0.0
    %659 = vmatpush1.msra.mxu0 0.0
    %660 = vmatprep.subr.mxu0 0.0
    %661 = vmatpush1.msra.mxu0 0.0
    %662 = vmatprep.subr.mxu0 0.0
    %663 = vmatpush1.msra.mxu0 0.0
    %664 = vmatprep.subr.mxu0 0.0
    %665 = vmatpush1.msra.mxu0 0.0
    %666 = vmatprep.subr.mxu0 0.0
    %667 = vmatpush1.msra.mxu0 0.0
    %668 = vmatprep.subr.mxu0 0.0
    %669 = vmatpush1.msra.mxu0 0.0
    %670 = vmatprep.subr.mxu0 0.0
    %671 = vmatpush1.msra.mxu0 0.0
    %672 = vmatprep.subr.mxu0 0.0
    %673 = vmatpush1.msra.mxu0 0.0
    %674 = vmatprep.subr.mxu0 0.0
    %675 = vmatpush1.msra.mxu0 0.0
    %676 = vmatprep.subr.mxu0 0.0
    %677 = vmatpush1.msra.mxu0 0.0
    %678 = vmatprep.subr.mxu0 0.0
    %679 = vmatpush1.msra.mxu0 0.0
    %680 = vmatprep.subr.mxu0 0.0
    %681 = vmatpush1.msra.mxu0 0.0
    %682 = vmatprep.subr.mxu0 0.0
    %683 = vmatpush1.msra.mxu0 0.0
    %684 = vmatprep.subr.mxu0 0.0
    %685 = vmatpush1.msra.mxu0 0.0
    %686 = vmatprep.mubr.f32.mxu0 0.0
    %687 = vmatmul.mubr.f32.gmra.mrb[0].mxu0 %v614
    %v688 = vpop.f32.mrb[0].mxu0
    %v689 = vadd.f32 0.0, %v688
    %v690 = vpop.f32.mrb[0].mxu0
    %v691 = vadd.f32 0.0, %v690
    %692 = vdwg.mxu0
    %v694 = vsel %vm299, %v577, 0
    %v697 = vsel %vm576, %v590, 0
    %v700 = vsel %vm576, %v591, 0
    %702 = vmatprep.subr.mxu0 %v579
    %703 = vmatpush1.msra.mxu0 %v578
    %704 = vmatprep.subr.mxu0 %v581
    %705 = vmatpush1.msra.mxu0 %v580
    %706 = vmatprep.subr.mxu0 %v583
    %707 = vmatpush1.msra.mxu0 %v582
    %708 = vmatprep.subr.mxu0 %v585
    %709 = vmatpush1.msra.mxu0 %v584
    %710 = vmatprep.subr.mxu0 %v587
    %711 = vmatpush1.msra.mxu0 %v586
    %712 = vmatprep.subr.mxu0 %v589
    %713 = vmatpush1.msra.mxu0 %v588
    %714 = vmatprep.subr.mxu0 %v700
    %715 = vmatpush1.msra.mxu0 %v697
    %716 = vmatprep.subr.mxu0 0.0
    %717 = vmatpush1.msra.mxu0 0.0
    %718 = vmatprep.subr.mxu0 0.0
    %719 = vmatpush1.msra.mxu0 0.0
    %720 = vmatprep.subr.mxu0 0.0
    %721 = vmatpush1.msra.mxu0 0.0
    %722 = vmatprep.subr.mxu0 0.0
    %723 = vmatpush1.msra.mxu0 0.0
    %724 = vmatprep.subr.mxu0 0.0
    %725 = vmatpush1.msra.mxu0 0.0
    %726 = vmatprep.subr.mxu0 0.0
    %727 = vmatpush1.msra.mxu0 0.0
    %728 = vmatprep.subr.mxu0 0.0
    %729 = vmatpush1.msra.mxu0 0.0
    %730 = vmatprep.subr.mxu0 0.0
    %731 = vmatpush1.msra.mxu0 0.0
    %732 = vmatprep.subr.mxu0 0.0
    %733 = vmatpush1.msra.mxu0 0.0
    %734 = vmatprep.subr.mxu0 0.0
    %735 = vmatpush1.msra.mxu0 0.0
    %736 = vmatprep.subr.mxu0 0.0
    %737 = vmatpush1.msra.mxu0 0.0
    %738 = vmatprep.subr.mxu0 0.0
    %739 = vmatpush1.msra.mxu0 0.0
    %740 = vmatprep.subr.mxu0 0.0
    %741 = vmatpush1.msra.mxu0 0.0
    %742 = vmatprep.subr.mxu0 0.0
    %743 = vmatpush1.msra.mxu0 0.0
    %744 = vmatprep.subr.mxu0 0.0
    %745 = vmatpush1.msra.mxu0 0.0
    %746 = vmatprep.subr.mxu0 0.0
    %747 = vmatpush1.msra.mxu0 0.0
    %748 = vmatprep.subr.mxu0 0.0
    %749 = vmatpush1.msra.mxu0 0.0
    %750 = vmatprep.subr.mxu0 0.0
    %751 = vmatpush1.msra.mxu0 0.0
    %752 = vmatprep.subr.mxu0 0.0
    %753 = vmatpush1.msra.mxu0 0.0
    %754 = vmatprep.subr.mxu0 0.0
    %755 = vmatpush1.msra.mxu0 0.0
    %756 = vmatprep.subr.mxu0 0.0
    %757 = vmatpush1.msra.mxu0 0.0
    %758 = vmatprep.subr.mxu0 0.0
    %759 = vmatpush1.msra.mxu0 0.0
    %760 = vmatprep.subr.mxu0 0.0
    %761 = vmatpush1.msra.mxu0 0.0
    %762 = vmatprep.subr.mxu0 0.0
    %763 = vmatpush1.msra.mxu0 0.0
    %764 = vmatprep.subr.mxu0 0.0
    %765 = vmatpush1.msra.mxu0 0.0
    %766 = vmatprep.mubr.f32.mxu0 0.0
    %767 = vmatmul.mubr.f32.gmra.mrb[0].mxu0 %v694
    %v768 = vpop.f32.mrb[0].mxu0
    %v769 = vadd.f32 %v689, %v768
    %v770 = vpop.f32.mrb[0].mxu0
    %v771 = vadd.f32 %v691, %v770
    %772 = vdwg.mxu0
    %v773 = vld [vmem:[#allocation2 + $0x2] sm:$0x1]
    %v774 = vld [vmem:[#allocation2 + $0x22] sm:$0x1]
    %v776 = vrot.slane %v774, 7
    %v778 = vsel %vm576, %v773, %v776
    %s779 = scalar_lea.vmem %s4, 224
    %v780 = vld [vmem:[%s779] sm:$0xff]
    %v781 = vld [vmem:[%s779 + $0x8] sm:$0xff]
    %v782 = vld [vmem:[%s779 + $0x10] sm:$0xff]
    %v783 = vld [vmem:[%s779 + $0x18] sm:$0xff]
    %v784 = vld [vmem:[%s779 + $0x20] sm:$0xff]
    %v785 = vld [vmem:[%s779 + $0x28] sm:$0xff]
    %v786 = vld [vmem:[%s779 + $0x30] sm:$0xff]
    %v787 = vld [vmem:[%s779 + $0x38] sm:$0xff]
    %v788 = vld [vmem:[%s779 + $0x40] sm:$0xff]
    %v789 = vld [vmem:[%s779 + $0x48] sm:$0xff]
    %v790 = vld [vmem:[%s779 + $0x50] sm:$0xff]
    %v791 = vld [vmem:[%s779 + $0x58] sm:$0xff]
    %v792 = vld [vmem:[%s779 + $0x60] sm:$0x1]
    %v793 = vld [vmem:[%s779 + $0x68] sm:$0x1]
    %v795 = vsel %vm299, %v778, 0
    %v798 = vsel %vm576, %v792, 0
    %v801 = vsel %vm576, %v793, 0
    %803 = vmatprep.subr.mxu0 %v781
    %804 = vmatpush1.msra.mxu0 %v780
    %805 = vmatprep.subr.mxu0 %v783
    %806 = vmatpush1.msra.mxu0 %v782
    %807 = vmatprep.subr.mxu0 %v785
    %808 = vmatpush1.msra.mxu0 %v784
    %809 = vmatprep.subr.mxu0 %v787
    %810 = vmatpush1.msra.mxu0 %v786
    %811 = vmatprep.subr.mxu0 %v789
    %812 = vmatpush1.msra.mxu0 %v788
    %813 = vmatprep.subr.mxu0 %v791
    %814 = vmatpush1.msra.mxu0 %v790
    %815 = vmatprep.subr.mxu0 %v801
    %816 = vmatpush1.msra.mxu0 %v798
    %817 = vmatprep.subr.mxu0 0.0
    %818 = vmatpush1.msra.mxu0 0.0
    %819 = vmatprep.subr.mxu0 0.0
    %820 = vmatpush1.msra.mxu0 0.0
    %821 = vmatprep.subr.mxu0 0.0
    %822 = vmatpush1.msra.mxu0 0.0
    %823 = vmatprep.subr.mxu0 0.0
    %824 = vmatpush1.msra.mxu0 0.0
    %825 = vmatprep.subr.mxu0 0.0
    %826 = vmatpush1.msra.mxu0 0.0
    %827 = vmatprep.subr.mxu0 0.0
    %828 = vmatpush1.msra.mxu0 0.0
    %829 = vmatprep.subr.mxu0 0.0
    %830 = vmatpush1.msra.mxu0 0.0
    %831 = vmatprep.subr.mxu0 0.0
    %832 = vmatpush1.msra.mxu0 0.0
    %833 = vmatprep.subr.mxu0 0.0
    %834 = vmatpush1.msra.mxu0 0.0
    %835 = vmatprep.subr.mxu0 0.0
    %836 = vmatpush1.msra.mxu0 0.0
    %837 = vmatprep.subr.mxu0 0.0
    %838 = vmatpush1.msra.mxu0 0.0
    %839 = vmatprep.subr.mxu0 0.0
    %840 = vmatpush1.msra.mxu0 0.0
    %841 = vmatprep.subr.mxu0 0.0
    %842 = vmatpush1.msra.mxu0 0.0
    %843 = vmatprep.subr.mxu0 0.0
    %844 = vmatpush1.msra.mxu0 0.0
    %845 = vmatprep.subr.mxu0 0.0
    %846 = vmatpush1.msra.mxu0 0.0
    %847 = vmatprep.subr.mxu0 0.0
    %848 = vmatpush1.msra.mxu0 0.0
    %849 = vmatprep.subr.mxu0 0.0
    %850 = vmatpush1.msra.mxu0 0.0
    %851 = vmatprep.subr.mxu0 0.0
    %852 = vmatpush1.msra.mxu0 0.0
    %853 = vmatprep.subr.mxu0 0.0
    %854 = vmatpush1.msra.mxu0 0.0
    %855 = vmatprep.subr.mxu0 0.0
    %856 = vmatpush1.msra.mxu0 0.0
    %857 = vmatprep.subr.mxu0 0.0
    %858 = vmatpush1.msra.mxu0 0.0
    %859 = vmatprep.subr.mxu0 0.0
    %860 = vmatpush1.msra.mxu0 0.0
    %861 = vmatprep.subr.mxu0 0.0
    %862 = vmatpush1.msra.mxu0 0.0
    %863 = vmatprep.subr.mxu0 0.0
    %864 = vmatpush1.msra.mxu0 0.0
    %865 = vmatprep.subr.mxu0 0.0
    %866 = vmatpush1.msra.mxu0 0.0
    %867 = vmatprep.mubr.f32.mxu0 0.0
    %868 = vmatmul.mubr.f32.gmra.mrb[0].mxu0 %v795
    %v869 = vpop.f32.mrb[0].mxu0
    %v870 = vadd.f32 0.0, %v869
    %v871 = vpop.f32.mrb[0].mxu0
    %v872 = vadd.f32 0.0, %v871
    %873 = vdwg.mxu0
    %v874 = vadd.f32 %v769, %v870
    %v875 = vadd.f32 %v771, %v872
    %v876 = vld [vmem:[#allocation2 + $0x3] sm:$0x1]
    %v877 = vld [vmem:[#allocation2 + $0x23] sm:$0x1]
    %v879 = vrot.slane %v877, 7
    %v881 = vsel %vm576, %v876, %v879
    %s882 = scalar_lea.vmem %s4, 336
    %v883 = vld [vmem:[%s882] sm:$0xff]
    %v884 = vld [vmem:[%s882 + $0x8] sm:$0xff]
    %v885 = vld [vmem:[%s882 + $0x10] sm:$0xff]
    %v886 = vld [vmem:[%s882 + $0x18] sm:$0xff]
    %v887 = vld [vmem:[%s882 + $0x20] sm:$0xff]
    %v888 = vld [vmem:[%s882 + $0x28] sm:$0xff]
    %v889 = vld [vmem:[%s882 + $0x30] sm:$0xff]
    %v890 = vld [vmem:[%s882 + $0x38] sm:$0xff]
    %v891 = vld [vmem:[%s882 + $0x40] sm:$0xff]
    %v892 = vld [vmem:[%s882 + $0x48] sm:$0xff]
    %v893 = vld [vmem:[%s882 + $0x50] sm:$0xff]
    %v894 = vld [vmem:[%s882 + $0x58] sm:$0xff]
    %v895 = vld [vmem:[%s882 + $0x60] sm:$0x1]
    %v896 = vld [vmem:[%s882 + $0x68] sm:$0x1]
    %v898 = vsel %vm299, %v881, 0
    %v901 = vsel %vm576, %v895, 0
    %v904 = vsel %vm576, %v896, 0
    %906 = vmatprep.subr.mxu0 %v884
    %907 = vmatpush1.msra.mxu0 %v883
    %908 = vmatprep.subr.mxu0 %v886
    %909 = vmatpush1.msra.mxu0 %v885
    %910 = vmatprep.subr.mxu0 %v888
    %911 = vmatpush1.msra.mxu0 %v887
    %912 = vmatprep.subr.mxu0 %v890
    %913 = vmatpush1.msra.mxu0 %v889
    %914 = vmatprep.subr.mxu0 %v892
    %915 = vmatpush1.msra.mxu0 %v891
    %916 = vmatprep.subr.mxu0 %v894
    %917 = vmatpush1.msra.mxu0 %v893
    %918 = vmatprep.subr.mxu0 %v904
    %919 = vmatpush1.msra.mxu0 %v901
    %920 = vmatprep.subr.mxu0 0.0
    %921 = vmatpush1.msra.mxu0 0.0
    %922 = vmatprep.subr.mxu0 0.0
    %923 = vmatpush1.msra.mxu0 0.0
    %924 = vmatprep.subr.mxu0 0.0
    %925 = vmatpush1.msra.mxu0 0.0
    %926 = vmatprep.subr.mxu0 0.0
    %927 = vmatpush1.msra.mxu0 0.0
    %928 = vmatprep.subr.mxu0 0.0
    %929 = vmatpush1.msra.mxu0 0.0
    %930 = vmatprep.subr.mxu0 0.0
    %931 = vmatpush1.msra.mxu0 0.0
    %932 = vmatprep.subr.mxu0 0.0
    %933 = vmatpush1.msra.mxu0 0.0
    %934 = vmatprep.subr.mxu0 0.0
    %935 = vmatpush1.msra.mxu0 0.0
    %936 = vmatprep.subr.mxu0 0.0
    %937 = vmatpush1.msra.mxu0 0.0
    %938 = vmatprep.subr.mxu0 0.0
    %939 = vmatpush1.msra.mxu0 0.0
    %940 = vmatprep.subr.mxu0 0.0
    %941 = vmatpush1.msra.mxu0 0.0
    %942 = vmatprep.subr.mxu0 0.0
    %943 = vmatpush1.msra.mxu0 0.0
    %944 = vmatprep.subr.mxu0 0.0
    %945 = vmatpush1.msra.mxu0 0.0
    %946 = vmatprep.subr.mxu0 0.0
    %947 = vmatpush1.msra.mxu0 0.0
    %948 = vmatprep.subr.mxu0 0.0
    %949 = vmatpush1.msra.mxu0 0.0
    %950 = vmatprep.subr.mxu0 0.0
    %951 = vmatpush1.msra.mxu0 0.0
    %952 = vmatprep.subr.mxu0 0.0
    %953 = vmatpush1.msra.mxu0 0.0
    %954 = vmatprep.subr.mxu0 0.0
    %955 = vmatpush1.msra.mxu0 0.0
    %956 = vmatprep.subr.mxu0 0.0
    %957 = vmatpush1.msra.mxu0 0.0
    %958 = vmatprep.subr.mxu0 0.0
    %959 = vmatpush1.msra.mxu0 0.0
    %960 = vmatprep.subr.mxu0 0.0
    %961 = vmatpush1.msra.mxu0 0.0
    %962 = vmatprep.subr.mxu0 0.0
    %963 = vmatpush1.msra.mxu0 0.0
    %964 = vmatprep.subr.mxu0 0.0
    %965 = vmatpush1.msra.mxu0 0.0
    %966 = vmatprep.subr.mxu0 0.0
    %967 = vmatpush1.msra.mxu0 0.0
    %968 = vmatprep.subr.mxu0 0.0
    %969 = vmatpush1.msra.mxu0 0.0
    %970 = vmatprep.mubr.f32.mxu0 0.0
    %971 = vmatmul.mubr.f32.gmra.mrb[0].mxu0 %v898
    %v972 = vpop.f32.mrb[0].mxu0
    %v973 = vadd.f32 0.0, %v972
    %v974 = vpop.f32.mrb[0].mxu0
    %v975 = vadd.f32 0.0, %v974
    %976 = vdwg.mxu0
    %v977 = vadd.f32 %v874, %v973
    %v978 = vadd.f32 %v875, %v975
    %v979 = vld [vmem:[#allocation2 + $0x4] sm:$0x1]
    %v980 = vld [vmem:[#allocation2 + $0x24] sm:$0x1]
    %v982 = vrot.slane %v980, 7
    %v984 = vsel %vm576, %v979, %v982
    %s985 = scalar_lea.vmem %s4, 448
    %v986 = vld [vmem:[%s985] sm:$0xff]
    %v987 = vld [vmem:[%s985 + $0x8] sm:$0xff]
    %v988 = vld [vmem:[%s985 + $0x10] sm:$0xff]
    %v989 = vld [vmem:[%s985 + $0x18] sm:$0xff]
    %v990 = vld [vmem:[%s985 + $0x20] sm:$0xff]
    %v991 = vld [vmem:[%s985 + $0x28] sm:$0xff]
    %v992 = vld [vmem:[%s985 + $0x30] sm:$0xff]
    %v993 = vld [vmem:[%s985 + $0x38] sm:$0xff]
    %v994 = vld [vmem:[%s985 + $0x40] sm:$0xff]
    %v995 = vld [vmem:[%s985 + $0x48] sm:$0xff]
    %v996 = vld [vmem:[%s985 + $0x50] sm:$0xff]
    %v997 = vld [vmem:[%s985 + $0x58] sm:$0xff]
    %v998 = vld [vmem:[%s985 + $0x60] sm:$0x1]
    %v999 = vld [vmem:[%s985 + $0x68] sm:$0x1]
    %v1001 = vsel %vm299, %v984, 0
    %v1004 = vsel %vm576, %v998, 0
    %v1007 = vsel %vm576, %v999, 0
    %1009 = vmatprep.subr.mxu0 %v987
    %1010 = vmatpush1.msra.mxu0 %v986
    %1011 = vmatprep.subr.mxu0 %v989
    %1012 = vmatpush1.msra.mxu0 %v988
    %1013 = vmatprep.subr.mxu0 %v991
    %1014 = vmatpush1.msra.mxu0 %v990
    %1015 = vmatprep.subr.mxu0 %v993
    %1016 = vmatpush1.msra.mxu0 %v992
    %1017 = vmatprep.subr.mxu0 %v995
    %1018 = vmatpush1.msra.mxu0 %v994
    %1019 = vmatprep.subr.mxu0 %v997
    %1020 = vmatpush1.msra.mxu0 %v996
    %1021 = vmatprep.subr.mxu0 %v1007
    %1022 = vmatpush1.msra.mxu0 %v1004
    %1023 = vmatprep.subr.mxu0 0.0
    %1024 = vmatpush1.msra.mxu0 0.0
    %1025 = vmatprep.subr.mxu0 0.0
    %1026 = vmatpush1.msra.mxu0 0.0
    %1027 = vmatprep.subr.mxu0 0.0
    %1028 = vmatpush1.msra.mxu0 0.0
    %1029 = vmatprep.subr.mxu0 0.0
    %1030 = vmatpush1.msra.mxu0 0.0
    %1031 = vmatprep.subr.mxu0 0.0
    %1032 = vmatpush1.msra.mxu0 0.0
    %1033 = vmatprep.subr.mxu0 0.0
    %1034 = vmatpush1.msra.mxu0 0.0
    %1035 = vmatprep.subr.mxu0 0.0
    %1036 = vmatpush1.msra.mxu0 0.0
    %1037 = vmatprep.subr.mxu0 0.0
    %1038 = vmatpush1.msra.mxu0 0.0
    %1039 = vmatprep.subr.mxu0 0.0
    %1040 = vmatpush1.msra.mxu0 0.0
    %1041 = vmatprep.subr.mxu0 0.0
    %1042 = vmatpush1.msra.mxu0 0.0
    %1043 = vmatprep.subr.mxu0 0.0
    %1044 = vmatpush1.msra.mxu0 0.0
    %1045 = vmatprep.subr.mxu0 0.0
    %1046 = vmatpush1.msra.mxu0 0.0
    %1047 = vmatprep.subr.mxu0 0.0
    %1048 = vmatpush1.msra.mxu0 0.0
    %1049 = vmatprep.subr.mxu0 0.0
    %1050 = vmatpush1.msra.mxu0 0.0
    %1051 = vmatprep.subr.mxu0 0.0
    %1052 = vmatpush1.msra.mxu0 0.0
    %1053 = vmatprep.subr.mxu0 0.0
    %1054 = vmatpush1.msra.mxu0 0.0
    %1055 = vmatprep.subr.mxu0 0.0
    %1056 = vmatpush1.msra.mxu0 0.0
    %1057 = vmatprep.subr.mxu0 0.0
    %1058 = vmatpush1.msra.mxu0 0.0
    %1059 = vmatprep.subr.mxu0 0.0
    %1060 = vmatpush1.msra.mxu0 0.0
    %1061 = vmatprep.subr.mxu0 0.0
    %1062 = vmatpush1.msra.mxu0 0.0
    %1063 = vmatprep.subr.mxu0 0.0
    %1064 = vmatpush1.msra.mxu0 0.0
    %1065 = vmatprep.subr.mxu0 0.0
    %1066 = vmatpush1.msra.mxu0 0.0
    %1067 = vmatprep.subr.mxu0 0.0
    %1068 = vmatpush1.msra.mxu0 0.0
    %1069 = vmatprep.subr.mxu0 0.0
    %1070 = vmatpush1.msra.mxu0 0.0
    %1071 = vmatprep.subr.mxu0 0.0
    %1072 = vmatpush1.msra.mxu0 0.0
    %1073 = vmatprep.mubr.f32.mxu0 0.0
    %1074 = vmatmul.mubr.f32.gmra.mrb[0].mxu0 %v1001
    %v1075 = vpop.f32.mrb[0].mxu0
    %v1076 = vadd.f32 0.0, %v1075
    %v1077 = vpop.f32.mrb[0].mxu0
    %v1078 = vadd.f32 0.0, %v1077
    %1079 = vdwg.mxu0
    %v1080 = vadd.f32 %v977, %v1076
    %v1081 = vadd.f32 %v978, %v1078
    %v1082 = vld [vmem:[#allocation2 + $0x5] sm:$0x1]
    %v1083 = vld [vmem:[#allocation2 + $0x25] sm:$0x1]
    %v1085 = vrot.slane %v1083, 7
    %v1087 = vsel %vm576, %v1082, %v1085
    %s1088 = scalar_lea.vmem %s4, 560
    %v1089 = vld [vmem:[%s1088] sm:$0xff]
    %v1090 = vld [vmem:[%s1088 + $0x8] sm:$0xff]
    %v1091 = vld [vmem:[%s1088 + $0x10] sm:$0xff]
    %v1092 = vld [vmem:[%s1088 + $0x18] sm:$0xff]
    %v1093 = vld [vmem:[%s1088 + $0x20] sm:$0xff]
    %v1094 = vld [vmem:[%s1088 + $0x28] sm:$0xff]
    %v1095 = vld [vmem:[%s1088 + $0x30] sm:$0xff]
    %v1096 = vld [vmem:[%s1088 + $0x38] sm:$0xff]
    %v1097 = vld [vmem:[%s1088 + $0x40] sm:$0xff]
    %v1098 = vld [vmem:[%s1088 + $0x48] sm:$0xff]
    %v1099 = vld [vmem:[%s1088 + $0x50] sm:$0xff]
    %v1100 = vld [vmem:[%s1088 + $0x58] sm:$0xff]
    %v1101 = vld [vmem:[%s1088 + $0x60] sm:$0x1]
    %v1102 = vld [vmem:[%s1088 + $0x68] sm:$0x1]
    %v1104 = vsel %vm299, %v1087, 0
    %v1107 = vsel %vm576, %v1101, 0
    %v1110 = vsel %vm576, %v1102, 0
    %1112 = vmatprep.subr.mxu0 %v1090
    %1113 = vmatpush1.msra.mxu0 %v1089
    %1114 = vmatprep.subr.mxu0 %v1092
    %1115 = vmatpush1.msra.mxu0 %v1091
    %1116 = vmatprep.subr.mxu0 %v1094
    %1117 = vmatpush1.msra.mxu0 %v1093
    %1118 = vmatprep.subr.mxu0 %v1096
    %1119 = vmatpush1.msra.mxu0 %v1095
    %1120 = vmatprep.subr.mxu0 %v1098
    %1121 = vmatpush1.msra.mxu0 %v1097
    %1122 = vmatprep.subr.mxu0 %v1100
    %1123 = vmatpush1.msra.mxu0 %v1099
    %1124 = vmatprep.subr.mxu0 %v1110
    %1125 = vmatpush1.msra.mxu0 %v1107
    %1126 = vmatprep.subr.mxu0 0.0
    %1127 = vmatpush1.msra.mxu0 0.0
    %1128 = vmatprep.subr.mxu0 0.0
    %1129 = vmatpush1.msra.mxu0 0.0
    %1130 = vmatprep.subr.mxu0 0.0
    %1131 = vmatpush1.msra.mxu0 0.0
    %1132 = vmatprep.subr.mxu0 0.0
    %1133 = vmatpush1.msra.mxu0 0.0
    %1134 = vmatprep.subr.mxu0 0.0
    %1135 = vmatpush1.msra.mxu0 0.0
    %1136 = vmatprep.subr.mxu0 0.0
    %1137 = vmatpush1.msra.mxu0 0.0
    %1138 = vmatprep.subr.mxu0 0.0
    %1139 = vmatpush1.msra.mxu0 0.0
    %1140 = vmatprep.subr.mxu0 0.0
    %1141 = vmatpush1.msra.mxu0 0.0
    %1142 = vmatprep.subr.mxu0 0.0
    %1143 = vmatpush1.msra.mxu0 0.0
    %1144 = vmatprep.subr.mxu0 0.0
    %1145 = vmatpush1.msra.mxu0 0.0
    %1146 = vmatprep.subr.mxu0 0.0
    %1147 = vmatpush1.msra.mxu0 0.0
    %1148 = vmatprep.subr.mxu0 0.0
    %1149 = vmatpush1.msra.mxu0 0.0
    %1150 = vmatprep.subr.mxu0 0.0
    %1151 = vmatpush1.msra.mxu0 0.0
    %1152 = vmatprep.subr.mxu0 0.0
    %1153 = vmatpush1.msra.mxu0 0.0
    %1154 = vmatprep.subr.mxu0 0.0
    %1155 = vmatpush1.msra.mxu0 0.0
    %1156 = vmatprep.subr.mxu0 0.0
    %1157 = vmatpush1.msra.mxu0 0.0
    %1158 = vmatprep.subr.mxu0 0.0
    %1159 = vmatpush1.msra.mxu0 0.0
    %1160 = vmatprep.subr.mxu0 0.0
    %1161 = vmatpush1.msra.mxu0 0.0
    %1162 = vmatprep.subr.mxu0 0.0
    %1163 = vmatpush1.msra.mxu0 0.0
    %1164 = vmatprep.subr.mxu0 0.0
    %1165 = vmatpush1.msra.mxu0 0.0
    %1166 = vmatprep.subr.mxu0 0.0
    %1167 = vmatpush1.msra.mxu0 0.0
    %1168 = vmatprep.subr.mxu0 0.0
    %1169 = vmatpush1.msra.mxu0 0.0
    %1170 = vmatprep.subr.mxu0 0.0
    %1171 = vmatpush1.msra.mxu0 0.0
    %1172 = vmatprep.subr.mxu0 0.0
    %1173 = vmatpush1.msra.mxu0 0.0
    %1174 = vmatprep.subr.mxu0 0.0
    %1175 = vmatpush1.msra.mxu0 0.0
    %1176 = vmatprep.mubr.f32.mxu0 0.0
    %1177 = vmatmul.mubr.f32.gmra.mrb[0].mxu0 %v1104
    %v1178 = vpop.f32.mrb[0].mxu0
    %v1179 = vadd.f32 0.0, %v1178
    %v1180 = vpop.f32.mrb[0].mxu0
    %v1181 = vadd.f32 0.0, %v1180
    %1182 = vdwg.mxu0
    %v1183 = vadd.f32 %v1080, %v1179
    %v1184 = vadd.f32 %v1081, %v1181
    %v1185 = vld [vmem:[#allocation2 + $0x6] sm:$0x1]
    %v1186 = vld [vmem:[#allocation2 + $0x26] sm:$0x1]
    %v1188 = vrot.slane %v1186, 7
    %v1190 = vsel %vm576, %v1185, %v1188
    %s1191 = scalar_lea.vmem %s4, 672
    %v1192 = vld [vmem:[%s1191] sm:$0xff]
    %v1193 = vld [vmem:[%s1191 + $0x8] sm:$0xff]
    %v1194 = vld [vmem:[%s1191 + $0x10] sm:$0xff]
    %v1195 = vld [vmem:[%s1191 + $0x18] sm:$0xff]
    %v1196 = vld [vmem:[%s1191 + $0x20] sm:$0xff]
    %v1197 = vld [vmem:[%s1191 + $0x28] sm:$0xff]
    %v1198 = vld [vmem:[%s1191 + $0x30] sm:$0xff]
    %v1199 = vld [vmem:[%s1191 + $0x38] sm:$0xff]
    %v1200 = vld [vmem:[%s1191 + $0x40] sm:$0xff]
    %v1201 = vld [vmem:[%s1191 + $0x48] sm:$0xff]
    %v1202 = vld [vmem:[%s1191 + $0x50] sm:$0xff]
    %v1203 = vld [vmem:[%s1191 + $0x58] sm:$0xff]
    %v1204 = vld [vmem:[%s1191 + $0x60] sm:$0x1]
    %v1205 = vld [vmem:[%s1191 + $0x68] sm:$0x1]
    %v1207 = vsel %vm299, %v1190, 0
    %v1210 = vsel %vm576, %v1204, 0
    %v1213 = vsel %vm576, %v1205, 0
    %1215 = vmatprep.subr.mxu0 %v1193
    %1216 = vmatpush1.msra.mxu0 %v1192
    %1217 = vmatprep.subr.mxu0 %v1195
    %1218 = vmatpush1.msra.mxu0 %v1194
    %1219 = vmatprep.subr.mxu0 %v1197
    %1220 = vmatpush1.msra.mxu0 %v1196
    %1221 = vmatprep.subr.mxu0 %v1199
    %1222 = vmatpush1.msra.mxu0 %v1198
    %1223 = vmatprep.subr.mxu0 %v1201
    %1224 = vmatpush1.msra.mxu0 %v1200
    %1225 = vmatprep.subr.mxu0 %v1203
    %1226 = vmatpush1.msra.mxu0 %v1202
    %1227 = vmatprep.subr.mxu0 %v1213
    %1228 = vmatpush1.msra.mxu0 %v1210
    %1229 = vmatprep.subr.mxu0 0.0
    %1230 = vmatpush1.msra.mxu0 0.0
    %1231 = vmatprep.subr.mxu0 0.0
    %1232 = vmatpush1.msra.mxu0 0.0
    %1233 = vmatprep.subr.mxu0 0.0
    %1234 = vmatpush1.msra.mxu0 0.0
    %1235 = vmatprep.subr.mxu0 0.0
    %1236 = vmatpush1.msra.mxu0 0.0
    %1237 = vmatprep.subr.mxu0 0.0
    %1238 = vmatpush1.msra.mxu0 0.0
    %1239 = vmatprep.subr.mxu0 0.0
    %1240 = vmatpush1.msra.mxu0 0.0
    %1241 = vmatprep.subr.mxu0 0.0
    %1242 = vmatpush1.msra.mxu0 0.0
    %1243 = vmatprep.subr.mxu0 0.0
    %1244 = vmatpush1.msra.mxu0 0.0
    %1245 = vmatprep.subr.mxu0 0.0
    %1246 = vmatpush1.msra.mxu0 0.0
    %1247 = vmatprep.subr.mxu0 0.0
    %1248 = vmatpush1.msra.mxu0 0.0
    %1249 = vmatprep.subr.mxu0 0.0
    %1250 = vmatpush1.msra.mxu0 0.0
    %1251 = vmatprep.subr.mxu0 0.0
    %1252 = vmatpush1.msra.mxu0 0.0
    %1253 = vmatprep.subr.mxu0 0.0
    %1254 = vmatpush1.msra.mxu0 0.0
    %1255 = vmatprep.subr.mxu0 0.0
    %1256 = vmatpush1.msra.mxu0 0.0
    %1257 = vmatprep.subr.mxu0 0.0
    %1258 = vmatpush1.msra.mxu0 0.0
    %1259 = vmatprep.subr.mxu0 0.0
    %1260 = vmatpush1.msra.mxu0 0.0
    %1261 = vmatprep.subr.mxu0 0.0
    %1262 = vmatpush1.msra.mxu0 0.0
    %1263 = vmatprep.subr.mxu0 0.0
    %1264 = vmatpush1.msra.mxu0 0.0
    %1265 = vmatprep.subr.mxu0 0.0
    %1266 = vmatpush1.msra.mxu0 0.0
    %1267 = vmatprep.subr.mxu0 0.0
    %1268 = vmatpush1.msra.mxu0 0.0
    %1269 = vmatprep.subr.mxu0 0.0
    %1270 = vmatpush1.msra.mxu0 0.0
    %1271 = vmatprep.subr.mxu0 0.0
    %1272 = vmatpush1.msra.mxu0 0.0
    %1273 = vmatprep.subr.mxu0 0.0
    %1274 = vmatpush1.msra.mxu0 0.0
    %1275 = vmatprep.subr.mxu0 0.0
    %1276 = vmatpush1.msra.mxu0 0.0
    %1277 = vmatprep.subr.mxu0 0.0
    %1278 = vmatpush1.msra.mxu0 0.0
    %1279 = vmatprep.mubr.f32.mxu0 0.0
    %1280 = vmatmul.mubr.f32.gmra.mrb[0].mxu0 %v1207
    %v1281 = vpop.f32.mrb[0].mxu0
    %v1282 = vadd.f32 0.0, %v1281
    %v1283 = vpop.f32.mrb[0].mxu0
    %v1284 = vadd.f32 0.0, %v1283
    %1285 = vdwg.mxu0
    %v1286 = vadd.f32 %v1183, %v1282
    %v1287 = vadd.f32 %v1184, %v1284
    %v1288 = vld [vmem:[#allocation2 + $0x7] sm:$0x1]
    %v1289 = vld [vmem:[#allocation2 + $0x27] sm:$0x1]
    %v1291 = vrot.slane %v1289, 7
    %v1293 = vsel %vm576, %v1288, %v1291
    %s1294 = scalar_lea.vmem %s4, 784
    %v1295 = vld [vmem:[%s1294] sm:$0xff]
    %v1296 = vld [vmem:[%s1294 + $0x8] sm:$0xff]
    %v1297 = vld [vmem:[%s1294 + $0x10] sm:$0xff]
    %v1298 = vld [vmem:[%s1294 + $0x18] sm:$0xff]
    %v1299 = vld [vmem:[%s1294 + $0x20] sm:$0xff]
    %v1300 = vld [vmem:[%s1294 + $0x28] sm:$0xff]
    %v1301 = vld [vmem:[%s1294 + $0x30] sm:$0xff]
    %v1302 = vld [vmem:[%s1294 + $0x38] sm:$0xff]
    %v1303 = vld [vmem:[%s1294 + $0x40] sm:$0xff]
    %v1304 = vld [vmem:[%s1294 + $0x48] sm:$0xff]
    %v1305 = vld [vmem:[%s1294 + $0x50] sm:$0xff]
    %v1306 = vld [vmem:[%s1294 + $0x58] sm:$0xff]
    %v1307 = vld [vmem:[%s1294 + $0x60] sm:$0x1]
    %v1308 = vld [vmem:[%s1294 + $0x68] sm:$0x1]
    %v1310 = vsel %vm299, %v1293, 0
    %v1313 = vsel %vm576, %v1307, 0
    %v1316 = vsel %vm576, %v1308, 0
    %1318 = vmatprep.subr.mxu0 %v1296
    %1319 = vmatpush1.msra.mxu0 %v1295
    %1320 = vmatprep.subr.mxu0 %v1298
    %1321 = vmatpush1.msra.mxu0 %v1297
    %1322 = vmatprep.subr.mxu0 %v1300
    %1323 = vmatpush1.msra.mxu0 %v1299
    %1324 = vmatprep.subr.mxu0 %v1302
    %1325 = vmatpush1.msra.mxu0 %v1301
    %1326 = vmatprep.subr.mxu0 %v1304
    %1327 = vmatpush1.msra.mxu0 %v1303
    %1328 = vmatprep.subr.mxu0 %v1306
    %1329 = vmatpush1.msra.mxu0 %v1305
    %1330 = vmatprep.subr.mxu0 %v1316
    %1331 = vmatpush1.msra.mxu0 %v1313
    %1332 = vmatprep.subr.mxu0 0.0
    %1333 = vmatpush1.msra.mxu0 0.0
    %1334 = vmatprep.subr.mxu0 0.0
    %1335 = vmatpush1.msra.mxu0 0.0
    %1336 = vmatprep.subr.mxu0 0.0
    %1337 = vmatpush1.msra.mxu0 0.0
    %1338 = vmatprep.subr.mxu0 0.0
    %1339 = vmatpush1.msra.mxu0 0.0
    %1340 = vmatprep.subr.mxu0 0.0
    %1341 = vmatpush1.msra.mxu0 0.0
    %1342 = vmatprep.subr.mxu0 0.0
    %1343 = vmatpush1.msra.mxu0 0.0
    %1344 = vmatprep.subr.mxu0 0.0
    %1345 = vmatpush1.msra.mxu0 0.0
    %1346 = vmatprep.subr.mxu0 0.0
    %1347 = vmatpush1.msra.mxu0 0.0
    %1348 = vmatprep.subr.mxu0 0.0
    %1349 = vmatpush1.msra.mxu0 0.0
    %1350 = vmatprep.subr.mxu0 0.0
    %1351 = vmatpush1.msra.mxu0 0.0
    %1352 = vmatprep.subr.mxu0 0.0
    %1353 = vmatpush1.msra.mxu0 0.0
    %1354 = vmatprep.subr.mxu0 0.0
    %1355 = vmatpush1.msra.mxu0 0.0
    %1356 = vmatprep.subr.mxu0 0.0
    %1357 = vmatpush1.msra.mxu0 0.0
    %1358 = vmatprep.subr.mxu0 0.0
    %1359 = vmatpush1.msra.mxu0 0.0
    %1360 = vmatprep.subr.mxu0 0.0
    %1361 = vmatpush1.msra.mxu0 0.0
    %1362 = vmatprep.subr.mxu0 0.0
    %1363 = vmatpush1.msra.mxu0 0.0
    %1364 = vmatprep.subr.mxu0 0.0
    %1365 = vmatpush1.msra.mxu0 0.0
    %1366 = vmatprep.subr.mxu0 0.0
    %1367 = vmatpush1.msra.mxu0 0.0
    %1368 = vmatprep.subr.mxu0 0.0
    %1369 = vmatpush1.msra.mxu0 0.0
    %1370 = vmatprep.subr.mxu0 0.0
    %1371 = vmatpush1.msra.mxu0 0.0
    %1372 = vmatprep.subr.mxu0 0.0
    %1373 = vmatpush1.msra.mxu0 0.0
    %1374 = vmatprep.subr.mxu0 0.0
    %1375 = vmatpush1.msra.mxu0 0.0
    %1376 = vmatprep.subr.mxu0 0.0
    %1377 = vmatpush1.msra.mxu0 0.0
    %1378 = vmatprep.subr.mxu0 0.0
    %1379 = vmatpush1.msra.mxu0 0.0
    %1380 = vmatprep.subr.mxu0 0.0
    %1381 = vmatpush1.msra.mxu0 0.0
    %1382 = vmatprep.mubr.f32.mxu0 0.0
    %1383 = vmatmul.mubr.f32.gmra.mrb[0].mxu0 %v1310
    %v1384 = vpop.f32.mrb[0].mxu0
    %v1385 = vadd.f32 0.0, %v1384
    %v1386 = vpop.f32.mrb[0].mxu0
    %v1387 = vadd.f32 0.0, %v1386
    %1388 = vdwg.mxu0
    %v1389 = vadd.f32 %v1286, %v1385
    %v1390 = vadd.f32 %v1287, %v1387
    %v1391 = vld [vmem:[#allocation2 + $0x8] sm:$0x1]
    %v1392 = vld [vmem:[#allocation2 + $0x28] sm:$0x1]
    %v1394 = vrot.slane %v1392, 7
    %v1396 = vsel %vm576, %v1391, %v1394
    %s1397 = scalar_lea.vmem %s4, 896
    %v1398 = vld [vmem:[%s1397] sm:$0xff]
    %v1399 = vld [vmem:[%s1397 + $0x8] sm:$0xff]
    %v1400 = vld [vmem:[%s1397 + $0x10] sm:$0xff]
    %v1401 = vld [vmem:[%s1397 + $0x18] sm:$0xff]
    %v1402 = vld [vmem:[%s1397 + $0x20] sm:$0xff]
    %v1403 = vld [vmem:[%s1397 + $0x28] sm:$0xff]
    %v1404 = vld [vmem:[%s1397 + $0x30] sm:$0xff]
    %v1405 = vld [vmem:[%s1397 + $0x38] sm:$0xff]
    %v1406 = vld [vmem:[%s1397 + $0x40] sm:$0xff]
    %v1407 = vld [vmem:[%s1397 + $0x48] sm:$0xff]
    %v1408 = vld [vmem:[%s1397 + $0x50] sm:$0xff]
    %v1409 = vld [vmem:[%s1397 + $0x58] sm:$0xff]
    %v1410 = vld [vmem:[%s1397 + $0x60] sm:$0x1]
    %v1411 = vld [vmem:[%s1397 + $0x68] sm:$0x1]
    %v1413 = vsel %vm299, %v1396, 0
    %v1416 = vsel %vm576, %v1410, 0
    %v1419 = vsel %vm576, %v1411, 0
    %1421 = vmatprep.subr.mxu0 %v1399
    %1422 = vmatpush1.msra.mxu0 %v1398
    %1423 = vmatprep.subr.mxu0 %v1401
    %1424 = vmatpush1.msra.mxu0 %v1400
    %1425 = vmatprep.subr.mxu0 %v1403
    %1426 = vmatpush1.msra.mxu0 %v1402
    %1427 = vmatprep.subr.mxu0 %v1405
    %1428 = vmatpush1.msra.mxu0 %v1404
    %1429 = vmatprep.subr.mxu0 %v1407
    %1430 = vmatpush1.msra.mxu0 %v1406
    %1431 = vmatprep.subr.mxu0 %v1409
    %1432 = vmatpush1.msra.mxu0 %v1408
    %1433 = vmatprep.subr.mxu0 %v1419
    %1434 = vmatpush1.msra.mxu0 %v1416
    %1435 = vmatprep.subr.mxu0 0.0
    %1436 = vmatpush1.msra.mxu0 0.0
    %1437 = vmatprep.subr.mxu0 0.0
    %1438 = vmatpush1.msra.mxu0 0.0
    %1439 = vmatprep.subr.mxu0 0.0
    %1440 = vmatpush1.msra.mxu0 0.0
    %1441 = vmatprep.subr.mxu0 0.0
    %1442 = vmatpush1.msra.mxu0 0.0
    %1443 = vmatprep.subr.mxu0 0.0
    %1444 = vmatpush1.msra.mxu0 0.0
    %1445 = vmatprep.subr.mxu0 0.0
    %1446 = vmatpush1.msra.mxu0 0.0
    %1447 = vmatprep.subr.mxu0 0.0
    %1448 = vmatpush1.msra.mxu0 0.0
    %1449 = vmatprep.subr.mxu0 0.0
    %1450 = vmatpush1.msra.mxu0 0.0
    %1451 = vmatprep.subr.mxu0 0.0
    %1452 = vmatpush1.msra.mxu0 0.0
    %1453 = vmatprep.subr.mxu0 0.0
    %1454 = vmatpush1.msra.mxu0 0.0
    %1455 = vmatprep.subr.mxu0 0.0
    %1456 = vmatpush1.msra.mxu0 0.0
    %1457 = vmatprep.subr.mxu0 0.0
    %1458 = vmatpush1.msra.mxu0 0.0
    %1459 = vmatprep.subr.mxu0 0.0
    %1460 = vmatpush1.msra.mxu0 0.0
    %1461 = vmatprep.subr.mxu0 0.0
    %1462 = vmatpush1.msra.mxu0 0.0
    %1463 = vmatprep.subr.mxu0 0.0
    %1464 = vmatpush1.msra.mxu0 0.0
    %1465 = vmatprep.subr.mxu0 0.0
    %1466 = vmatpush1.msra.mxu0 0.0
    %1467 = vmatprep.subr.mxu0 0.0
    %1468 = vmatpush1.msra.mxu0 0.0
    %1469 = vmatprep.subr.mxu0 0.0
    %1470 = vmatpush1.msra.mxu0 0.0
    %1471 = vmatprep.subr.mxu0 0.0
    %1472 = vmatpush1.msra.mxu0 0.0
    %1473 = vmatprep.subr.mxu0 0.0
    %1474 = vmatpush1.msra.mxu0 0.0
    %1475 = vmatprep.subr.mxu0 0.0
    %1476 = vmatpush1.msra.mxu0 0.0
    %1477 = vmatprep.subr.mxu0 0.0
    %1478 = vmatpush1.msra.mxu0 0.0
    %1479 = vmatprep.subr.mxu0 0.0
    %1480 = vmatpush1.msra.mxu0 0.0
    %1481 = vmatprep.subr.mxu0 0.0
    %1482 = vmatpush1.msra.mxu0 0.0
    %1483 = vmatprep.subr.mxu0 0.0
    %1484 = vmatpush1.msra.mxu0 0.0
    %1485 = vmatprep.mubr.f32.mxu0 0.0
    %1486 = vmatmul.mubr.f32.gmra.mrb[0].mxu0 %v1413
    %v1487 = vpop.f32.mrb[0].mxu0
    %v1488 = vadd.f32 0.0, %v1487
    %v1489 = vpop.f32.mrb[0].mxu0
    %v1490 = vadd.f32 0.0, %v1489
    %1491 = vdwg.mxu0
    %v1492 = vadd.f32 %v1389, %v1488
    %v1493 = vadd.f32 %v1390, %v1490
    %v1494 = vld [vmem:[#allocation2 + $0x9] sm:$0x1]
    %v1495 = vld [vmem:[#allocation2 + $0x29] sm:$0x1]
    %v1497 = vrot.slane %v1495, 7
    %v1499 = vsel %vm576, %v1494, %v1497
    %s1500 = scalar_lea.vmem %s4, 1008
    %v1501 = vld [vmem:[%s1500] sm:$0xff]
    %v1502 = vld [vmem:[%s1500 + $0x8] sm:$0xff]
    %v1503 = vld [vmem:[%s1500 + $0x10] sm:$0xff]
    %v1504 = vld [vmem:[%s1500 + $0x18] sm:$0xff]
    %v1505 = vld [vmem:[%s1500 + $0x20] sm:$0xff]
    %v1506 = vld [vmem:[%s1500 + $0x28] sm:$0xff]
    %v1507 = vld [vmem:[%s1500 + $0x30] sm:$0xff]
    %v1508 = vld [vmem:[%s1500 + $0x38] sm:$0xff]
    %v1509 = vld [vmem:[%s1500 + $0x40] sm:$0xff]
    %v1510 = vld [vmem:[%s1500 + $0x48] sm:$0xff]
    %v1511 = vld [vmem:[%s1500 + $0x50] sm:$0xff]
    %v1512 = vld [vmem:[%s1500 + $0x58] sm:$0xff]
    %v1513 = vld [vmem:[%s1500 + $0x60] sm:$0x1]
    %v1514 = vld [vmem:[%s1500 + $0x68] sm:$0x1]
    %v1516 = vsel %vm299, %v1499, 0
    %v1519 = vsel %vm576, %v1513, 0
    %v1522 = vsel %vm576, %v1514, 0
    %1524 = vmatprep.subr.mxu0 %v1502
    %1525 = vmatpush1.msra.mxu0 %v1501
    %1526 = vmatprep.subr.mxu0 %v1504
    %1527 = vmatpush1.msra.mxu0 %v1503
    %1528 = vmatprep.subr.mxu0 %v1506
    %1529 = vmatpush1.msra.mxu0 %v1505
    %1530 = vmatprep.subr.mxu0 %v1508
    %1531 = vmatpush1.msra.mxu0 %v1507
    %1532 = vmatprep.subr.mxu0 %v1510
    %1533 = vmatpush1.msra.mxu0 %v1509
    %1534 = vmatprep.subr.mxu0 %v1512
    %1535 = vmatpush1.msra.mxu0 %v1511
    %1536 = vmatprep.subr.mxu0 %v1522
    %1537 = vmatpush1.msra.mxu0 %v1519
    %1538 = vmatprep.subr.mxu0 0.0
    %1539 = vmatpush1.msra.mxu0 0.0
    %1540 = vmatprep.subr.mxu0 0.0
    %1541 = vmatpush1.msra.mxu0 0.0
    %1542 = vmatprep.subr.mxu0 0.0
    %1543 = vmatpush1.msra.mxu0 0.0
    %1544 = vmatprep.subr.mxu0 0.0
    %1545 = vmatpush1.msra.mxu0 0.0
    %1546 = vmatprep.subr.mxu0 0.0
    %1547 = vmatpush1.msra.mxu0 0.0
    %1548 = vmatprep.subr.mxu0 0.0
    %1549 = vmatpush1.msra.mxu0 0.0
    %1550 = vmatprep.subr.mxu0 0.0
    %1551 = vmatpush1.msra.mxu0 0.0
    %1552 = vmatprep.subr.mxu0 0.0
    %1553 = vmatpush1.msra.mxu0 0.0
    %1554 = vmatprep.subr.mxu0 0.0
    %1555 = vmatpush1.msra.mxu0 0.0
    %1556 = vmatprep.subr.mxu0 0.0
    %1557 = vmatpush1.msra.mxu0 0.0
    %1558 = vmatprep.subr.mxu0 0.0
    %1559 = vmatpush1.msra.mxu0 0.0
    %1560 = vmatprep.subr.mxu0 0.0
    %1561 = vmatpush1.msra.mxu0 0.0
    %1562 = vmatprep.subr.mxu0 0.0
    %1563 = vmatpush1.msra.mxu0 0.0
    %1564 = vmatprep.subr.mxu0 0.0
    %1565 = vmatpush1.msra.mxu0 0.0
    %1566 = vmatprep.subr.mxu0 0.0
    %1567 = vmatpush1.msra.mxu0 0.0
    %1568 = vmatprep.subr.mxu0 0.0
    %1569 = vmatpush1.msra.mxu0 0.0
    %1570 = vmatprep.subr.mxu0 0.0
    %1571 = vmatpush1.msra.mxu0 0.0
    %1572 = vmatprep.subr.mxu0 0.0
    %1573 = vmatpush1.msra.mxu0 0.0
    %1574 = vmatprep.subr.mxu0 0.0
    %1575 = vmatpush1.msra.mxu0 0.0
    %1576 = vmatprep.subr.mxu0 0.0
    %1577 = vmatpush1.msra.mxu0 0.0
    %1578 = vmatprep.subr.mxu0 0.0
    %1579 = vmatpush1.msra.mxu0 0.0
    %1580 = vmatprep.subr.mxu0 0.0
    %1581 = vmatpush1.msra.mxu0 0.0
    %1582 = vmatprep.subr.mxu0 0.0
    %1583 = vmatpush1.msra.mxu0 0.0
    %1584 = vmatprep.subr.mxu0 0.0
    %1585 = vmatpush1.msra.mxu0 0.0
    %1586 = vmatprep.subr.mxu0 0.0
    %1587 = vmatpush1.msra.mxu0 0.0
    %1588 = vmatprep.mubr.f32.mxu0 0.0
    %1589 = vmatmul.mubr.f32.gmra.mrb[0].mxu0 %v1516
    %v1590 = vpop.f32.mrb[0].mxu0
    %v1591 = vadd.f32 0.0, %v1590
    %v1592 = vpop.f32.mrb[0].mxu0
    %v1593 = vadd.f32 0.0, %v1592
    %1594 = vdwg.mxu0
    %v1595 = vadd.f32 %v1492, %v1591
    %v1596 = vadd.f32 %v1493, %v1593
    %v1597 = vld [vmem:[#allocation2 + $0xa] sm:$0x1]
    %v1598 = vld [vmem:[#allocation2 + $0x2a] sm:$0x1]
    %v1600 = vrot.slane %v1598, 7
    %v1602 = vsel %vm576, %v1597, %v1600
    %s1603 = scalar_lea.vmem %s4, 1120
    %v1604 = vld [vmem:[%s1603] sm:$0xff]
    %v1605 = vld [vmem:[%s1603 + $0x8] sm:$0xff]
    %v1606 = vld [vmem:[%s1603 + $0x10] sm:$0xff]
    %v1607 = vld [vmem:[%s1603 + $0x18] sm:$0xff]
    %v1608 = vld [vmem:[%s1603 + $0x20] sm:$0xff]
    %v1609 = vld [vmem:[%s1603 + $0x28] sm:$0xff]
    %v1610 = vld [vmem:[%s1603 + $0x30] sm:$0xff]
    %v1611 = vld [vmem:[%s1603 + $0x38] sm:$0xff]
    %v1612 = vld [vmem:[%s1603 + $0x40] sm:$0xff]
    %v1613 = vld [vmem:[%s1603 + $0x48] sm:$0xff]
    %v1614 = vld [vmem:[%s1603 + $0x50] sm:$0xff]
    %v1615 = vld [vmem:[%s1603 + $0x58] sm:$0xff]
    %v1616 = vld [vmem:[%s1603 + $0x60] sm:$0x1]
    %v1617 = vld [vmem:[%s1603 + $0x68] sm:$0x1]
    %v1619 = vsel %vm299, %v1602, 0
    %v1622 = vsel %vm576, %v1616, 0
    %v1625 = vsel %vm576, %v1617, 0
    %1627 = vmatprep.subr.mxu0 %v1605
    %1628 = vmatpush1.msra.mxu0 %v1604
    %1629 = vmatprep.subr.mxu0 %v1607
    %1630 = vmatpush1.msra.mxu0 %v1606
    %1631 = vmatprep.subr.mxu0 %v1609
    %1632 = vmatpush1.msra.mxu0 %v1608
    %1633 = vmatprep.subr.mxu0 %v1611
    %1634 = vmatpush1.msra.mxu0 %v1610
    %1635 = vmatprep.subr.mxu0 %v1613
    %1636 = vmatpush1.msra.mxu0 %v1612
    %1637 = vmatprep.subr.mxu0 %v1615
    %1638 = vmatpush1.msra.mxu0 %v1614
    %1639 = vmatprep.subr.mxu0 %v1625
    %1640 = vmatpush1.msra.mxu0 %v1622
    %1641 = vmatprep.subr.mxu0 0.0
    %1642 = vmatpush1.msra.mxu0 0.0
    %1643 = vmatprep.subr.mxu0 0.0
    %1644 = vmatpush1.msra.mxu0 0.0
    %1645 = vmatprep.subr.mxu0 0.0
    %1646 = vmatpush1.msra.mxu0 0.0
    %1647 = vmatprep.subr.mxu0 0.0
    %1648 = vmatpush1.msra.mxu0 0.0
    %1649 = vmatprep.subr.mxu0 0.0
    %1650 = vmatpush1.msra.mxu0 0.0
    %1651 = vmatprep.subr.mxu0 0.0
    %1652 = vmatpush1.msra.mxu0 0.0
    %1653 = vmatprep.subr.mxu0 0.0
    %1654 = vmatpush1.msra.mxu0 0.0
    %1655 = vmatprep.subr.mxu0 0.0
    %1656 = vmatpush1.msra.mxu0 0.0
    %1657 = vmatprep.subr.mxu0 0.0
    %1658 = vmatpush1.msra.mxu0 0.0
    %1659 = vmatprep.subr.mxu0 0.0
    %1660 = vmatpush1.msra.mxu0 0.0
    %1661 = vmatprep.subr.mxu0 0.0
    %1662 = vmatpush1.msra.mxu0 0.0
    %1663 = vmatprep.subr.mxu0 0.0
    %1664 = vmatpush1.msra.mxu0 0.0
    %1665 = vmatprep.subr.mxu0 0.0
    %1666 = vmatpush1.msra.mxu0 0.0
    %1667 = vmatprep.subr.mxu0 0.0
    %1668 = vmatpush1.msra.mxu0 0.0
    %1669 = vmatprep.subr.mxu0 0.0
    %1670 = vmatpush1.msra.mxu0 0.0
    %1671 = vmatprep.subr.mxu0 0.0
    %1672 = vmatpush1.msra.mxu0 0.0
    %1673 = vmatprep.subr.mxu0 0.0
    %1674 = vmatpush1.msra.mxu0 0.0
    %1675 = vmatprep.subr.mxu0 0.0
    %1676 = vmatpush1.msra.mxu0 0.0
    %1677 = vmatprep.subr.mxu0 0.0
    %1678 = vmatpush1.msra.mxu0 0.0
    %1679 = vmatprep.subr.mxu0 0.0
    %1680 = vmatpush1.msra.mxu0 0.0
    %1681 = vmatprep.subr.mxu0 0.0
    %1682 = vmatpush1.msra.mxu0 0.0
    %1683 = vmatprep.subr.mxu0 0.0
    %1684 = vmatpush1.msra.mxu0 0.0
    %1685 = vmatprep.subr.mxu0 0.0
    %1686 = vmatpush1.msra.mxu0 0.0
    %1687 = vmatprep.subr.mxu0 0.0
    %1688 = vmatpush1.msra.mxu0 0.0
    %1689 = vmatprep.subr.mxu0 0.0
    %1690 = vmatpush1.msra.mxu0 0.0
    %1691 = vmatprep.mubr.f32.mxu0 0.0
    %1692 = vmatmul.mubr.f32.gmra.mrb[0].mxu0 %v1619
    %v1693 = vpop.f32.mrb[0].mxu0
    %v1694 = vadd.f32 0.0, %v1693
    %v1695 = vpop.f32.mrb[0].mxu0
    %v1696 = vadd.f32 0.0, %v1695
    %1697 = vdwg.mxu0
    %v1698 = vadd.f32 %v1595, %v1694
    %v1699 = vadd.f32 %v1596, %v1696
    %v1700 = vld [vmem:[#allocation2 + $0xb] sm:$0x1]
    %v1701 = vld [vmem:[#allocation2 + $0x2b] sm:$0x1]
    %v1703 = vrot.slane %v1701, 7
    %v1705 = vsel %vm576, %v1700, %v1703
    %s1706 = scalar_lea.vmem %s4, 1232
    %v1707 = vld [vmem:[%s1706] sm:$0xff]
    %v1708 = vld [vmem:[%s1706 + $0x8] sm:$0xff]
    %v1709 = vld [vmem:[%s1706 + $0x10] sm:$0xff]
    %v1710 = vld [vmem:[%s1706 + $0x18] sm:$0xff]
    %v1711 = vld [vmem:[%s1706 + $0x20] sm:$0xff]
    %v1712 = vld [vmem:[%s1706 + $0x28] sm:$0xff]
    %v1713 = vld [vmem:[%s1706 + $0x30] sm:$0xff]
    %v1714 = vld [vmem:[%s1706 + $0x38] sm:$0xff]
    %v1715 = vld [vmem:[%s1706 + $0x40] sm:$0xff]
    %v1716 = vld [vmem:[%s1706 + $0x48] sm:$0xff]
    %v1717 = vld [vmem:[%s1706 + $0x50] sm:$0xff]
    %v1718 = vld [vmem:[%s1706 + $0x58] sm:$0xff]
    %v1719 = vld [vmem:[%s1706 + $0x60] sm:$0x1]
    %v1720 = vld [vmem:[%s1706 + $0x68] sm:$0x1]
    %v1722 = vsel %vm299, %v1705, 0
    %v1725 = vsel %vm576, %v1719, 0
    %v1728 = vsel %vm576, %v1720, 0
    %1730 = vmatprep.subr.mxu0 %v1708
    %1731 = vmatpush1.msra.mxu0 %v1707
    %1732 = vmatprep.subr.mxu0 %v1710
    %1733 = vmatpush1.msra.mxu0 %v1709
    %1734 = vmatprep.subr.mxu0 %v1712
    %1735 = vmatpush1.msra.mxu0 %v1711
    %1736 = vmatprep.subr.mxu0 %v1714
    %1737 = vmatpush1.msra.mxu0 %v1713
    %1738 = vmatprep.subr.mxu0 %v1716
    %1739 = vmatpush1.msra.mxu0 %v1715
    %1740 = vmatprep.subr.mxu0 %v1718
    %1741 = vmatpush1.msra.mxu0 %v1717
    %1742 = vmatprep.subr.mxu0 %v1728
    %1743 = vmatpush1.msra.mxu0 %v1725
    %1744 = vmatprep.subr.mxu0 0.0
    %1745 = vmatpush1.msra.mxu0 0.0
    %1746 = vmatprep.subr.mxu0 0.0
    %1747 = vmatpush1.msra.mxu0 0.0
    %1748 = vmatprep.subr.mxu0 0.0
    %1749 = vmatpush1.msra.mxu0 0.0
    %1750 = vmatprep.subr.mxu0 0.0
    %1751 = vmatpush1.msra.mxu0 0.0
    %1752 = vmatprep.subr.mxu0 0.0
    %1753 = vmatpush1.msra.mxu0 0.0
    %1754 = vmatprep.subr.mxu0 0.0
    %1755 = vmatpush1.msra.mxu0 0.0
    %1756 = vmatprep.subr.mxu0 0.0
    %1757 = vmatpush1.msra.mxu0 0.0
    %1758 = vmatprep.subr.mxu0 0.0
    %1759 = vmatpush1.msra.mxu0 0.0
    %1760 = vmatprep.subr.mxu0 0.0
    %1761 = vmatpush1.msra.mxu0 0.0
    %1762 = vmatprep.subr.mxu0 0.0
    %1763 = vmatpush1.msra.mxu0 0.0
    %1764 = vmatprep.subr.mxu0 0.0
    %1765 = vmatpush1.msra.mxu0 0.0
    %1766 = vmatprep.subr.mxu0 0.0
    %1767 = vmatpush1.msra.mxu0 0.0
    %1768 = vmatprep.subr.mxu0 0.0
    %1769 = vmatpush1.msra.mxu0 0.0
    %1770 = vmatprep.subr.mxu0 0.0
    %1771 = vmatpush1.msra.mxu0 0.0
    %1772 = vmatprep.subr.mxu0 0.0
    %1773 = vmatpush1.msra.mxu0 0.0
    %1774 = vmatprep.subr.mxu0 0.0
    %1775 = vmatpush1.msra.mxu0 0.0
    %1776 = vmatprep.subr.mxu0 0.0
    %1777 = vmatpush1.msra.mxu0 0.0
    %1778 = vmatprep.subr.mxu0 0.0
    %1779 = vmatpush1.msra.mxu0 0.0
    %1780 = vmatprep.subr.mxu0 0.0
    %1781 = vmatpush1.msra.mxu0 0.0
    %1782 = vmatprep.subr.mxu0 0.0
    %1783 = vmatpush1.msra.mxu0 0.0
    %1784 = vmatprep.subr.mxu0 0.0
    %1785 = vmatpush1.msra.mxu0 0.0
    %1786 = vmatprep.subr.mxu0 0.0
    %1787 = vmatpush1.msra.mxu0 0.0
    %1788 = vmatprep.subr.mxu0 0.0
    %1789 = vmatpush1.msra.mxu0 0.0
    %1790 = vmatprep.subr.mxu0 0.0
    %1791 = vmatpush1.msra.mxu0 0.0
    %1792 = vmatprep.subr.mxu0 0.0
    %1793 = vmatpush1.msra.mxu0 0.0
    %1794 = vmatprep.mubr.f32.mxu0 0.0
    %1795 = vmatmul.mubr.f32.gmra.mrb[0].mxu0 %v1722
    %v1796 = vpop.f32.mrb[0].mxu0
    %v1797 = vadd.f32 0.0, %v1796
    %v1798 = vpop.f32.mrb[0].mxu0
    %v1799 = vadd.f32 0.0, %v1798
    %1800 = vdwg.mxu0
    %v1801 = vadd.f32 %v1698, %v1797
    %v1802 = vadd.f32 %v1699, %v1799
    %v1803 = vld [vmem:[#allocation2 + $0xc] sm:$0x1]
    %v1804 = vld [vmem:[#allocation2 + $0x2c] sm:$0x1]
    %v1806 = vrot.slane %v1804, 7
    %v1808 = vsel %vm576, %v1803, %v1806
    %s1809 = scalar_lea.vmem %s4, 1344
    %v1810 = vld [vmem:[%s1809] sm:$0xff]
    %v1811 = vld [vmem:[%s1809 + $0x8] sm:$0xff]
    %v1812 = vld [vmem:[%s1809 + $0x10] sm:$0xff]
    %v1813 = vld [vmem:[%s1809 + $0x18] sm:$0xff]
    %v1814 = vld [vmem:[%s1809 + $0x20] sm:$0xff]
    %v1815 = vld [vmem:[%s1809 + $0x28] sm:$0xff]
    %v1816 = vld [vmem:[%s1809 + $0x30] sm:$0xff]
    %v1817 = vld [vmem:[%s1809 + $0x38] sm:$0xff]
    %v1818 = vld [vmem:[%s1809 + $0x40] sm:$0xff]
    %v1819 = vld [vmem:[%s1809 + $0x48] sm:$0xff]
    %v1820 = vld [vmem:[%s1809 + $0x50] sm:$0xff]
    %v1821 = vld [vmem:[%s1809 + $0x58] sm:$0xff]
    %v1822 = vld [vmem:[%s1809 + $0x60] sm:$0x1]
    %v1823 = vld [vmem:[%s1809 + $0x68] sm:$0x1]
    %v1825 = vsel %vm299, %v1808, 0
    %v1828 = vsel %vm576, %v1822, 0
    %v1831 = vsel %vm576, %v1823, 0
    %1833 = vmatprep.subr.mxu0 %v1811
    %1834 = vmatpush1.msra.mxu0 %v1810
    %1835 = vmatprep.subr.mxu0 %v1813
    %1836 = vmatpush1.msra.mxu0 %v1812
    %1837 = vmatprep.subr.mxu0 %v1815
    %1838 = vmatpush1.msra.mxu0 %v1814
    %1839 = vmatprep.subr.mxu0 %v1817
    %1840 = vmatpush1.msra.mxu0 %v1816
    %1841 = vmatprep.subr.mxu0 %v1819
    %1842 = vmatpush1.msra.mxu0 %v1818
    %1843 = vmatprep.subr.mxu0 %v1821
    %1844 = vmatpush1.msra.mxu0 %v1820
    %1845 = vmatprep.subr.mxu0 %v1831
    %1846 = vmatpush1.msra.mxu0 %v1828
    %1847 = vmatprep.subr.mxu0 0.0
    %1848 = vmatpush1.msra.mxu0 0.0
    %1849 = vmatprep.subr.mxu0 0.0
    %1850 = vmatpush1.msra.mxu0 0.0
    %1851 = vmatprep.subr.mxu0 0.0
    %1852 = vmatpush1.msra.mxu0 0.0
    %1853 = vmatprep.subr.mxu0 0.0
    %1854 = vmatpush1.msra.mxu0 0.0
    %1855 = vmatprep.subr.mxu0 0.0
    %1856 = vmatpush1.msra.mxu0 0.0
    %1857 = vmatprep.subr.mxu0 0.0
    %1858 = vmatpush1.msra.mxu0 0.0
    %1859 = vmatprep.subr.mxu0 0.0
    %1860 = vmatpush1.msra.mxu0 0.0
    %1861 = vmatprep.subr.mxu0 0.0
    %1862 = vmatpush1.msra.mxu0 0.0
    %1863 = vmatprep.subr.mxu0 0.0
    %1864 = vmatpush1.msra.mxu0 0.0
    %1865 = vmatprep.subr.mxu0 0.0
    %1866 = vmatpush1.msra.mxu0 0.0
    %1867 = vmatprep.subr.mxu0 0.0
    %1868 = vmatpush1.msra.mxu0 0.0
    %1869 = vmatprep.subr.mxu0 0.0
    %1870 = vmatpush1.msra.mxu0 0.0
    %1871 = vmatprep.subr.mxu0 0.0
    %1872 = vmatpush1.msra.mxu0 0.0
    %1873 = vmatprep.subr.mxu0 0.0
    %1874 = vmatpush1.msra.mxu0 0.0
    %1875 = vmatprep.subr.mxu0 0.0
    %1876 = vmatpush1.msra.mxu0 0.0
    %1877 = vmatprep.subr.mxu0 0.0
    %1878 = vmatpush1.msra.mxu0 0.0
    %1879 = vmatprep.subr.mxu0 0.0
    %1880 = vmatpush1.msra.mxu0 0.0
    %1881 = vmatprep.subr.mxu0 0.0
    %1882 = vmatpush1.msra.mxu0 0.0
    %1883 = vmatprep.subr.mxu0 0.0
    %1884 = vmatpush1.msra.mxu0 0.0
    %1885 = vmatprep.subr.mxu0 0.0
    %1886 = vmatpush1.msra.mxu0 0.0
    %1887 = vmatprep.subr.mxu0 0.0
    %1888 = vmatpush1.msra.mxu0 0.0
    %1889 = vmatprep.subr.mxu0 0.0
    %1890 = vmatpush1.msra.mxu0 0.0
    %1891 = vmatprep.subr.mxu0 0.0
    %1892 = vmatpush1.msra.mxu0 0.0
    %1893 = vmatprep.subr.mxu0 0.0
    %1894 = vmatpush1.msra.mxu0 0.0
    %1895 = vmatprep.subr.mxu0 0.0
    %1896 = vmatpush1.msra.mxu0 0.0
    %1897 = vmatprep.mubr.f32.mxu0 0.0
    %1898 = vmatmul.mubr.f32.gmra.mrb[0].mxu0 %v1825
    %v1899 = vpop.f32.mrb[0].mxu0
    %v1900 = vadd.f32 0.0, %v1899
    %v1901 = vpop.f32.mrb[0].mxu0
    %v1902 = vadd.f32 0.0, %v1901
    %1903 = vdwg.mxu0
    %v1904 = vadd.f32 %v1801, %v1900
    %v1905 = vadd.f32 %v1802, %v1902
    %v1906 = vld [vmem:[#allocation2 + $0xd] sm:$0x1]
    %v1907 = vld [vmem:[#allocation2 + $0x2d] sm:$0x1]
    %v1909 = vrot.slane %v1907, 7
    %v1911 = vsel %vm576, %v1906, %v1909
    %s1912 = scalar_lea.vmem %s4, 1456
    %v1913 = vld [vmem:[%s1912] sm:$0xff]
    %v1914 = vld [vmem:[%s1912 + $0x8] sm:$0xff]
    %v1915 = vld [vmem:[%s1912 + $0x10] sm:$0xff]
    %v1916 = vld [vmem:[%s1912 + $0x18] sm:$0xff]
    %v1917 = vld [vmem:[%s1912 + $0x20] sm:$0xff]
    %v1918 = vld [vmem:[%s1912 + $0x28] sm:$0xff]
    %v1919 = vld [vmem:[%s1912 + $0x30] sm:$0xff]
    %v1920 = vld [vmem:[%s1912 + $0x38] sm:$0xff]
    %v1921 = vld [vmem:[%s1912 + $0x40] sm:$0xff]
    %v1922 = vld [vmem:[%s1912 + $0x48] sm:$0xff]
    %v1923 = vld [vmem:[%s1912 + $0x50] sm:$0xff]
    %v1924 = vld [vmem:[%s1912 + $0x58] sm:$0xff]
    %v1925 = vld [vmem:[%s1912 + $0x60] sm:$0x1]
    %v1926 = vld [vmem:[%s1912 + $0x68] sm:$0x1]
    %v1928 = vsel %vm299, %v1911, 0
    %v1931 = vsel %vm576, %v1925, 0
    %v1934 = vsel %vm576, %v1926, 0
    %1936 = vmatprep.subr.mxu0 %v1914
    %1937 = vmatpush1.msra.mxu0 %v1913
    %1938 = vmatprep.subr.mxu0 %v1916
    %1939 = vmatpush1.msra.mxu0 %v1915
    %1940 = vmatprep.subr.mxu0 %v1918
    %1941 = vmatpush1.msra.mxu0 %v1917
    %1942 = vmatprep.subr.mxu0 %v1920
    %1943 = vmatpush1.msra.mxu0 %v1919
    %1944 = vmatprep.subr.mxu0 %v1922
    %1945 = vmatpush1.msra.mxu0 %v1921
    %1946 = vmatprep.subr.mxu0 %v1924
    %1947 = vmatpush1.msra.mxu0 %v1923
    %1948 = vmatprep.subr.mxu0 %v1934
    %1949 = vmatpush1.msra.mxu0 %v1931
    %1950 = vmatprep.subr.mxu0 0.0
    %1951 = vmatpush1.msra.mxu0 0.0
    %1952 = vmatprep.subr.mxu0 0.0
    %1953 = vmatpush1.msra.mxu0 0.0
    %1954 = vmatprep.subr.mxu0 0.0
    %1955 = vmatpush1.msra.mxu0 0.0
    %1956 = vmatprep.subr.mxu0 0.0
    %1957 = vmatpush1.msra.mxu0 0.0
    %1958 = vmatprep.subr.mxu0 0.0
    %1959 = vmatpush1.msra.mxu0 0.0
    %1960 = vmatprep.subr.mxu0 0.0
    %1961 = vmatpush1.msra.mxu0 0.0
    %1962 = vmatprep.subr.mxu0 0.0
    %1963 = vmatpush1.msra.mxu0 0.0
    %1964 = vmatprep.subr.mxu0 0.0
    %1965 = vmatpush1.msra.mxu0 0.0
    %1966 = vmatprep.subr.mxu0 0.0
    %1967 = vmatpush1.msra.mxu0 0.0
    %1968 = vmatprep.subr.mxu0 0.0
    %1969 = vmatpush1.msra.mxu0 0.0
    %1970 = vmatprep.subr.mxu0 0.0
    %1971 = vmatpush1.msra.mxu0 0.0
    %1972 = vmatprep.subr.mxu0 0.0
    %1973 = vmatpush1.msra.mxu0 0.0
    %1974 = vmatprep.subr.mxu0 0.0
    %1975 = vmatpush1.msra.mxu0 0.0
    %1976 = vmatprep.subr.mxu0 0.0
    %1977 = vmatpush1.msra.mxu0 0.0
    %1978 = vmatprep.subr.mxu0 0.0
    %1979 = vmatpush1.msra.mxu0 0.0
    %1980 = vmatprep.subr.mxu0 0.0
    %1981 = vmatpush1.msra.mxu0 0.0
    %1982 = vmatprep.subr.mxu0 0.0
    %1983 = vmatpush1.msra.mxu0 0.0
    %1984 = vmatprep.subr.mxu0 0.0
    %1985 = vmatpush1.msra.mxu0 0.0
    %1986 = vmatprep.subr.mxu0 0.0
    %1987 = vmatpush1.msra.mxu0 0.0
    %1988 = vmatprep.subr.mxu0 0.0
    %1989 = vmatpush1.msra.mxu0 0.0
    %1990 = vmatprep.subr.mxu0 0.0
    %1991 = vmatpush1.msra.mxu0 0.0
    %1992 = vmatprep.subr.mxu0 0.0
    %1993 = vmatpush1.msra.mxu0 0.0
    %1994 = vmatprep.subr.mxu0 0.0
    %1995 = vmatpush1.msra.mxu0 0.0
    %1996 = vmatprep.subr.mxu0 0.0
    %1997 = vmatpush1.msra.mxu0 0.0
    %1998 = vmatprep.subr.mxu0 0.0
    %1999 = vmatpush1.msra.mxu0 0.0
    %2000 = vmatprep.mubr.f32.mxu0 0.0
    %2001 = vmatmul.mubr.f32.gmra.mrb[0].mxu0 %v1928
    %v2002 = vpop.f32.mrb[0].mxu0
    %v2003 = vadd.f32 0.0, %v2002
    %v2004 = vpop.f32.mrb[0].mxu0
    %v2005 = vadd.f32 0.0, %v2004
    %2006 = vdwg.mxu0
    %v2007 = vadd.f32 %v1904, %v2003
    %v2008 = vadd.f32 %v1905, %v2005
    %v2009 = vld [vmem:[#allocation2 + $0xe] sm:$0x1]
    %v2010 = vld [vmem:[#allocation2 + $0x2e] sm:$0x1]
    %v2012 = vrot.slane %v2010, 7
    %v2014 = vsel %vm576, %v2009, %v2012
    %s2015 = scalar_lea.vmem %s4, 1568
    %v2016 = vld [vmem:[%s2015] sm:$0xff]
    %v2017 = vld [vmem:[%s2015 + $0x8] sm:$0xff]
    %v2018 = vld [vmem:[%s2015 + $0x10] sm:$0xff]
    %v2019 = vld [vmem:[%s2015 + $0x18] sm:$0xff]
    %v2020 = vld [vmem:[%s2015 + $0x20] sm:$0xff]
    %v2021 = vld [vmem:[%s2015 + $0x28] sm:$0xff]
    %v2022 = vld [vmem:[%s2015 + $0x30] sm:$0xff]
    %v2023 = vld [vmem:[%s2015 + $0x38] sm:$0xff]
    %v2024 = vld [vmem:[%s2015 + $0x40] sm:$0xff]
    %v2025 = vld [vmem:[%s2015 + $0x48] sm:$0xff]
    %v2026 = vld [vmem:[%s2015 + $0x50] sm:$0xff]
    %v2027 = vld [vmem:[%s2015 + $0x58] sm:$0xff]
    %v2028 = vld [vmem:[%s2015 + $0x60] sm:$0x1]
    %v2029 = vld [vmem:[%s2015 + $0x68] sm:$0x1]
    %v2031 = vsel %vm299, %v2014, 0
    %v2034 = vsel %vm576, %v2028, 0
    %v2037 = vsel %vm576, %v2029, 0
    %2039 = vmatprep.subr.mxu0 %v2017
    %2040 = vmatpush1.msra.mxu0 %v2016
    %2041 = vmatprep.subr.mxu0 %v2019
    %2042 = vmatpush1.msra.mxu0 %v2018
    %2043 = vmatprep.subr.mxu0 %v2021
    %2044 = vmatpush1.msra.mxu0 %v2020
    %2045 = vmatprep.subr.mxu0 %v2023
    %2046 = vmatpush1.msra.mxu0 %v2022
    %2047 = vmatprep.subr.mxu0 %v2025
    %2048 = vmatpush1.msra.mxu0 %v2024
    %2049 = vmatprep.subr.mxu0 %v2027
    %2050 = vmatpush1.msra.mxu0 %v2026
    %2051 = vmatprep.subr.mxu0 %v2037
    %2052 = vmatpush1.msra.mxu0 %v2034
    %2053 = vmatprep.subr.mxu0 0.0
    %2054 = vmatpush1.msra.mxu0 0.0
    %2055 = vmatprep.subr.mxu0 0.0
    %2056 = vmatpush1.msra.mxu0 0.0
    %2057 = vmatprep.subr.mxu0 0.0
    %2058 = vmatpush1.msra.mxu0 0.0
    %2059 = vmatprep.subr.mxu0 0.0
    %2060 = vmatpush1.msra.mxu0 0.0
    %2061 = vmatprep.subr.mxu0 0.0
    %2062 = vmatpush1.msra.mxu0 0.0
    %2063 = vmatprep.subr.mxu0 0.0
    %2064 = vmatpush1.msra.mxu0 0.0
    %2065 = vmatprep.subr.mxu0 0.0
    %2066 = vmatpush1.msra.mxu0 0.0
    %2067 = vmatprep.subr.mxu0 0.0
    %2068 = vmatpush1.msra.mxu0 0.0
    %2069 = vmatprep.subr.mxu0 0.0
    %2070 = vmatpush1.msra.mxu0 0.0
    %2071 = vmatprep.subr.mxu0 0.0
    %2072 = vmatpush1.msra.mxu0 0.0
    %2073 = vmatprep.subr.mxu0 0.0
    %2074 = vmatpush1.msra.mxu0 0.0
    %2075 = vmatprep.subr.mxu0 0.0
    %2076 = vmatpush1.msra.mxu0 0.0
    %2077 = vmatprep.subr.mxu0 0.0
    %2078 = vmatpush1.msra.mxu0 0.0
    %2079 = vmatprep.subr.mxu0 0.0
    %2080 = vmatpush1.msra.mxu0 0.0
    %2081 = vmatprep.subr.mxu0 0.0
    %2082 = vmatpush1.msra.mxu0 0.0
    %2083 = vmatprep.subr.mxu0 0.0
    %2084 = vmatpush1.msra.mxu0 0.0
    %2085 = vmatprep.subr.mxu0 0.0
    %2086 = vmatpush1.msra.mxu0 0.0
    %2087 = vmatprep.subr.mxu0 0.0
    %2088 = vmatpush1.msra.mxu0 0.0
    %2089 = vmatprep.subr.mxu0 0.0
    %2090 = vmatpush1.msra.mxu0 0.0
    %2091 = vmatprep.subr.mxu0 0.0
    %2092 = vmatpush1.msra.mxu0 0.0
    %2093 = vmatprep.subr.mxu0 0.0
    %2094 = vmatpush1.msra.mxu0 0.0
    %2095 = vmatprep.subr.mxu0 0.0
    %2096 = vmatpush1.msra.mxu0 0.0
    %2097 = vmatprep.subr.mxu0 0.0
    %2098 = vmatpush1.msra.mxu0 0.0
    %2099 = vmatprep.subr.mxu0 0.0
    %2100 = vmatpush1.msra.mxu0 0.0
    %2101 = vmatprep.subr.mxu0 0.0
    %2102 = vmatpush1.msra.mxu0 0.0
    %2103 = vmatprep.mubr.f32.mxu0 0.0
    %2104 = vmatmul.mubr.f32.gmra.mrb[0].mxu0 %v2031
    %v2105 = vpop.f32.mrb[0].mxu0
    %v2106 = vadd.f32 0.0, %v2105
    %v2107 = vpop.f32.mrb[0].mxu0
    %v2108 = vadd.f32 0.0, %v2107
    %2109 = vdwg.mxu0
    %v2110 = vadd.f32 %v2007, %v2106
    %v2111 = vadd.f32 %v2008, %v2108
    %v2112 = vld [vmem:[#allocation2 + $0xf] sm:$0x1]
    %v2113 = vld [vmem:[#allocation2 + $0x2f] sm:$0x1]
    %v2115 = vrot.slane %v2113, 7
    %v2117 = vsel %vm576, %v2112, %v2115
    %s2118 = scalar_lea.vmem %s4, 1680
    %v2119 = vld [vmem:[%s2118] sm:$0xff]
    %v2120 = vld [vmem:[%s2118 + $0x8] sm:$0xff]
    %v2121 = vld [vmem:[%s2118 + $0x10] sm:$0xff]
    %v2122 = vld [vmem:[%s2118 + $0x18] sm:$0xff]
    %v2123 = vld [vmem:[%s2118 + $0x20] sm:$0xff]
    %v2124 = vld [vmem:[%s2118 + $0x28] sm:$0xff]
    %v2125 = vld [vmem:[%s2118 + $0x30] sm:$0xff]
    %v2126 = vld [vmem:[%s2118 + $0x38] sm:$0xff]
    %v2127 = vld [vmem:[%s2118 + $0x40] sm:$0xff]
    %v2128 = vld [vmem:[%s2118 + $0x48] sm:$0xff]
    %v2129 = vld [vmem:[%s2118 + $0x50] sm:$0xff]
    %v2130 = vld [vmem:[%s2118 + $0x58] sm:$0xff]
    %v2131 = vld [vmem:[%s2118 + $0x60] sm:$0x1]
    %v2132 = vld [vmem:[%s2118 + $0x68] sm:$0x1]
    %v2134 = vsel %vm299, %v2117, 0
    %v2137 = vsel %vm576, %v2131, 0
    %v2140 = vsel %vm576, %v2132, 0
    %2142 = vmatprep.subr.mxu0 %v2120
    %2143 = vmatpush1.msra.mxu0 %v2119
    %2144 = vmatprep.subr.mxu0 %v2122
    %2145 = vmatpush1.msra.mxu0 %v2121
    %2146 = vmatprep.subr.mxu0 %v2124
    %2147 = vmatpush1.msra.mxu0 %v2123
    %2148 = vmatprep.subr.mxu0 %v2126
    %2149 = vmatpush1.msra.mxu0 %v2125
    %2150 = vmatprep.subr.mxu0 %v2128
    %2151 = vmatpush1.msra.mxu0 %v2127
    %2152 = vmatprep.subr.mxu0 %v2130
    %2153 = vmatpush1.msra.mxu0 %v2129
    %2154 = vmatprep.subr.mxu0 %v2140
    %2155 = vmatpush1.msra.mxu0 %v2137
    %2156 = vmatprep.subr.mxu0 0.0
    %2157 = vmatpush1.msra.mxu0 0.0
    %2158 = vmatprep.subr.mxu0 0.0
    %2159 = vmatpush1.msra.mxu0 0.0
    %2160 = vmatprep.subr.mxu0 0.0
    %2161 = vmatpush1.msra.mxu0 0.0
    %2162 = vmatprep.subr.mxu0 0.0
    %2163 = vmatpush1.msra.mxu0 0.0
    %2164 = vmatprep.subr.mxu0 0.0
    %2165 = vmatpush1.msra.mxu0 0.0
    %2166 = vmatprep.subr.mxu0 0.0
    %2167 = vmatpush1.msra.mxu0 0.0
    %2168 = vmatprep.subr.mxu0 0.0
    %2169 = vmatpush1.msra.mxu0 0.0
    %2170 = vmatprep.subr.mxu0 0.0
    %2171 = vmatpush1.msra.mxu0 0.0
    %2172 = vmatprep.subr.mxu0 0.0
    %2173 = vmatpush1.msra.mxu0 0.0
    %2174 = vmatprep.subr.mxu0 0.0
    %2175 = vmatpush1.msra.mxu0 0.0
    %2176 = vmatprep.subr.mxu0 0.0
    %2177 = vmatpush1.msra.mxu0 0.0
    %2178 = vmatprep.subr.mxu0 0.0
    %2179 = vmatpush1.msra.mxu0 0.0
    %2180 = vmatprep.subr.mxu0 0.0
    %2181 = vmatpush1.msra.mxu0 0.0
    %2182 = vmatprep.subr.mxu0 0.0
    %2183 = vmatpush1.msra.mxu0 0.0
    %2184 = vmatprep.subr.mxu0 0.0
    %2185 = vmatpush1.msra.mxu0 0.0
    %2186 = vmatprep.subr.mxu0 0.0
    %2187 = vmatpush1.msra.mxu0 0.0
    %2188 = vmatprep.subr.mxu0 0.0
    %2189 = vmatpush1.msra.mxu0 0.0
    %2190 = vmatprep.subr.mxu0 0.0
    %2191 = vmatpush1.msra.mxu0 0.0
    %2192 = vmatprep.subr.mxu0 0.0
    %2193 = vmatpush1.msra.mxu0 0.0
    %2194 = vmatprep.subr.mxu0 0.0
    %2195 = vmatpush1.msra.mxu0 0.0
    %2196 = vmatprep.subr.mxu0 0.0
    %2197 = vmatpush1.msra.mxu0 0.0
    %2198 = vmatprep.subr.mxu0 0.0
    %2199 = vmatpush1.msra.mxu0 0.0
    %2200 = vmatprep.subr.mxu0 0.0
    %2201 = vmatpush1.msra.mxu0 0.0
    %2202 = vmatprep.subr.mxu0 0.0
    %2203 = vmatpush1.msra.mxu0 0.0
    %2204 = vmatprep.subr.mxu0 0.0
    %2205 = vmatpush1.msra.mxu0 0.0
    %2206 = vmatprep.mubr.f32.mxu0 0.0
    %2207 = vmatmul.mubr.f32.gmra.mrb[0].mxu0 %v2134
    %v2208 = vpop.f32.mrb[0].mxu0
    %v2209 = vadd.f32 0.0, %v2208
    %v2210 = vpop.f32.mrb[0].mxu0
    %v2211 = vadd.f32 0.0, %v2210
    %2212 = vdwg.mxu0
    %v2213 = vadd.f32 %v2110, %v2209
    %v2214 = vadd.f32 %v2111, %v2211
    %v2215 = vld [vmem:[#allocation2 + $0x10] sm:$0x1]
    %v2216 = vld [vmem:[#allocation2 + $0x30] sm:$0x1]
    %v2218 = vrot.slane %v2216, 7
    %v2220 = vsel %vm576, %v2215, %v2218
    %s2221 = scalar_lea.vmem %s4, 1792
    %v2222 = vld [vmem:[%s2221] sm:$0xff]
    %v2223 = vld [vmem:[%s2221 + $0x8] sm:$0xff]
    %v2224 = vld [vmem:[%s2221 + $0x10] sm:$0xff]
    %v2225 = vld [vmem:[%s2221 + $0x18] sm:$0xff]
    %v2226 = vld [vmem:[%s2221 + $0x20] sm:$0xff]
    %v2227 = vld [vmem:[%s2221 + $0x28] sm:$0xff]
    %v2228 = vld [vmem:[%s2221 + $0x30] sm:$0xff]
    %v2229 = vld [vmem:[%s2221 + $0x38] sm:$0xff]
    %v2230 = vld [vmem:[%s2221 + $0x40] sm:$0xff]
    %v2231 = vld [vmem:[%s2221 + $0x48] sm:$0xff]
    %v2232 = vld [vmem:[%s2221 + $0x50] sm:$0xff]
    %v2233 = vld [vmem:[%s2221 + $0x58] sm:$0xff]
    %v2234 = vld [vmem:[%s2221 + $0x60] sm:$0x1]
    %v2235 = vld [vmem:[%s2221 + $0x68] sm:$0x1]
    %v2237 = vsel %vm299, %v2220, 0
    %v2240 = vsel %vm576, %v2234, 0
    %v2243 = vsel %vm576, %v2235, 0
    %2245 = vmatprep.subr.mxu0 %v2223
    %2246 = vmatpush1.msra.mxu0 %v2222
    %2247 = vmatprep.subr.mxu0 %v2225
    %2248 = vmatpush1.msra.mxu0 %v2224
    %2249 = vmatprep.subr.mxu0 %v2227
    %2250 = vmatpush1.msra.mxu0 %v2226
    %2251 = vmatprep.subr.mxu0 %v2229
    %2252 = vmatpush1.msra.mxu0 %v2228
    %2253 = vmatprep.subr.mxu0 %v2231
    %2254 = vmatpush1.msra.mxu0 %v2230
    %2255 = vmatprep.subr.mxu0 %v2233
    %2256 = vmatpush1.msra.mxu0 %v2232
    %2257 = vmatprep.subr.mxu0 %v2243
    %2258 = vmatpush1.msra.mxu0 %v2240
    %2259 = vmatprep.subr.mxu0 0.0
    %2260 = vmatpush1.msra.mxu0 0.0
    %2261 = vmatprep.subr.mxu0 0.0
    %2262 = vmatpush1.msra.mxu0 0.0
    %2263 = vmatprep.subr.mxu0 0.0
    %2264 = vmatpush1.msra.mxu0 0.0
    %2265 = vmatprep.subr.mxu0 0.0
    %2266 = vmatpush1.msra.mxu0 0.0
    %2267 = vmatprep.subr.mxu0 0.0
    %2268 = vmatpush1.msra.mxu0 0.0
    %2269 = vmatprep.subr.mxu0 0.0
    %2270 = vmatpush1.msra.mxu0 0.0
    %2271 = vmatprep.subr.mxu0 0.0
    %2272 = vmatpush1.msra.mxu0 0.0
    %2273 = vmatprep.subr.mxu0 0.0
    %2274 = vmatpush1.msra.mxu0 0.0
    %2275 = vmatprep.subr.mxu0 0.0
    %2276 = vmatpush1.msra.mxu0 0.0
    %2277 = vmatprep.subr.mxu0 0.0
    %2278 = vmatpush1.msra.mxu0 0.0
    %2279 = vmatprep.subr.mxu0 0.0
    %2280 = vmatpush1.msra.mxu0 0.0
    %2281 = vmatprep.subr.mxu0 0.0
    %2282 = vmatpush1.msra.mxu0 0.0
    %2283 = vmatprep.subr.mxu0 0.0
    %2284 = vmatpush1.msra.mxu0 0.0
    %2285 = vmatprep.subr.mxu0 0.0
    %2286 = vmatpush1.msra.mxu0 0.0
    %2287 = vmatprep.subr.mxu0 0.0
    %2288 = vmatpush1.msra.mxu0 0.0
    %2289 = vmatprep.subr.mxu0 0.0
    %2290 = vmatpush1.msra.mxu0 0.0
    %2291 = vmatprep.subr.mxu0 0.0
    %2292 = vmatpush1.msra.mxu0 0.0
    %2293 = vmatprep.subr.mxu0 0.0
    %2294 = vmatpush1.msra.mxu0 0.0
    %2295 = vmatprep.subr.mxu0 0.0
    %2296 = vmatpush1.msra.mxu0 0.0
    %2297 = vmatprep.subr.mxu0 0.0
    %2298 = vmatpush1.msra.mxu0 0.0
    %2299 = vmatprep.subr.mxu0 0.0
    %2300 = vmatpush1.msra.mxu0 0.0
    %2301 = vmatprep.subr.mxu0 0.0
    %2302 = vmatpush1.msra.mxu0 0.0
    %2303 = vmatprep.subr.mxu0 0.0
    %2304 = vmatpush1.msra.mxu0 0.0
    %2305 = vmatprep.subr.mxu0 0.0
    %2306 = vmatpush1.msra.mxu0 0.0
    %2307 = vmatprep.subr.mxu0 0.0
    %2308 = vmatpush1.msra.mxu0 0.0
    %2309 = vmatprep.mubr.f32.mxu0 0.0
    %2310 = vmatmul.mubr.f32.gmra.mrb[0].mxu0 %v2237
    %v2311 = vpop.f32.mrb[0].mxu0
    %v2312 = vadd.f32 0.0, %v2311
    %v2313 = vpop.f32.mrb[0].mxu0
    %v2314 = vadd.f32 0.0, %v2313
    %2315 = vdwg.mxu0
    %v2316 = vadd.f32 %v2213, %v2312
    %v2317 = vadd.f32 %v2214, %v2314
    %v2318 = vld [vmem:[#allocation2 + $0x11] sm:$0x1]
    %v2319 = vld [vmem:[#allocation2 + $0x31] sm:$0x1]
    %v2321 = vrot.slane %v2319, 7
    %v2323 = vsel %vm576, %v2318, %v2321
    %s2324 = scalar_lea.vmem %s4, 1904
    %v2325 = vld [vmem:[%s2324] sm:$0xff]
    %v2326 = vld [vmem:[%s2324 + $0x8] sm:$0xff]
    %v2327 = vld [vmem:[%s2324 + $0x10] sm:$0xff]
    %v2328 = vld [vmem:[%s2324 + $0x18] sm:$0xff]
    %v2329 = vld [vmem:[%s2324 + $0x20] sm:$0xff]
    %v2330 = vld [vmem:[%s2324 + $0x28] sm:$0xff]
    %v2331 = vld [vmem:[%s2324 + $0x30] sm:$0xff]
    %v2332 = vld [vmem:[%s2324 + $0x38] sm:$0xff]
    %v2333 = vld [vmem:[%s2324 + $0x40] sm:$0xff]
    %v2334 = vld [vmem:[%s2324 + $0x48] sm:$0xff]
    %v2335 = vld [vmem:[%s2324 + $0x50] sm:$0xff]
    %v2336 = vld [vmem:[%s2324 + $0x58] sm:$0xff]
    %v2337 = vld [vmem:[%s2324 + $0x60] sm:$0x1]
    %v2338 = vld [vmem:[%s2324 + $0x68] sm:$0x1]
    %v2340 = vsel %vm299, %v2323, 0
    %v2343 = vsel %vm576, %v2337, 0
    %v2346 = vsel %vm576, %v2338, 0
    %2348 = vmatprep.subr.mxu0 %v2326
    %2349 = vmatpush1.msra.mxu0 %v2325
    %2350 = vmatprep.subr.mxu0 %v2328
    %2351 = vmatpush1.msra.mxu0 %v2327
    %2352 = vmatprep.subr.mxu0 %v2330
    %2353 = vmatpush1.msra.mxu0 %v2329
    %2354 = vmatprep.subr.mxu0 %v2332
    %2355 = vmatpush1.msra.mxu0 %v2331
    %2356 = vmatprep.subr.mxu0 %v2334
    %2357 = vmatpush1.msra.mxu0 %v2333
    %2358 = vmatprep.subr.mxu0 %v2336
    %2359 = vmatpush1.msra.mxu0 %v2335
    %2360 = vmatprep.subr.mxu0 %v2346
    %2361 = vmatpush1.msra.mxu0 %v2343
    %2362 = vmatprep.subr.mxu0 0.0
    %2363 = vmatpush1.msra.mxu0 0.0
    %2364 = vmatprep.subr.mxu0 0.0
    %2365 = vmatpush1.msra.mxu0 0.0
    %2366 = vmatprep.subr.mxu0 0.0
    %2367 = vmatpush1.msra.mxu0 0.0
    %2368 = vmatprep.subr.mxu0 0.0
    %2369 = vmatpush1.msra.mxu0 0.0
    %2370 = vmatprep.subr.mxu0 0.0
    %2371 = vmatpush1.msra.mxu0 0.0
    %2372 = vmatprep.subr.mxu0 0.0
    %2373 = vmatpush1.msra.mxu0 0.0
    %2374 = vmatprep.subr.mxu0 0.0
    %2375 = vmatpush1.msra.mxu0 0.0
    %2376 = vmatprep.subr.mxu0 0.0
    %2377 = vmatpush1.msra.mxu0 0.0
    %2378 = vmatprep.subr.mxu0 0.0
    %2379 = vmatpush1.msra.mxu0 0.0
    %2380 = vmatprep.subr.mxu0 0.0
    %2381 = vmatpush1.msra.mxu0 0.0
    %2382 = vmatprep.subr.mxu0 0.0
    %2383 = vmatpush1.msra.mxu0 0.0
    %2384 = vmatprep.subr.mxu0 0.0
    %2385 = vmatpush1.msra.mxu0 0.0
    %2386 = vmatprep.subr.mxu0 0.0
    %2387 = vmatpush1.msra.mxu0 0.0
    %2388 = vmatprep.subr.mxu0 0.0
    %2389 = vmatpush1.msra.mxu0 0.0
    %2390 = vmatprep.subr.mxu0 0.0
    %2391 = vmatpush1.msra.mxu0 0.0
    %2392 = vmatprep.subr.mxu0 0.0
    %2393 = vmatpush1.msra.mxu0 0.0
    %2394 = vmatprep.subr.mxu0 0.0
    %2395 = vmatpush1.msra.mxu0 0.0
    %2396 = vmatprep.subr.mxu0 0.0
    %2397 = vmatpush1.msra.mxu0 0.0
    %2398 = vmatprep.subr.mxu0 0.0
    %2399 = vmatpush1.msra.mxu0 0.0
    %2400 = vmatprep.subr.mxu0 0.0
    %2401 = vmatpush1.msra.mxu0 0.0
    %2402 = vmatprep.subr.mxu0 0.0
    %2403 = vmatpush1.msra.mxu0 0.0
    %2404 = vmatprep.subr.mxu0 0.0
    %2405 = vmatpush1.msra.mxu0 0.0
    %2406 = vmatprep.subr.mxu0 0.0
    %2407 = vmatpush1.msra.mxu0 0.0
    %2408 = vmatprep.subr.mxu0 0.0
    %2409 = vmatpush1.msra.mxu0 0.0
    %2410 = vmatprep.subr.mxu0 0.0
    %2411 = vmatpush1.msra.mxu0 0.0
    %2412 = vmatprep.mubr.f32.mxu0 0.0
    %2413 = vmatmul.mubr.f32.gmra.mrb[0].mxu0 %v2340
    %v2414 = vpop.f32.mrb[0].mxu0
    %v2415 = vadd.f32 0.0, %v2414
    %v2416 = vpop.f32.mrb[0].mxu0
    %v2417 = vadd.f32 0.0, %v2416
    %2418 = vdwg.mxu0
    %v2419 = vadd.f32 %v2316, %v2415
    %v2420 = vadd.f32 %v2317, %v2417
    %v2421 = vld [vmem:[#allocation2 + $0x12] sm:$0x1]
    %v2422 = vld [vmem:[#allocation2 + $0x32] sm:$0x1]
    %v2424 = vrot.slane %v2422, 7
    %v2426 = vsel %vm576, %v2421, %v2424
    %s2427 = scalar_lea.vmem %s4, 2016
    %v2428 = vld [vmem:[%s2427] sm:$0xff]
    %v2429 = vld [vmem:[%s2427 + $0x8] sm:$0xff]
    %v2430 = vld [vmem:[%s2427 + $0x10] sm:$0xff]
    %v2431 = vld [vmem:[%s2427 + $0x18] sm:$0xff]
    %v2432 = vld [vmem:[%s2427 + $0x20] sm:$0xff]
    %v2433 = vld [vmem:[%s2427 + $0x28] sm:$0xff]
    %v2434 = vld [vmem:[%s2427 + $0x30] sm:$0xff]
    %v2435 = vld [vmem:[%s2427 + $0x38] sm:$0xff]
    %v2436 = vld [vmem:[%s2427 + $0x40] sm:$0xff]
    %v2437 = vld [vmem:[%s2427 + $0x48] sm:$0xff]
    %v2438 = vld [vmem:[%s2427 + $0x50] sm:$0xff]
    %v2439 = vld [vmem:[%s2427 + $0x58] sm:$0xff]
    %v2440 = vld [vmem:[%s2427 + $0x60] sm:$0x1]
    %v2441 = vld [vmem:[%s2427 + $0x68] sm:$0x1]
    %v2443 = vsel %vm299, %v2426, 0
    %v2446 = vsel %vm576, %v2440, 0
    %v2449 = vsel %vm576, %v2441, 0
    %2451 = vmatprep.subr.mxu0 %v2429
    %2452 = vmatpush1.msra.mxu0 %v2428
    %2453 = vmatprep.subr.mxu0 %v2431
    %2454 = vmatpush1.msra.mxu0 %v2430
    %2455 = vmatprep.subr.mxu0 %v2433
    %2456 = vmatpush1.msra.mxu0 %v2432
    %2457 = vmatprep.subr.mxu0 %v2435
    %2458 = vmatpush1.msra.mxu0 %v2434
    %2459 = vmatprep.subr.mxu0 %v2437
    %2460 = vmatpush1.msra.mxu0 %v2436
    %2461 = vmatprep.subr.mxu0 %v2439
    %2462 = vmatpush1.msra.mxu0 %v2438
    %2463 = vmatprep.subr.mxu0 %v2449
    %2464 = vmatpush1.msra.mxu0 %v2446
    %2465 = vmatprep.subr.mxu0 0.0
    %2466 = vmatpush1.msra.mxu0 0.0
    %2467 = vmatprep.subr.mxu0 0.0
    %2468 = vmatpush1.msra.mxu0 0.0
    %2469 = vmatprep.subr.mxu0 0.0
    %2470 = vmatpush1.msra.mxu0 0.0
    %2471 = vmatprep.subr.mxu0 0.0
    %2472 = vmatpush1.msra.mxu0 0.0
    %2473 = vmatprep.subr.mxu0 0.0
    %2474 = vmatpush1.msra.mxu0 0.0
    %2475 = vmatprep.subr.mxu0 0.0
    %2476 = vmatpush1.msra.mxu0 0.0
    %2477 = vmatprep.subr.mxu0 0.0
    %2478 = vmatpush1.msra.mxu0 0.0
    %2479 = vmatprep.subr.mxu0 0.0
    %2480 = vmatpush1.msra.mxu0 0.0
    %2481 = vmatprep.subr.mxu0 0.0
    %2482 = vmatpush1.msra.mxu0 0.0
    %2483 = vmatprep.subr.mxu0 0.0
    %2484 = vmatpush1.msra.mxu0 0.0
    %2485 = vmatprep.subr.mxu0 0.0
    %2486 = vmatpush1.msra.mxu0 0.0
    %2487 = vmatprep.subr.mxu0 0.0
    %2488 = vmatpush1.msra.mxu0 0.0
    %2489 = vmatprep.subr.mxu0 0.0
    %2490 = vmatpush1.msra.mxu0 0.0
    %2491 = vmatprep.subr.mxu0 0.0
    %2492 = vmatpush1.msra.mxu0 0.0
    %2493 = vmatprep.subr.mxu0 0.0
    %2494 = vmatpush1.msra.mxu0 0.0
    %2495 = vmatprep.subr.mxu0 0.0
    %2496 = vmatpush1.msra.mxu0 0.0
    %2497 = vmatprep.subr.mxu0 0.0
    %2498 = vmatpush1.msra.mxu0 0.0
    %2499 = vmatprep.subr.mxu0 0.0
    %2500 = vmatpush1.msra.mxu0 0.0
    %2501 = vmatprep.subr.mxu0 0.0
    %2502 = vmatpush1.msra.mxu0 0.0
    %2503 = vmatprep.subr.mxu0 0.0
    %2504 = vmatpush1.msra.mxu0 0.0
    %2505 = vmatprep.subr.mxu0 0.0
    %2506 = vmatpush1.msra.mxu0 0.0
    %2507 = vmatprep.subr.mxu0 0.0
    %2508 = vmatpush1.msra.mxu0 0.0
    %2509 = vmatprep.subr.mxu0 0.0
    %2510 = vmatpush1.msra.mxu0 0.0
    %2511 = vmatprep.subr.mxu0 0.0
    %2512 = vmatpush1.msra.mxu0 0.0
    %2513 = vmatprep.subr.mxu0 0.0
    %2514 = vmatpush1.msra.mxu0 0.0
    %2515 = vmatprep.mubr.f32.mxu0 0.0
    %2516 = vmatmul.mubr.f32.gmra.mrb[0].mxu0 %v2443
    %v2517 = vpop.f32.mrb[0].mxu0
    %v2518 = vadd.f32 0.0, %v2517
    %v2519 = vpop.f32.mrb[0].mxu0
    %v2520 = vadd.f32 0.0, %v2519
    %2521 = vdwg.mxu0
    %v2522 = vadd.f32 %v2419, %v2518
    %v2523 = vadd.f32 %v2420, %v2520
    %v2524 = vld [vmem:[#allocation2 + $0x13] sm:$0x1]
    %v2525 = vld [vmem:[#allocation2 + $0x33] sm:$0x1]
    %v2527 = vrot.slane %v2525, 7
    %v2529 = vsel %vm576, %v2524, %v2527
    %s2530 = scalar_lea.vmem %s4, 2128
    %v2531 = vld [vmem:[%s2530] sm:$0xff]
    %v2532 = vld [vmem:[%s2530 + $0x8] sm:$0xff]
    %v2533 = vld [vmem:[%s2530 + $0x10] sm:$0xff]
    %v2534 = vld [vmem:[%s2530 + $0x18] sm:$0xff]
    %v2535 = vld [vmem:[%s2530 + $0x20] sm:$0xff]
    %v2536 = vld [vmem:[%s2530 + $0x28] sm:$0xff]
    %v2537 = vld [vmem:[%s2530 + $0x30] sm:$0xff]
    %v2538 = vld [vmem:[%s2530 + $0x38] sm:$0xff]
    %v2539 = vld [vmem:[%s2530 + $0x40] sm:$0xff]
    %v2540 = vld [vmem:[%s2530 + $0x48] sm:$0xff]
    %v2541 = vld [vmem:[%s2530 + $0x50] sm:$0xff]
    %v2542 = vld [vmem:[%s2530 + $0x58] sm:$0xff]
    %v2543 = vld [vmem:[%s2530 + $0x60] sm:$0x1]
    %v2544 = vld [vmem:[%s2530 + $0x68] sm:$0x1]
    %v2546 = vsel %vm299, %v2529, 0
    %v2549 = vsel %vm576, %v2543, 0
    %v2552 = vsel %vm576, %v2544, 0
    %2554 = vmatprep.subr.mxu0 %v2532
    %2555 = vmatpush1.msra.mxu0 %v2531
    %2556 = vmatprep.subr.mxu0 %v2534
    %2557 = vmatpush1.msra.mxu0 %v2533
    %2558 = vmatprep.subr.mxu0 %v2536
    %2559 = vmatpush1.msra.mxu0 %v2535
    %2560 = vmatprep.subr.mxu0 %v2538
    %2561 = vmatpush1.msra.mxu0 %v2537
    %2562 = vmatprep.subr.mxu0 %v2540
    %2563 = vmatpush1.msra.mxu0 %v2539
    %2564 = vmatprep.subr.mxu0 %v2542
    %2565 = vmatpush1.msra.mxu0 %v2541
    %2566 = vmatprep.subr.mxu0 %v2552
    %2567 = vmatpush1.msra.mxu0 %v2549
    %2568 = vmatprep.subr.mxu0 0.0
    %2569 = vmatpush1.msra.mxu0 0.0
    %2570 = vmatprep.subr.mxu0 0.0
    %2571 = vmatpush1.msra.mxu0 0.0
    %2572 = vmatprep.subr.mxu0 0.0
    %2573 = vmatpush1.msra.mxu0 0.0
    %2574 = vmatprep.subr.mxu0 0.0
    %2575 = vmatpush1.msra.mxu0 0.0
    %2576 = vmatprep.subr.mxu0 0.0
    %2577 = vmatpush1.msra.mxu0 0.0
    %2578 = vmatprep.subr.mxu0 0.0
    %2579 = vmatpush1.msra.mxu0 0.0
    %2580 = vmatprep.subr.mxu0 0.0
    %2581 = vmatpush1.msra.mxu0 0.0
    %2582 = vmatprep.subr.mxu0 0.0
    %2583 = vmatpush1.msra.mxu0 0.0
    %2584 = vmatprep.subr.mxu0 0.0
    %2585 = vmatpush1.msra.mxu0 0.0
    %2586 = vmatprep.subr.mxu0 0.0
    %2587 = vmatpush1.msra.mxu0 0.0
    %2588 = vmatprep.subr.mxu0 0.0
    %2589 = vmatpush1.msra.mxu0 0.0
    %2590 = vmatprep.subr.mxu0 0.0
    %2591 = vmatpush1.msra.mxu0 0.0
    %2592 = vmatprep.subr.mxu0 0.0
    %2593 = vmatpush1.msra.mxu0 0.0
    %2594 = vmatprep.subr.mxu0 0.0
    %2595 = vmatpush1.msra.mxu0 0.0
    %2596 = vmatprep.subr.mxu0 0.0
    %2597 = vmatpush1.msra.mxu0 0.0
    %2598 = vmatprep.subr.mxu0 0.0
    %2599 = vmatpush1.msra.mxu0 0.0
    %2600 = vmatprep.subr.mxu0 0.0
    %2601 = vmatpush1.msra.mxu0 0.0
    %2602 = vmatprep.subr.mxu0 0.0
    %2603 = vmatpush1.msra.mxu0 0.0
    %2604 = vmatprep.subr.mxu0 0.0
    %2605 = vmatpush1.msra.mxu0 0.0
    %2606 = vmatprep.subr.mxu0 0.0
    %2607 = vmatpush1.msra.mxu0 0.0
    %2608 = vmatprep.subr.mxu0 0.0
    %2609 = vmatpush1.msra.mxu0 0.0
    %2610 = vmatprep.subr.mxu0 0.0
    %2611 = vmatpush1.msra.mxu0 0.0
    %2612 = vmatprep.subr.mxu0 0.0
    %2613 = vmatpush1.msra.mxu0 0.0
    %2614 = vmatprep.subr.mxu0 0.0
    %2615 = vmatpush1.msra.mxu0 0.0
    %2616 = vmatprep.subr.mxu0 0.0
    %2617 = vmatpush1.msra.mxu0 0.0
    %2618 = vmatprep.mubr.f32.mxu0 0.0
    %2619 = vmatmul.mubr.f32.gmra.mrb[0].mxu0 %v2546
    %v2620 = vpop.f32.mrb[0].mxu0
    %v2621 = vadd.f32 0.0, %v2620
    %v2622 = vpop.f32.mrb[0].mxu0
    %v2623 = vadd.f32 0.0, %v2622
    %2624 = vdwg.mxu0
    %v2625 = vadd.f32 %v2522, %v2621
    %v2626 = vadd.f32 %v2523, %v2623
    %v2627 = vld [vmem:[#allocation2 + $0x14] sm:$0x1]
    %v2628 = vld [vmem:[#allocation2 + $0x34] sm:$0x1]
    %v2630 = vrot.slane %v2628, 7
    %v2632 = vsel %vm576, %v2627, %v2630
    %s2633 = scalar_lea.vmem %s4, 2240
    %v2634 = vld [vmem:[%s2633] sm:$0xff]
    %v2635 = vld [vmem:[%s2633 + $0x8] sm:$0xff]
    %v2636 = vld [vmem:[%s2633 + $0x10] sm:$0xff]
    %v2637 = vld [vmem:[%s2633 + $0x18] sm:$0xff]
    %v2638 = vld [vmem:[%s2633 + $0x20] sm:$0xff]
    %v2639 = vld [vmem:[%s2633 + $0x28] sm:$0xff]
    %v2640 = vld [vmem:[%s2633 + $0x30] sm:$0xff]
    %v2641 = vld [vmem:[%s2633 + $0x38] sm:$0xff]
    %v2642 = vld [vmem:[%s2633 + $0x40] sm:$0xff]
    %v2643 = vld [vmem:[%s2633 + $0x48] sm:$0xff]
    %v2644 = vld [vmem:[%s2633 + $0x50] sm:$0xff]
    %v2645 = vld [vmem:[%s2633 + $0x58] sm:$0xff]
    %v2646 = vld [vmem:[%s2633 + $0x60] sm:$0x1]
    %v2647 = vld [vmem:[%s2633 + $0x68] sm:$0x1]
    %v2649 = vsel %vm299, %v2632, 0
    %v2652 = vsel %vm576, %v2646, 0
    %v2655 = vsel %vm576, %v2647, 0
    %2657 = vmatprep.subr.mxu0 %v2635
    %2658 = vmatpush1.msra.mxu0 %v2634
    %2659 = vmatprep.subr.mxu0 %v2637
    %2660 = vmatpush1.msra.mxu0 %v2636
    %2661 = vmatprep.subr.mxu0 %v2639
    %2662 = vmatpush1.msra.mxu0 %v2638
    %2663 = vmatprep.subr.mxu0 %v2641
    %2664 = vmatpush1.msra.mxu0 %v2640
    %2665 = vmatprep.subr.mxu0 %v2643
    %2666 = vmatpush1.msra.mxu0 %v2642
    %2667 = vmatprep.subr.mxu0 %v2645
    %2668 = vmatpush1.msra.mxu0 %v2644
    %2669 = vmatprep.subr.mxu0 %v2655
    %2670 = vmatpush1.msra.mxu0 %v2652
    %2671 = vmatprep.subr.mxu0 0.0
    %2672 = vmatpush1.msra.mxu0 0.0
    %2673 = vmatprep.subr.mxu0 0.0
    %2674 = vmatpush1.msra.mxu0 0.0
    %2675 = vmatprep.subr.mxu0 0.0
    %2676 = vmatpush1.msra.mxu0 0.0
    %2677 = vmatprep.subr.mxu0 0.0
    %2678 = vmatpush1.msra.mxu0 0.0
    %2679 = vmatprep.subr.mxu0 0.0
    %2680 = vmatpush1.msra.mxu0 0.0
    %2681 = vmatprep.subr.mxu0 0.0
    %2682 = vmatpush1.msra.mxu0 0.0
    %2683 = vmatprep.subr.mxu0 0.0
    %2684 = vmatpush1.msra.mxu0 0.0
    %2685 = vmatprep.subr.mxu0 0.0
    %2686 = vmatpush1.msra.mxu0 0.0
    %2687 = vmatprep.subr.mxu0 0.0
    %2688 = vmatpush1.msra.mxu0 0.0
    %2689 = vmatprep.subr.mxu0 0.0
    %2690 = vmatpush1.msra.mxu0 0.0
    %2691 = vmatprep.subr.mxu0 0.0
    %2692 = vmatpush1.msra.mxu0 0.0
    %2693 = vmatprep.subr.mxu0 0.0
    %2694 = vmatpush1.msra.mxu0 0.0
    %2695 = vmatprep.subr.mxu0 0.0
    %2696 = vmatpush1.msra.mxu0 0.0
    %2697 = vmatprep.subr.mxu0 0.0
    %2698 = vmatpush1.msra.mxu0 0.0
    %2699 = vmatprep.subr.mxu0 0.0
    %2700 = vmatpush1.msra.mxu0 0.0
    %2701 = vmatprep.subr.mxu0 0.0
    %2702 = vmatpush1.msra.mxu0 0.0
    %2703 = vmatprep.subr.mxu0 0.0
    %2704 = vmatpush1.msra.mxu0 0.0
    %2705 = vmatprep.subr.mxu0 0.0
    %2706 = vmatpush1.msra.mxu0 0.0
    %2707 = vmatprep.subr.mxu0 0.0
    %2708 = vmatpush1.msra.mxu0 0.0
    %2709 = vmatprep.subr.mxu0 0.0
    %2710 = vmatpush1.msra.mxu0 0.0
    %2711 = vmatprep.subr.mxu0 0.0
    %2712 = vmatpush1.msra.mxu0 0.0
    %2713 = vmatprep.subr.mxu0 0.0
    %2714 = vmatpush1.msra.mxu0 0.0
    %2715 = vmatprep.subr.mxu0 0.0
    %2716 = vmatpush1.msra.mxu0 0.0
    %2717 = vmatprep.subr.mxu0 0.0
    %2718 = vmatpush1.msra.mxu0 0.0
    %2719 = vmatprep.subr.mxu0 0.0
    %2720 = vmatpush1.msra.mxu0 0.0
    %2721 = vmatprep.mubr.f32.mxu0 0.0
    %2722 = vmatmul.mubr.f32.gmra.mrb[0].mxu0 %v2649
    %v2723 = vpop.f32.mrb[0].mxu0
    %v2724 = vadd.f32 0.0, %v2723
    %v2725 = vpop.f32.mrb[0].mxu0
    %v2726 = vadd.f32 0.0, %v2725
    %2727 = vdwg.mxu0
    %v2728 = vadd.f32 %v2625, %v2724
    %v2729 = vadd.f32 %v2626, %v2726
    %v2730 = vld [vmem:[#allocation2 + $0x15] sm:$0x1]
    %v2731 = vld [vmem:[#allocation2 + $0x35] sm:$0x1]
    %v2733 = vrot.slane %v2731, 7
    %v2735 = vsel %vm576, %v2730, %v2733
    %s2736 = scalar_lea.vmem %s4, 2352
    %v2737 = vld [vmem:[%s2736] sm:$0xff]
    %v2738 = vld [vmem:[%s2736 + $0x8] sm:$0xff]
    %v2739 = vld [vmem:[%s2736 + $0x10] sm:$0xff]
    %v2740 = vld [vmem:[%s2736 + $0x18] sm:$0xff]
    %v2741 = vld [vmem:[%s2736 + $0x20] sm:$0xff]
    %v2742 = vld [vmem:[%s2736 + $0x28] sm:$0xff]
    %v2743 = vld [vmem:[%s2736 + $0x30] sm:$0xff]
    %v2744 = vld [vmem:[%s2736 + $0x38] sm:$0xff]
    %v2745 = vld [vmem:[%s2736 + $0x40] sm:$0xff]
    %v2746 = vld [vmem:[%s2736 + $0x48] sm:$0xff]
    %v2747 = vld [vmem:[%s2736 + $0x50] sm:$0xff]
    %v2748 = vld [vmem:[%s2736 + $0x58] sm:$0xff]
    %v2749 = vld [vmem:[%s2736 + $0x60] sm:$0x1]
    %v2750 = vld [vmem:[%s2736 + $0x68] sm:$0x1]
    %v2752 = vsel %vm299, %v2735, 0
    %v2755 = vsel %vm576, %v2749, 0
    %v2758 = vsel %vm576, %v2750, 0
    %2760 = vmatprep.subr.mxu0 %v2738
    %2761 = vmatpush1.msra.mxu0 %v2737
    %2762 = vmatprep.subr.mxu0 %v2740
    %2763 = vmatpush1.msra.mxu0 %v2739
    %2764 = vmatprep.subr.mxu0 %v2742
    %2765 = vmatpush1.msra.mxu0 %v2741
    %2766 = vmatprep.subr.mxu0 %v2744
    %2767 = vmatpush1.msra.mxu0 %v2743
    %2768 = vmatprep.subr.mxu0 %v2746
    %2769 = vmatpush1.msra.mxu0 %v2745
    %2770 = vmatprep.subr.mxu0 %v2748
    %2771 = vmatpush1.msra.mxu0 %v2747
    %2772 = vmatprep.subr.mxu0 %v2758
    %2773 = vmatpush1.msra.mxu0 %v2755
    %2774 = vmatprep.subr.mxu0 0.0
    %2775 = vmatpush1.msra.mxu0 0.0
    %2776 = vmatprep.subr.mxu0 0.0
    %2777 = vmatpush1.msra.mxu0 0.0
    %2778 = vmatprep.subr.mxu0 0.0
    %2779 = vmatpush1.msra.mxu0 0.0
    %2780 = vmatprep.subr.mxu0 0.0
    %2781 = vmatpush1.msra.mxu0 0.0
    %2782 = vmatprep.subr.mxu0 0.0
    %2783 = vmatpush1.msra.mxu0 0.0
    %2784 = vmatprep.subr.mxu0 0.0
    %2785 = vmatpush1.msra.mxu0 0.0
    %2786 = vmatprep.subr.mxu0 0.0
    %2787 = vmatpush1.msra.mxu0 0.0
    %2788 = vmatprep.subr.mxu0 0.0
    %2789 = vmatpush1.msra.mxu0 0.0
    %2790 = vmatprep.subr.mxu0 0.0
    %2791 = vmatpush1.msra.mxu0 0.0
    %2792 = vmatprep.subr.mxu0 0.0
    %2793 = vmatpush1.msra.mxu0 0.0
    %2794 = vmatprep.subr.mxu0 0.0
    %2795 = vmatpush1.msra.mxu0 0.0
    %2796 = vmatprep.subr.mxu0 0.0
    %2797 = vmatpush1.msra.mxu0 0.0
    %2798 = vmatprep.subr.mxu0 0.0
    %2799 = vmatpush1.msra.mxu0 0.0
    %2800 = vmatprep.subr.mxu0 0.0
    %2801 = vmatpush1.msra.mxu0 0.0
    %2802 = vmatprep.subr.mxu0 0.0
    %2803 = vmatpush1.msra.mxu0 0.0
    %2804 = vmatprep.subr.mxu0 0.0
    %2805 = vmatpush1.msra.mxu0 0.0
    %2806 = vmatprep.subr.mxu0 0.0
    %2807 = vmatpush1.msra.mxu0 0.0
    %2808 = vmatprep.subr.mxu0 0.0
    %2809 = vmatpush1.msra.mxu0 0.0
    %2810 = vmatprep.subr.mxu0 0.0
    %2811 = vmatpush1.msra.mxu0 0.0
    %2812 = vmatprep.subr.mxu0 0.0
    %2813 = vmatpush1.msra.mxu0 0.0
    %2814 = vmatprep.subr.mxu0 0.0
    %2815 = vmatpush1.msra.mxu0 0.0
    %2816 = vmatprep.subr.mxu0 0.0
    %2817 = vmatpush1.msra.mxu0 0.0
    %2818 = vmatprep.subr.mxu0 0.0
    %2819 = vmatpush1.msra.mxu0 0.0
    %2820 = vmatprep.subr.mxu0 0.0
    %2821 = vmatpush1.msra.mxu0 0.0
    %2822 = vmatprep.subr.mxu0 0.0
    %2823 = vmatpush1.msra.mxu0 0.0
    %2824 = vmatprep.mubr.f32.mxu0 0.0
    %2825 = vmatmul.mubr.f32.gmra.mrb[0].mxu0 %v2752
    %v2826 = vpop.f32.mrb[0].mxu0
    %v2827 = vadd.f32 0.0, %v2826
    %v2828 = vpop.f32.mrb[0].mxu0
    %v2829 = vadd.f32 0.0, %v2828
    %2830 = vdwg.mxu0
    %v2831 = vadd.f32 %v2728, %v2827
    %v2832 = vadd.f32 %v2729, %v2829
    %v2833 = vld [vmem:[#allocation2 + $0x16] sm:$0x1]
    %v2834 = vld [vmem:[#allocation2 + $0x36] sm:$0x1]
    %v2836 = vrot.slane %v2834, 7
    %v2838 = vsel %vm576, %v2833, %v2836
    %s2839 = scalar_lea.vmem %s4, 2464
    %v2840 = vld [vmem:[%s2839] sm:$0xff]
    %v2841 = vld [vmem:[%s2839 + $0x8] sm:$0xff]
    %v2842 = vld [vmem:[%s2839 + $0x10] sm:$0xff]
    %v2843 = vld [vmem:[%s2839 + $0x18] sm:$0xff]
    %v2844 = vld [vmem:[%s2839 + $0x20] sm:$0xff]
    %v2845 = vld [vmem:[%s2839 + $0x28] sm:$0xff]
    %v2846 = vld [vmem:[%s2839 + $0x30] sm:$0xff]
    %v2847 = vld [vmem:[%s2839 + $0x38] sm:$0xff]
    %v2848 = vld [vmem:[%s2839 + $0x40] sm:$0xff]
    %v2849 = vld [vmem:[%s2839 + $0x48] sm:$0xff]
    %v2850 = vld [vmem:[%s2839 + $0x50] sm:$0xff]
    %v2851 = vld [vmem:[%s2839 + $0x58] sm:$0xff]
    %v2852 = vld [vmem:[%s2839 + $0x60] sm:$0x1]
    %v2853 = vld [vmem:[%s2839 + $0x68] sm:$0x1]
    %v2855 = vsel %vm299, %v2838, 0
    %v2858 = vsel %vm576, %v2852, 0
    %v2861 = vsel %vm576, %v2853, 0
    %2863 = vmatprep.subr.mxu0 %v2841
    %2864 = vmatpush1.msra.mxu0 %v2840
    %2865 = vmatprep.subr.mxu0 %v2843
    %2866 = vmatpush1.msra.mxu0 %v2842
    %2867 = vmatprep.subr.mxu0 %v2845
    %2868 = vmatpush1.msra.mxu0 %v2844
    %2869 = vmatprep.subr.mxu0 %v2847
    %2870 = vmatpush1.msra.mxu0 %v2846
    %2871 = vmatprep.subr.mxu0 %v2849
    %2872 = vmatpush1.msra.mxu0 %v2848
    %2873 = vmatprep.subr.mxu0 %v2851
    %2874 = vmatpush1.msra.mxu0 %v2850
    %2875 = vmatprep.subr.mxu0 %v2861
    %2876 = vmatpush1.msra.mxu0 %v2858
    %2877 = vmatprep.subr.mxu0 0.0
    %2878 = vmatpush1.msra.mxu0 0.0
    %2879 = vmatprep.subr.mxu0 0.0
    %2880 = vmatpush1.msra.mxu0 0.0
    %2881 = vmatprep.subr.mxu0 0.0
    %2882 = vmatpush1.msra.mxu0 0.0
    %2883 = vmatprep.subr.mxu0 0.0
    %2884 = vmatpush1.msra.mxu0 0.0
    %2885 = vmatprep.subr.mxu0 0.0
    %2886 = vmatpush1.msra.mxu0 0.0
    %2887 = vmatprep.subr.mxu0 0.0
    %2888 = vmatpush1.msra.mxu0 0.0
    %2889 = vmatprep.subr.mxu0 0.0
    %2890 = vmatpush1.msra.mxu0 0.0
    %2891 = vmatprep.subr.mxu0 0.0
    %2892 = vmatpush1.msra.mxu0 0.0
    %2893 = vmatprep.subr.mxu0 0.0
    %2894 = vmatpush1.msra.mxu0 0.0
    %2895 = vmatprep.subr.mxu0 0.0
    %2896 = vmatpush1.msra.mxu0 0.0
    %2897 = vmatprep.subr.mxu0 0.0
    %2898 = vmatpush1.msra.mxu0 0.0
    %2899 = vmatprep.subr.mxu0 0.0
    %2900 = vmatpush1.msra.mxu0 0.0
    %2901 = vmatprep.subr.mxu0 0.0
    %2902 = vmatpush1.msra.mxu0 0.0
    %2903 = vmatprep.subr.mxu0 0.0
    %2904 = vmatpush1.msra.mxu0 0.0
    %2905 = vmatprep.subr.mxu0 0.0
    %2906 = vmatpush1.msra.mxu0 0.0
    %2907 = vmatprep.subr.mxu0 0.0
    %2908 = vmatpush1.msra.mxu0 0.0
    %2909 = vmatprep.subr.mxu0 0.0
    %2910 = vmatpush1.msra.mxu0 0.0
    %2911 = vmatprep.subr.mxu0 0.0
    %2912 = vmatpush1.msra.mxu0 0.0
    %2913 = vmatprep.subr.mxu0 0.0
    %2914 = vmatpush1.msra.mxu0 0.0
    %2915 = vmatprep.subr.mxu0 0.0
    %2916 = vmatpush1.msra.mxu0 0.0
    %2917 = vmatprep.subr.mxu0 0.0
    %2918 = vmatpush1.msra.mxu0 0.0
    %2919 = vmatprep.subr.mxu0 0.0
    %2920 = vmatpush1.msra.mxu0 0.0
    %2921 = vmatprep.subr.mxu0 0.0
    %2922 = vmatpush1.msra.mxu0 0.0
    %2923 = vmatprep.subr.mxu0 0.0
    %2924 = vmatpush1.msra.mxu0 0.0
    %2925 = vmatprep.subr.mxu0 0.0
    %2926 = vmatpush1.msra.mxu0 0.0
    %2927 = vmatprep.mubr.f32.mxu0 0.0
    %2928 = vmatmul.mubr.f32.gmra.mrb[0].mxu0 %v2855
    %v2929 = vpop.f32.mrb[0].mxu0
    %v2930 = vadd.f32 0.0, %v2929
    %v2931 = vpop.f32.mrb[0].mxu0
    %v2932 = vadd.f32 0.0, %v2931
    %2933 = vdwg.mxu0
    %v2934 = vadd.f32 %v2831, %v2930
    %v2935 = vadd.f32 %v2832, %v2932
    %v2936 = vld [vmem:[#allocation2 + $0x17] sm:$0x1]
    %v2937 = vld [vmem:[#allocation2 + $0x37] sm:$0x1]
    %v2939 = vrot.slane %v2937, 7
    %v2941 = vsel %vm576, %v2936, %v2939
    %s2942 = scalar_lea.vmem %s4, 2576
    %v2943 = vld [vmem:[%s2942] sm:$0xff]
    %v2944 = vld [vmem:[%s2942 + $0x8] sm:$0xff]
    %v2945 = vld [vmem:[%s2942 + $0x10] sm:$0xff]
    %v2946 = vld [vmem:[%s2942 + $0x18] sm:$0xff]
    %v2947 = vld [vmem:[%s2942 + $0x20] sm:$0xff]
    %v2948 = vld [vmem:[%s2942 + $0x28] sm:$0xff]
    %v2949 = vld [vmem:[%s2942 + $0x30] sm:$0xff]
    %v2950 = vld [vmem:[%s2942 + $0x38] sm:$0xff]
    %v2951 = vld [vmem:[%s2942 + $0x40] sm:$0xff]
    %v2952 = vld [vmem:[%s2942 + $0x48] sm:$0xff]
    %v2953 = vld [vmem:[%s2942 + $0x50] sm:$0xff]
    %v2954 = vld [vmem:[%s2942 + $0x58] sm:$0xff]
    %v2955 = vld [vmem:[%s2942 + $0x60] sm:$0x1]
    %v2956 = vld [vmem:[%s2942 + $0x68] sm:$0x1]
    %v2958 = vsel %vm299, %v2941, 0
    %v2961 = vsel %vm576, %v2955, 0
    %v2964 = vsel %vm576, %v2956, 0
    %2966 = vmatprep.subr.mxu0 %v2944
    %2967 = vmatpush1.msra.mxu0 %v2943
    %2968 = vmatprep.subr.mxu0 %v2946
    %2969 = vmatpush1.msra.mxu0 %v2945
    %2970 = vmatprep.subr.mxu0 %v2948
    %2971 = vmatpush1.msra.mxu0 %v2947
    %2972 = vmatprep.subr.mxu0 %v2950
    %2973 = vmatpush1.msra.mxu0 %v2949
    %2974 = vmatprep.subr.mxu0 %v2952
    %2975 = vmatpush1.msra.mxu0 %v2951
    %2976 = vmatprep.subr.mxu0 %v2954
    %2977 = vmatpush1.msra.mxu0 %v2953
    %2978 = vmatprep.subr.mxu0 %v2964
    %2979 = vmatpush1.msra.mxu0 %v2961
    %2980 = vmatprep.subr.mxu0 0.0
    %2981 = vmatpush1.msra.mxu0 0.0
    %2982 = vmatprep.subr.mxu0 0.0
    %2983 = vmatpush1.msra.mxu0 0.0
    %2984 = vmatprep.subr.mxu0 0.0
    %2985 = vmatpush1.msra.mxu0 0.0
    %2986 = vmatprep.subr.mxu0 0.0
    %2987 = vmatpush1.msra.mxu0 0.0
    %2988 = vmatprep.subr.mxu0 0.0
    %2989 = vmatpush1.msra.mxu0 0.0
    %2990 = vmatprep.subr.mxu0 0.0
    %2991 = vmatpush1.msra.mxu0 0.0
    %2992 = vmatprep.subr.mxu0 0.0
    %2993 = vmatpush1.msra.mxu0 0.0
    %2994 = vmatprep.subr.mxu0 0.0
    %2995 = vmatpush1.msra.mxu0 0.0
    %2996 = vmatprep.subr.mxu0 0.0
    %2997 = vmatpush1.msra.mxu0 0.0
    %2998 = vmatprep.subr.mxu0 0.0
    %2999 = vmatpush1.msra.mxu0 0.0
    %3000 = vmatprep.subr.mxu0 0.0
    %3001 = vmatpush1.msra.mxu0 0.0
    %3002 = vmatprep.subr.mxu0 0.0
    %3003 = vmatpush1.msra.mxu0 0.0
    %3004 = vmatprep.subr.mxu0 0.0
    %3005 = vmatpush1.msra.mxu0 0.0
    %3006 = vmatprep.subr.mxu0 0.0
    %3007 = vmatpush1.msra.mxu0 0.0
    %3008 = vmatprep.subr.mxu0 0.0
    %3009 = vmatpush1.msra.mxu0 0.0
    %3010 = vmatprep.subr.mxu0 0.0
    %3011 = vmatpush1.msra.mxu0 0.0
    %3012 = vmatprep.subr.mxu0 0.0
    %3013 = vmatpush1.msra.mxu0 0.0
    %3014 = vmatprep.subr.mxu0 0.0
    %3015 = vmatpush1.msra.mxu0 0.0
    %3016 = vmatprep.subr.mxu0 0.0
    %3017 = vmatpush1.msra.mxu0 0.0
    %3018 = vmatprep.subr.mxu0 0.0
    %3019 = vmatpush1.msra.mxu0 0.0
    %3020 = vmatprep.subr.mxu0 0.0
    %3021 = vmatpush1.msra.mxu0 0.0
    %3022 = vmatprep.subr.mxu0 0.0
    %3023 = vmatpush1.msra.mxu0 0.0
    %3024 = vmatprep.subr.mxu0 0.0
    %3025 = vmatpush1.msra.mxu0 0.0
    %3026 = vmatprep.subr.mxu0 0.0
    %3027 = vmatpush1.msra.mxu0 0.0
    %3028 = vmatprep.subr.mxu0 0.0
    %3029 = vmatpush1.msra.mxu0 0.0
    %3030 = vmatprep.mubr.f32.mxu0 0.0
    %3031 = vmatmul.mubr.f32.gmra.mrb[0].mxu0 %v2958
    %v3032 = vpop.f32.mrb[0].mxu0
    %v3033 = vadd.f32 0.0, %v3032
    %v3034 = vpop.f32.mrb[0].mxu0
    %v3035 = vadd.f32 0.0, %v3034
    %3036 = vdwg.mxu0
    %v3037 = vadd.f32 %v2934, %v3033
    %v3038 = vadd.f32 %v2935, %v3035
    %v3039 = vld [vmem:[#allocation2 + $0x18] sm:$0x1]
    %v3040 = vld [vmem:[#allocation2 + $0x38] sm:$0x1]
    %v3042 = vrot.slane %v3040, 7
    %v3044 = vsel %vm576, %v3039, %v3042
    %s3045 = scalar_lea.vmem %s4, 2688
    %v3046 = vld [vmem:[%s3045] sm:$0xff]
    %v3047 = vld [vmem:[%s3045 + $0x8] sm:$0xff]
    %v3048 = vld [vmem:[%s3045 + $0x10] sm:$0xff]
    %v3049 = vld [vmem:[%s3045 + $0x18] sm:$0xff]
    %v3050 = vld [vmem:[%s3045 + $0x20] sm:$0xff]
    %v3051 = vld [vmem:[%s3045 + $0x28] sm:$0xff]
    %v3052 = vld [vmem:[%s3045 + $0x30] sm:$0xff]
    %v3053 = vld [vmem:[%s3045 + $0x38] sm:$0xff]
    %v3054 = vld [vmem:[%s3045 + $0x40] sm:$0xff]
    %v3055 = vld [vmem:[%s3045 + $0x48] sm:$0xff]
    %v3056 = vld [vmem:[%s3045 + $0x50] sm:$0xff]
    %v3057 = vld [vmem:[%s3045 + $0x58] sm:$0xff]
    %v3058 = vld [vmem:[%s3045 + $0x60] sm:$0x1]
    %v3059 = vld [vmem:[%s3045 + $0x68] sm:$0x1]
    %v3061 = vsel %vm299, %v3044, 0
    %v3064 = vsel %vm576, %v3058, 0
    %v3067 = vsel %vm576, %v3059, 0
    %3069 = vmatprep.subr.mxu0 %v3047
    %3070 = vmatpush1.msra.mxu0 %v3046
    %3071 = vmatprep.subr.mxu0 %v3049
    %3072 = vmatpush1.msra.mxu0 %v3048
    %3073 = vmatprep.subr.mxu0 %v3051
    %3074 = vmatpush1.msra.mxu0 %v3050
    %3075 = vmatprep.subr.mxu0 %v3053
    %3076 = vmatpush1.msra.mxu0 %v3052
    %3077 = vmatprep.subr.mxu0 %v3055
    %3078 = vmatpush1.msra.mxu0 %v3054
    %3079 = vmatprep.subr.mxu0 %v3057
    %3080 = vmatpush1.msra.mxu0 %v3056
    %3081 = vmatprep.subr.mxu0 %v3067
    %3082 = vmatpush1.msra.mxu0 %v3064
    %3083 = vmatprep.subr.mxu0 0.0
    %3084 = vmatpush1.msra.mxu0 0.0
    %3085 = vmatprep.subr.mxu0 0.0
    %3086 = vmatpush1.msra.mxu0 0.0
    %3087 = vmatprep.subr.mxu0 0.0
    %3088 = vmatpush1.msra.mxu0 0.0
    %3089 = vmatprep.subr.mxu0 0.0
    %3090 = vmatpush1.msra.mxu0 0.0
    %3091 = vmatprep.subr.mxu0 0.0
    %3092 = vmatpush1.msra.mxu0 0.0
    %3093 = vmatprep.subr.mxu0 0.0
    %3094 = vmatpush1.msra.mxu0 0.0
    %3095 = vmatprep.subr.mxu0 0.0
    %3096 = vmatpush1.msra.mxu0 0.0
    %3097 = vmatprep.subr.mxu0 0.0
    %3098 = vmatpush1.msra.mxu0 0.0
    %3099 = vmatprep.subr.mxu0 0.0
    %3100 = vmatpush1.msra.mxu0 0.0
    %3101 = vmatprep.subr.mxu0 0.0
    %3102 = vmatpush1.msra.mxu0 0.0
    %3103 = vmatprep.subr.mxu0 0.0
    %3104 = vmatpush1.msra.mxu0 0.0
    %3105 = vmatprep.subr.mxu0 0.0
    %3106 = vmatpush1.msra.mxu0 0.0
    %3107 = vmatprep.subr.mxu0 0.0
    %3108 = vmatpush1.msra.mxu0 0.0
    %3109 = vmatprep.subr.mxu0 0.0
    %3110 = vmatpush1.msra.mxu0 0.0
    %3111 = vmatprep.subr.mxu0 0.0
    %3112 = vmatpush1.msra.mxu0 0.0
    %3113 = vmatprep.subr.mxu0 0.0
    %3114 = vmatpush1.msra.mxu0 0.0
    %3115 = vmatprep.subr.mxu0 0.0
    %3116 = vmatpush1.msra.mxu0 0.0
    %3117 = vmatprep.subr.mxu0 0.0
    %3118 = vmatpush1.msra.mxu0 0.0
    %3119 = vmatprep.subr.mxu0 0.0
    %3120 = vmatpush1.msra.mxu0 0.0
    %3121 = vmatprep.subr.mxu0 0.0
    %3122 = vmatpush1.msra.mxu0 0.0
    %3123 = vmatprep.subr.mxu0 0.0
    %3124 = vmatpush1.msra.mxu0 0.0
    %3125 = vmatprep.subr.mxu0 0.0
    %3126 = vmatpush1.msra.mxu0 0.0
    %3127 = vmatprep.subr.mxu0 0.0
    %3128 = vmatpush1.msra.mxu0 0.0
    %3129 = vmatprep.subr.mxu0 0.0
    %3130 = vmatpush1.msra.mxu0 0.0
    %3131 = vmatprep.subr.mxu0 0.0
    %3132 = vmatpush1.msra.mxu0 0.0
    %3133 = vmatprep.mubr.f32.mxu0 0.0
    %3134 = vmatmul.mubr.f32.gmra.mrb[0].mxu0 %v3061
    %v3135 = vpop.f32.mrb[0].mxu0
    %v3136 = vadd.f32 0.0, %v3135
    %v3137 = vpop.f32.mrb[0].mxu0
    %v3138 = vadd.f32 0.0, %v3137
    %3139 = vdwg.mxu0
    %v3140 = vadd.f32 %v3037, %v3136
    %v3141 = vadd.f32 %v3038, %v3138
    %v3142 = vld [vmem:[#allocation2 + $0x19] sm:$0x1]
    %v3143 = vld [vmem:[#allocation2 + $0x39] sm:$0x1]
    %v3145 = vrot.slane %v3143, 7
    %v3147 = vsel %vm576, %v3142, %v3145
    %s3148 = scalar_lea.vmem %s4, 2800
    %v3149 = vld [vmem:[%s3148] sm:$0xff]
    %v3150 = vld [vmem:[%s3148 + $0x8] sm:$0xff]
    %v3151 = vld [vmem:[%s3148 + $0x10] sm:$0xff]
    %v3152 = vld [vmem:[%s3148 + $0x18] sm:$0xff]
    %v3153 = vld [vmem:[%s3148 + $0x20] sm:$0xff]
    %v3154 = vld [vmem:[%s3148 + $0x28] sm:$0xff]
    %v3155 = vld [vmem:[%s3148 + $0x30] sm:$0xff]
    %v3156 = vld [vmem:[%s3148 + $0x38] sm:$0xff]
    %v3157 = vld [vmem:[%s3148 + $0x40] sm:$0xff]
    %v3158 = vld [vmem:[%s3148 + $0x48] sm:$0xff]
    %v3159 = vld [vmem:[%s3148 + $0x50] sm:$0xff]
    %v3160 = vld [vmem:[%s3148 + $0x58] sm:$0xff]
    %v3161 = vld [vmem:[%s3148 + $0x60] sm:$0x1]
    %v3162 = vld [vmem:[%s3148 + $0x68] sm:$0x1]
    %v3164 = vsel %vm299, %v3147, 0
    %v3167 = vsel %vm576, %v3161, 0
    %v3170 = vsel %vm576, %v3162, 0
    %3172 = vmatprep.subr.mxu0 %v3150
    %3173 = vmatpush1.msra.mxu0 %v3149
    %3174 = vmatprep.subr.mxu0 %v3152
    %3175 = vmatpush1.msra.mxu0 %v3151
    %3176 = vmatprep.subr.mxu0 %v3154
    %3177 = vmatpush1.msra.mxu0 %v3153
    %3178 = vmatprep.subr.mxu0 %v3156
    %3179 = vmatpush1.msra.mxu0 %v3155
    %3180 = vmatprep.subr.mxu0 %v3158
    %3181 = vmatpush1.msra.mxu0 %v3157
    %3182 = vmatprep.subr.mxu0 %v3160
    %3183 = vmatpush1.msra.mxu0 %v3159
    %3184 = vmatprep.subr.mxu0 %v3170
    %3185 = vmatpush1.msra.mxu0 %v3167
    %3186 = vmatprep.subr.mxu0 0.0
    %3187 = vmatpush1.msra.mxu0 0.0
    %3188 = vmatprep.subr.mxu0 0.0
    %3189 = vmatpush1.msra.mxu0 0.0
    %3190 = vmatprep.subr.mxu0 0.0
    %3191 = vmatpush1.msra.mxu0 0.0
    %3192 = vmatprep.subr.mxu0 0.0
    %3193 = vmatpush1.msra.mxu0 0.0
    %3194 = vmatprep.subr.mxu0 0.0
    %3195 = vmatpush1.msra.mxu0 0.0
    %3196 = vmatprep.subr.mxu0 0.0
    %3197 = vmatpush1.msra.mxu0 0.0
    %3198 = vmatprep.subr.mxu0 0.0
    %3199 = vmatpush1.msra.mxu0 0.0
    %3200 = vmatprep.subr.mxu0 0.0
    %3201 = vmatpush1.msra.mxu0 0.0
    %3202 = vmatprep.subr.mxu0 0.0
    %3203 = vmatpush1.msra.mxu0 0.0
    %3204 = vmatprep.subr.mxu0 0.0
    %3205 = vmatpush1.msra.mxu0 0.0
    %3206 = vmatprep.subr.mxu0 0.0
    %3207 = vmatpush1.msra.mxu0 0.0
    %3208 = vmatprep.subr.mxu0 0.0
    %3209 = vmatpush1.msra.mxu0 0.0
    %3210 = vmatprep.subr.mxu0 0.0
    %3211 = vmatpush1.msra.mxu0 0.0
    %3212 = vmatprep.subr.mxu0 0.0
    %3213 = vmatpush1.msra.mxu0 0.0
    %3214 = vmatprep.subr.mxu0 0.0
    %3215 = vmatpush1.msra.mxu0 0.0
    %3216 = vmatprep.subr.mxu0 0.0
    %3217 = vmatpush1.msra.mxu0 0.0
    %3218 = vmatprep.subr.mxu0 0.0
    %3219 = vmatpush1.msra.mxu0 0.0
    %3220 = vmatprep.subr.mxu0 0.0
    %3221 = vmatpush1.msra.mxu0 0.0
    %3222 = vmatprep.subr.mxu0 0.0
    %3223 = vmatpush1.msra.mxu0 0.0
    %3224 = vmatprep.subr.mxu0 0.0
    %3225 = vmatpush1.msra.mxu0 0.0
    %3226 = vmatprep.subr.mxu0 0.0
    %3227 = vmatpush1.msra.mxu0 0.0
    %3228 = vmatprep.subr.mxu0 0.0
    %3229 = vmatpush1.msra.mxu0 0.0
    %3230 = vmatprep.subr.mxu0 0.0
    %3231 = vmatpush1.msra.mxu0 0.0
    %3232 = vmatprep.subr.mxu0 0.0
    %3233 = vmatpush1.msra.mxu0 0.0
    %3234 = vmatprep.subr.mxu0 0.0
    %3235 = vmatpush1.msra.mxu0 0.0
    %3236 = vmatprep.mubr.f32.mxu0 0.0
    %3237 = vmatmul.mubr.f32.gmra.mrb[0].mxu0 %v3164
    %v3238 = vpop.f32.mrb[0].mxu0
    %v3239 = vadd.f32 0.0, %v3238
    %v3240 = vpop.f32.mrb[0].mxu0
    %v3241 = vadd.f32 0.0, %v3240
    %3242 = vdwg.mxu0
    %v3243 = vadd.f32 %v3140, %v3239
    %v3244 = vadd.f32 %v3141, %v3241
    %v3245 = vld [vmem:[#allocation2 + $0x1a] sm:$0x1]
    %v3246 = vld [vmem:[#allocation2 + $0x3a] sm:$0x1]
    %v3248 = vrot.slane %v3246, 7
    %v3250 = vsel %vm576, %v3245, %v3248
    %s3251 = scalar_lea.vmem %s4, 2912
    %v3252 = vld [vmem:[%s3251] sm:$0xff]
    %v3253 = vld [vmem:[%s3251 + $0x8] sm:$0xff]
    %v3254 = vld [vmem:[%s3251 + $0x10] sm:$0xff]
    %v3255 = vld [vmem:[%s3251 + $0x18] sm:$0xff]
    %v3256 = vld [vmem:[%s3251 + $0x20] sm:$0xff]
    %v3257 = vld [vmem:[%s3251 + $0x28] sm:$0xff]
    %v3258 = vld [vmem:[%s3251 + $0x30] sm:$0xff]
    %v3259 = vld [vmem:[%s3251 + $0x38] sm:$0xff]
    %v3260 = vld [vmem:[%s3251 + $0x40] sm:$0xff]
    %v3261 = vld [vmem:[%s3251 + $0x48] sm:$0xff]
    %v3262 = vld [vmem:[%s3251 + $0x50] sm:$0xff]
    %v3263 = vld [vmem:[%s3251 + $0x58] sm:$0xff]
    %v3264 = vld [vmem:[%s3251 + $0x60] sm:$0x1]
    %v3265 = vld [vmem:[%s3251 + $0x68] sm:$0x1]
    %v3267 = vsel %vm299, %v3250, 0
    %v3270 = vsel %vm576, %v3264, 0
    %v3273 = vsel %vm576, %v3265, 0
    %3275 = vmatprep.subr.mxu0 %v3253
    %3276 = vmatpush1.msra.mxu0 %v3252
    %3277 = vmatprep.subr.mxu0 %v3255
    %3278 = vmatpush1.msra.mxu0 %v3254
    %3279 = vmatprep.subr.mxu0 %v3257
    %3280 = vmatpush1.msra.mxu0 %v3256
    %3281 = vmatprep.subr.mxu0 %v3259
    %3282 = vmatpush1.msra.mxu0 %v3258
    %3283 = vmatprep.subr.mxu0 %v3261
    %3284 = vmatpush1.msra.mxu0 %v3260
    %3285 = vmatprep.subr.mxu0 %v3263
    %3286 = vmatpush1.msra.mxu0 %v3262
    %3287 = vmatprep.subr.mxu0 %v3273
    %3288 = vmatpush1.msra.mxu0 %v3270
    %3289 = vmatprep.subr.mxu0 0.0
    %3290 = vmatpush1.msra.mxu0 0.0
    %3291 = vmatprep.subr.mxu0 0.0
    %3292 = vmatpush1.msra.mxu0 0.0
    %3293 = vmatprep.subr.mxu0 0.0
    %3294 = vmatpush1.msra.mxu0 0.0
    %3295 = vmatprep.subr.mxu0 0.0
    %3296 = vmatpush1.msra.mxu0 0.0
    %3297 = vmatprep.subr.mxu0 0.0
    %3298 = vmatpush1.msra.mxu0 0.0
    %3299 = vmatprep.subr.mxu0 0.0
    %3300 = vmatpush1.msra.mxu0 0.0
    %3301 = vmatprep.subr.mxu0 0.0
    %3302 = vmatpush1.msra.mxu0 0.0
    %3303 = vmatprep.subr.mxu0 0.0
    %3304 = vmatpush1.msra.mxu0 0.0
    %3305 = vmatprep.subr.mxu0 0.0
    %3306 = vmatpush1.msra.mxu0 0.0
    %3307 = vmatprep.subr.mxu0 0.0
    %3308 = vmatpush1.msra.mxu0 0.0
    %3309 = vmatprep.subr.mxu0 0.0
    %3310 = vmatpush1.msra.mxu0 0.0
    %3311 = vmatprep.subr.mxu0 0.0
    %3312 = vmatpush1.msra.mxu0 0.0
    %3313 = vmatprep.subr.mxu0 0.0
    %3314 = vmatpush1.msra.mxu0 0.0
    %3315 = vmatprep.subr.mxu0 0.0
    %3316 = vmatpush1.msra.mxu0 0.0
    %3317 = vmatprep.subr.mxu0 0.0
    %3318 = vmatpush1.msra.mxu0 0.0
    %3319 = vmatprep.subr.mxu0 0.0
    %3320 = vmatpush1.msra.mxu0 0.0
    %3321 = vmatprep.subr.mxu0 0.0
    %3322 = vmatpush1.msra.mxu0 0.0
    %3323 = vmatprep.subr.mxu0 0.0
    %3324 = vmatpush1.msra.mxu0 0.0
    %3325 = vmatprep.subr.mxu0 0.0
    %3326 = vmatpush1.msra.mxu0 0.0
    %3327 = vmatprep.subr.mxu0 0.0
    %3328 = vmatpush1.msra.mxu0 0.0
    %3329 = vmatprep.subr.mxu0 0.0
    %3330 = vmatpush1.msra.mxu0 0.0
    %3331 = vmatprep.subr.mxu0 0.0
    %3332 = vmatpush1.msra.mxu0 0.0
    %3333 = vmatprep.subr.mxu0 0.0
    %3334 = vmatpush1.msra.mxu0 0.0
    %3335 = vmatprep.subr.mxu0 0.0
    %3336 = vmatpush1.msra.mxu0 0.0
    %3337 = vmatprep.subr.mxu0 0.0
    %3338 = vmatpush1.msra.mxu0 0.0
    %3339 = vmatprep.mubr.f32.mxu0 0.0
    %3340 = vmatmul.mubr.f32.gmra.mrb[0].mxu0 %v3267
    %v3341 = vpop.f32.mrb[0].mxu0
    %v3342 = vadd.f32 0.0, %v3341
    %v3343 = vpop.f32.mrb[0].mxu0
    %v3344 = vadd.f32 0.0, %v3343
    %3345 = vdwg.mxu0
    %v3346 = vadd.f32 %v3243, %v3342
    %v3347 = vadd.f32 %v3244, %v3344
    %v3348 = vld [vmem:[#allocation2 + $0x1b] sm:$0x1]
    %v3349 = vld [vmem:[#allocation2 + $0x3b] sm:$0x1]
    %v3351 = vrot.slane %v3349, 7
    %v3353 = vsel %vm576, %v3348, %v3351
    %s3354 = scalar_lea.vmem %s4, 3024
    %v3355 = vld [vmem:[%s3354] sm:$0xff]
    %v3356 = vld [vmem:[%s3354 + $0x8] sm:$0xff]
    %v3357 = vld [vmem:[%s3354 + $0x10] sm:$0xff]
    %v3358 = vld [vmem:[%s3354 + $0x18] sm:$0xff]
    %v3359 = vld [vmem:[%s3354 + $0x20] sm:$0xff]
    %v3360 = vld [vmem:[%s3354 + $0x28] sm:$0xff]
    %v3361 = vld [vmem:[%s3354 + $0x30] sm:$0xff]
    %v3362 = vld [vmem:[%s3354 + $0x38] sm:$0xff]
    %v3363 = vld [vmem:[%s3354 + $0x40] sm:$0xff]
    %v3364 = vld [vmem:[%s3354 + $0x48] sm:$0xff]
    %v3365 = vld [vmem:[%s3354 + $0x50] sm:$0xff]
    %v3366 = vld [vmem:[%s3354 + $0x58] sm:$0xff]
    %v3367 = vld [vmem:[%s3354 + $0x60] sm:$0x1]
    %v3368 = vld [vmem:[%s3354 + $0x68] sm:$0x1]
    %v3370 = vsel %vm299, %v3353, 0
    %v3373 = vsel %vm576, %v3367, 0
    %v3376 = vsel %vm576, %v3368, 0
    %3378 = vmatprep.subr.mxu0 %v3356
    %3379 = vmatpush1.msra.mxu0 %v3355
    %3380 = vmatprep.subr.mxu0 %v3358
    %3381 = vmatpush1.msra.mxu0 %v3357
    %3382 = vmatprep.subr.mxu0 %v3360
    %3383 = vmatpush1.msra.mxu0 %v3359
    %3384 = vmatprep.subr.mxu0 %v3362
    %3385 = vmatpush1.msra.mxu0 %v3361
    %3386 = vmatprep.subr.mxu0 %v3364
    %3387 = vmatpush1.msra.mxu0 %v3363
    %3388 = vmatprep.subr.mxu0 %v3366
    %3389 = vmatpush1.msra.mxu0 %v3365
    %3390 = vmatprep.subr.mxu0 %v3376
    %3391 = vmatpush1.msra.mxu0 %v3373
    %3392 = vmatprep.subr.mxu0 0.0
    %3393 = vmatpush1.msra.mxu0 0.0
    %3394 = vmatprep.subr.mxu0 0.0
    %3395 = vmatpush1.msra.mxu0 0.0
    %3396 = vmatprep.subr.mxu0 0.0
    %3397 = vmatpush1.msra.mxu0 0.0
    %3398 = vmatprep.subr.mxu0 0.0
    %3399 = vmatpush1.msra.mxu0 0.0
    %3400 = vmatprep.subr.mxu0 0.0
    %3401 = vmatpush1.msra.mxu0 0.0
    %3402 = vmatprep.subr.mxu0 0.0
    %3403 = vmatpush1.msra.mxu0 0.0
    %3404 = vmatprep.subr.mxu0 0.0
    %3405 = vmatpush1.msra.mxu0 0.0
    %3406 = vmatprep.subr.mxu0 0.0
    %3407 = vmatpush1.msra.mxu0 0.0
    %3408 = vmatprep.subr.mxu0 0.0
    %3409 = vmatpush1.msra.mxu0 0.0
    %3410 = vmatprep.subr.mxu0 0.0
    %3411 = vmatpush1.msra.mxu0 0.0
    %3412 = vmatprep.subr.mxu0 0.0
    %3413 = vmatpush1.msra.mxu0 0.0
    %3414 = vmatprep.subr.mxu0 0.0
    %3415 = vmatpush1.msra.mxu0 0.0
    %3416 = vmatprep.subr.mxu0 0.0
    %3417 = vmatpush1.msra.mxu0 0.0
    %3418 = vmatprep.subr.mxu0 0.0
    %3419 = vmatpush1.msra.mxu0 0.0
    %3420 = vmatprep.subr.mxu0 0.0
    %3421 = vmatpush1.msra.mxu0 0.0
    %3422 = vmatprep.subr.mxu0 0.0
    %3423 = vmatpush1.msra.mxu0 0.0
    %3424 = vmatprep.subr.mxu0 0.0
    %3425 = vmatpush1.msra.mxu0 0.0
    %3426 = vmatprep.subr.mxu0 0.0
    %3427 = vmatpush1.msra.mxu0 0.0
    %3428 = vmatprep.subr.mxu0 0.0
    %3429 = vmatpush1.msra.mxu0 0.0
    %3430 = vmatprep.subr.mxu0 0.0
    %3431 = vmatpush1.msra.mxu0 0.0
    %3432 = vmatprep.subr.mxu0 0.0
    %3433 = vmatpush1.msra.mxu0 0.0
    %3434 = vmatprep.subr.mxu0 0.0
    %3435 = vmatpush1.msra.mxu0 0.0
    %3436 = vmatprep.subr.mxu0 0.0
    %3437 = vmatpush1.msra.mxu0 0.0
    %3438 = vmatprep.subr.mxu0 0.0
    %3439 = vmatpush1.msra.mxu0 0.0
    %3440 = vmatprep.subr.mxu0 0.0
    %3441 = vmatpush1.msra.mxu0 0.0
    %3442 = vmatprep.mubr.f32.mxu0 0.0
    %3443 = vmatmul.mubr.f32.gmra.mrb[0].mxu0 %v3370
    %v3444 = vpop.f32.mrb[0].mxu0
    %v3445 = vadd.f32 0.0, %v3444
    %v3446 = vpop.f32.mrb[0].mxu0
    %v3447 = vadd.f32 0.0, %v3446
    %3448 = vdwg.mxu0
    %v3449 = vadd.f32 %v3346, %v3445
    %v3450 = vadd.f32 %v3347, %v3447
    %v3451 = vld [vmem:[#allocation2 + $0x1c] sm:$0x1]
    %v3452 = vld [vmem:[#allocation2 + $0x3c] sm:$0x1]
    %v3454 = vrot.slane %v3452, 7
    %v3456 = vsel %vm576, %v3451, %v3454
    %s3457 = scalar_lea.vmem %s4, 3136
    %v3458 = vld [vmem:[%s3457] sm:$0xff]
    %v3459 = vld [vmem:[%s3457 + $0x8] sm:$0xff]
    %v3460 = vld [vmem:[%s3457 + $0x10] sm:$0xff]
    %v3461 = vld [vmem:[%s3457 + $0x18] sm:$0xff]
    %v3462 = vld [vmem:[%s3457 + $0x20] sm:$0xff]
    %v3463 = vld [vmem:[%s3457 + $0x28] sm:$0xff]
    %v3464 = vld [vmem:[%s3457 + $0x30] sm:$0xff]
    %v3465 = vld [vmem:[%s3457 + $0x38] sm:$0xff]
    %v3466 = vld [vmem:[%s3457 + $0x40] sm:$0xff]
    %v3467 = vld [vmem:[%s3457 + $0x48] sm:$0xff]
    %v3468 = vld [vmem:[%s3457 + $0x50] sm:$0xff]
    %v3469 = vld [vmem:[%s3457 + $0x58] sm:$0xff]
    %v3470 = vld [vmem:[%s3457 + $0x60] sm:$0x1]
    %v3471 = vld [vmem:[%s3457 + $0x68] sm:$0x1]
    %v3473 = vsel %vm299, %v3456, 0
    %v3476 = vsel %vm576, %v3470, 0
    %v3479 = vsel %vm576, %v3471, 0
    %3481 = vmatprep.subr.mxu0 %v3459
    %3482 = vmatpush1.msra.mxu0 %v3458
    %3483 = vmatprep.subr.mxu0 %v3461
    %3484 = vmatpush1.msra.mxu0 %v3460
    %3485 = vmatprep.subr.mxu0 %v3463
    %3486 = vmatpush1.msra.mxu0 %v3462
    %3487 = vmatprep.subr.mxu0 %v3465
    %3488 = vmatpush1.msra.mxu0 %v3464
    %3489 = vmatprep.subr.mxu0 %v3467
    %3490 = vmatpush1.msra.mxu0 %v3466
    %3491 = vmatprep.subr.mxu0 %v3469
    %3492 = vmatpush1.msra.mxu0 %v3468
    %3493 = vmatprep.subr.mxu0 %v3479
    %3494 = vmatpush1.msra.mxu0 %v3476
    %3495 = vmatprep.subr.mxu0 0.0
    %3496 = vmatpush1.msra.mxu0 0.0
    %3497 = vmatprep.subr.mxu0 0.0
    %3498 = vmatpush1.msra.mxu0 0.0
    %3499 = vmatprep.subr.mxu0 0.0
    %3500 = vmatpush1.msra.mxu0 0.0
    %3501 = vmatprep.subr.mxu0 0.0
    %3502 = vmatpush1.msra.mxu0 0.0
    %3503 = vmatprep.subr.mxu0 0.0
    %3504 = vmatpush1.msra.mxu0 0.0
    %3505 = vmatprep.subr.mxu0 0.0
    %3506 = vmatpush1.msra.mxu0 0.0
    %3507 = vmatprep.subr.mxu0 0.0
    %3508 = vmatpush1.msra.mxu0 0.0
    %3509 = vmatprep.subr.mxu0 0.0
    %3510 = vmatpush1.msra.mxu0 0.0
    %3511 = vmatprep.subr.mxu0 0.0
    %3512 = vmatpush1.msra.mxu0 0.0
    %3513 = vmatprep.subr.mxu0 0.0
    %3514 = vmatpush1.msra.mxu0 0.0
    %3515 = vmatprep.subr.mxu0 0.0
    %3516 = vmatpush1.msra.mxu0 0.0
    %3517 = vmatprep.subr.mxu0 0.0
    %3518 = vmatpush1.msra.mxu0 0.0
    %3519 = vmatprep.subr.mxu0 0.0
    %3520 = vmatpush1.msra.mxu0 0.0
    %3521 = vmatprep.subr.mxu0 0.0
    %3522 = vmatpush1.msra.mxu0 0.0
    %3523 = vmatprep.subr.mxu0 0.0
    %3524 = vmatpush1.msra.mxu0 0.0
    %3525 = vmatprep.subr.mxu0 0.0
    %3526 = vmatpush1.msra.mxu0 0.0
    %3527 = vmatprep.subr.mxu0 0.0
    %3528 = vmatpush1.msra.mxu0 0.0
    %3529 = vmatprep.subr.mxu0 0.0
    %3530 = vmatpush1.msra.mxu0 0.0
    %3531 = vmatprep.subr.mxu0 0.0
    %3532 = vmatpush1.msra.mxu0 0.0
    %3533 = vmatprep.subr.mxu0 0.0
    %3534 = vmatpush1.msra.mxu0 0.0
    %3535 = vmatprep.subr.mxu0 0.0
    %3536 = vmatpush1.msra.mxu0 0.0
    %3537 = vmatprep.subr.mxu0 0.0
    %3538 = vmatpush1.msra.mxu0 0.0
    %3539 = vmatprep.subr.mxu0 0.0
    %3540 = vmatpush1.msra.mxu0 0.0
    %3541 = vmatprep.subr.mxu0 0.0
    %3542 = vmatpush1.msra.mxu0 0.0
    %3543 = vmatprep.subr.mxu0 0.0
    %3544 = vmatpush1.msra.mxu0 0.0
    %3545 = vmatprep.mubr.f32.mxu0 0.0
    %3546 = vmatmul.mubr.f32.gmra.mrb[0].mxu0 %v3473
    %v3547 = vpop.f32.mrb[0].mxu0
    %v3548 = vadd.f32 0.0, %v3547
    %v3549 = vpop.f32.mrb[0].mxu0
    %v3550 = vadd.f32 0.0, %v3549
    %3551 = vdwg.mxu0
    %v3552 = vadd.f32 %v3449, %v3548
    %v3553 = vadd.f32 %v3450, %v3550
    %v3554 = vld [vmem:[#allocation2 + $0x1d] sm:$0x1]
    %v3555 = vld [vmem:[#allocation2 + $0x3d] sm:$0x1]
    %v3557 = vrot.slane %v3555, 7
    %v3559 = vsel %vm576, %v3554, %v3557
    %s3560 = scalar_lea.vmem %s4, 3248
    %v3561 = vld [vmem:[%s3560] sm:$0xff]
    %v3562 = vld [vmem:[%s3560 + $0x8] sm:$0xff]
    %v3563 = vld [vmem:[%s3560 + $0x10] sm:$0xff]
    %v3564 = vld [vmem:[%s3560 + $0x18] sm:$0xff]
    %v3565 = vld [vmem:[%s3560 + $0x20] sm:$0xff]
    %v3566 = vld [vmem:[%s3560 + $0x28] sm:$0xff]
    %v3567 = vld [vmem:[%s3560 + $0x30] sm:$0xff]
    %v3568 = vld [vmem:[%s3560 + $0x38] sm:$0xff]
    %v3569 = vld [vmem:[%s3560 + $0x40] sm:$0xff]
    %v3570 = vld [vmem:[%s3560 + $0x48] sm:$0xff]
    %v3571 = vld [vmem:[%s3560 + $0x50] sm:$0xff]
    %v3572 = vld [vmem:[%s3560 + $0x58] sm:$0xff]
    %v3573 = vld [vmem:[%s3560 + $0x60] sm:$0x1]
    %v3574 = vld [vmem:[%s3560 + $0x68] sm:$0x1]
    %v3576 = vsel %vm299, %v3559, 0
    %v3579 = vsel %vm576, %v3573, 0
    %v3582 = vsel %vm576, %v3574, 0
    %3584 = vmatprep.subr.mxu0 %v3562
    %3585 = vmatpush1.msra.mxu0 %v3561
    %3586 = vmatprep.subr.mxu0 %v3564
    %3587 = vmatpush1.msra.mxu0 %v3563
    %3588 = vmatprep.subr.mxu0 %v3566
    %3589 = vmatpush1.msra.mxu0 %v3565
    %3590 = vmatprep.subr.mxu0 %v3568
    %3591 = vmatpush1.msra.mxu0 %v3567
    %3592 = vmatprep.subr.mxu0 %v3570
    %3593 = vmatpush1.msra.mxu0 %v3569
    %3594 = vmatprep.subr.mxu0 %v3572
    %3595 = vmatpush1.msra.mxu0 %v3571
    %3596 = vmatprep.subr.mxu0 %v3582
    %3597 = vmatpush1.msra.mxu0 %v3579
    %3598 = vmatprep.subr.mxu0 0.0
    %3599 = vmatpush1.msra.mxu0 0.0
    %3600 = vmatprep.subr.mxu0 0.0
    %3601 = vmatpush1.msra.mxu0 0.0
    %3602 = vmatprep.subr.mxu0 0.0
    %3603 = vmatpush1.msra.mxu0 0.0
    %3604 = vmatprep.subr.mxu0 0.0
    %3605 = vmatpush1.msra.mxu0 0.0
    %3606 = vmatprep.subr.mxu0 0.0
    %3607 = vmatpush1.msra.mxu0 0.0
    %3608 = vmatprep.subr.mxu0 0.0
    %3609 = vmatpush1.msra.mxu0 0.0
    %3610 = vmatprep.subr.mxu0 0.0
    %3611 = vmatpush1.msra.mxu0 0.0
    %3612 = vmatprep.subr.mxu0 0.0
    %3613 = vmatpush1.msra.mxu0 0.0
    %3614 = vmatprep.subr.mxu0 0.0
    %3615 = vmatpush1.msra.mxu0 0.0
    %3616 = vmatprep.subr.mxu0 0.0
    %3617 = vmatpush1.msra.mxu0 0.0
    %3618 = vmatprep.subr.mxu0 0.0
    %3619 = vmatpush1.msra.mxu0 0.0
    %3620 = vmatprep.subr.mxu0 0.0
    %3621 = vmatpush1.msra.mxu0 0.0
    %3622 = vmatprep.subr.mxu0 0.0
    %3623 = vmatpush1.msra.mxu0 0.0
    %3624 = vmatprep.subr.mxu0 0.0
    %3625 = vmatpush1.msra.mxu0 0.0
    %3626 = vmatprep.subr.mxu0 0.0
    %3627 = vmatpush1.msra.mxu0 0.0
    %3628 = vmatprep.subr.mxu0 0.0
    %3629 = vmatpush1.msra.mxu0 0.0
    %3630 = vmatprep.subr.mxu0 0.0
    %3631 = vmatpush1.msra.mxu0 0.0
    %3632 = vmatprep.subr.mxu0 0.0
    %3633 = vmatpush1.msra.mxu0 0.0
    %3634 = vmatprep.subr.mxu0 0.0
    %3635 = vmatpush1.msra.mxu0 0.0
    %3636 = vmatprep.subr.mxu0 0.0
    %3637 = vmatpush1.msra.mxu0 0.0
    %3638 = vmatprep.subr.mxu0 0.0
    %3639 = vmatpush1.msra.mxu0 0.0
    %3640 = vmatprep.subr.mxu0 0.0
    %3641 = vmatpush1.msra.mxu0 0.0
    %3642 = vmatprep.subr.mxu0 0.0
    %3643 = vmatpush1.msra.mxu0 0.0
    %3644 = vmatprep.subr.mxu0 0.0
    %3645 = vmatpush1.msra.mxu0 0.0
    %3646 = vmatprep.subr.mxu0 0.0
    %3647 = vmatpush1.msra.mxu0 0.0
    %3648 = vmatprep.mubr.f32.mxu0 0.0
    %3649 = vmatmul.mubr.f32.gmra.mrb[0].mxu0 %v3576
    %v3650 = vpop.f32.mrb[0].mxu0
    %v3651 = vadd.f32 0.0, %v3650
    %v3652 = vpop.f32.mrb[0].mxu0
    %v3653 = vadd.f32 0.0, %v3652
    %3654 = vdwg.mxu0
    %v3655 = vadd.f32 %v3552, %v3651
    %v3656 = vadd.f32 %v3553, %v3653
    %v3657 = vld [vmem:[#allocation2 + $0x1e] sm:$0x1]
    %v3658 = vld [vmem:[#allocation2 + $0x3e] sm:$0x1]
    %v3660 = vrot.slane %v3658, 7
    %v3662 = vsel %vm576, %v3657, %v3660
    %s3663 = scalar_lea.vmem %s4, 3360
    %v3664 = vld [vmem:[%s3663] sm:$0xff]
    %v3665 = vld [vmem:[%s3663 + $0x8] sm:$0xff]
    %v3666 = vld [vmem:[%s3663 + $0x10] sm:$0xff]
    %v3667 = vld [vmem:[%s3663 + $0x18] sm:$0xff]
    %v3668 = vld [vmem:[%s3663 + $0x20] sm:$0xff]
    %v3669 = vld [vmem:[%s3663 + $0x28] sm:$0xff]
    %v3670 = vld [vmem:[%s3663 + $0x30] sm:$0xff]
    %v3671 = vld [vmem:[%s3663 + $0x38] sm:$0xff]
    %v3672 = vld [vmem:[%s3663 + $0x40] sm:$0xff]
    %v3673 = vld [vmem:[%s3663 + $0x48] sm:$0xff]
    %v3674 = vld [vmem:[%s3663 + $0x50] sm:$0xff]
    %v3675 = vld [vmem:[%s3663 + $0x58] sm:$0xff]
    %v3676 = vld [vmem:[%s3663 + $0x60] sm:$0x1]
    %v3677 = vld [vmem:[%s3663 + $0x68] sm:$0x1]
    %v3679 = vsel %vm299, %v3662, 0
    %v3682 = vsel %vm576, %v3676, 0
    %v3685 = vsel %vm576, %v3677, 0
    %3687 = vmatprep.subr.mxu0 %v3665
    %3688 = vmatpush1.msra.mxu0 %v3664
    %3689 = vmatprep.subr.mxu0 %v3667
    %3690 = vmatpush1.msra.mxu0 %v3666
    %3691 = vmatprep.subr.mxu0 %v3669
    %3692 = vmatpush1.msra.mxu0 %v3668
    %3693 = vmatprep.subr.mxu0 %v3671
    %3694 = vmatpush1.msra.mxu0 %v3670
    %3695 = vmatprep.subr.mxu0 %v3673
    %3696 = vmatpush1.msra.mxu0 %v3672
    %3697 = vmatprep.subr.mxu0 %v3675
    %3698 = vmatpush1.msra.mxu0 %v3674
    %3699 = vmatprep.subr.mxu0 %v3685
    %3700 = vmatpush1.msra.mxu0 %v3682
    %3701 = vmatprep.subr.mxu0 0.0
    %3702 = vmatpush1.msra.mxu0 0.0
    %3703 = vmatprep.subr.mxu0 0.0
    %3704 = vmatpush1.msra.mxu0 0.0
    %3705 = vmatprep.subr.mxu0 0.0
    %3706 = vmatpush1.msra.mxu0 0.0
    %3707 = vmatprep.subr.mxu0 0.0
    %3708 = vmatpush1.msra.mxu0 0.0
    %3709 = vmatprep.subr.mxu0 0.0
    %3710 = vmatpush1.msra.mxu0 0.0
    %3711 = vmatprep.subr.mxu0 0.0
    %3712 = vmatpush1.msra.mxu0 0.0
    %3713 = vmatprep.subr.mxu0 0.0
    %3714 = vmatpush1.msra.mxu0 0.0
    %3715 = vmatprep.subr.mxu0 0.0
    %3716 = vmatpush1.msra.mxu0 0.0
    %3717 = vmatprep.subr.mxu0 0.0
    %3718 = vmatpush1.msra.mxu0 0.0
    %3719 = vmatprep.subr.mxu0 0.0
    %3720 = vmatpush1.msra.mxu0 0.0
    %3721 = vmatprep.subr.mxu0 0.0
    %3722 = vmatpush1.msra.mxu0 0.0
    %3723 = vmatprep.subr.mxu0 0.0
    %3724 = vmatpush1.msra.mxu0 0.0
    %3725 = vmatprep.subr.mxu0 0.0
    %3726 = vmatpush1.msra.mxu0 0.0
    %3727 = vmatprep.subr.mxu0 0.0
    %3728 = vmatpush1.msra.mxu0 0.0
    %3729 = vmatprep.subr.mxu0 0.0
    %3730 = vmatpush1.msra.mxu0 0.0
    %3731 = vmatprep.subr.mxu0 0.0
    %3732 = vmatpush1.msra.mxu0 0.0
    %3733 = vmatprep.subr.mxu0 0.0
    %3734 = vmatpush1.msra.mxu0 0.0
    %3735 = vmatprep.subr.mxu0 0.0
    %3736 = vmatpush1.msra.mxu0 0.0
    %3737 = vmatprep.subr.mxu0 0.0
    %3738 = vmatpush1.msra.mxu0 0.0
    %3739 = vmatprep.subr.mxu0 0.0
    %3740 = vmatpush1.msra.mxu0 0.0
    %3741 = vmatprep.subr.mxu0 0.0
    %3742 = vmatpush1.msra.mxu0 0.0
    %3743 = vmatprep.subr.mxu0 0.0
    %3744 = vmatpush1.msra.mxu0 0.0
    %3745 = vmatprep.subr.mxu0 0.0
    %3746 = vmatpush1.msra.mxu0 0.0
    %3747 = vmatprep.subr.mxu0 0.0
    %3748 = vmatpush1.msra.mxu0 0.0
    %3749 = vmatprep.subr.mxu0 0.0
    %3750 = vmatpush1.msra.mxu0 0.0
    %3751 = vmatprep.mubr.f32.mxu0 0.0
    %3752 = vmatmul.mubr.f32.gmra.mrb[0].mxu0 %v3679
    %v3753 = vpop.f32.mrb[0].mxu0
    %v3754 = vadd.f32 0.0, %v3753
    %v3755 = vpop.f32.mrb[0].mxu0
    %v3756 = vadd.f32 0.0, %v3755
    %3757 = vdwg.mxu0
    %v3758 = vadd.f32 %v3655, %v3754
    %v3759 = vadd.f32 %v3656, %v3756
    %v3760 = vld [vmem:[#allocation2 + $0x1f] sm:$0x1]
    %v3761 = vld [vmem:[#allocation2 + $0x3f] sm:$0x1]
    %v3763 = vrot.slane %v3761, 7
    %v3765 = vsel %vm576, %v3760, %v3763
    %s3766 = scalar_lea.vmem %s4, 3472
    %v3767 = vld [vmem:[%s3766] sm:$0xff]
    %v3768 = vld [vmem:[%s3766 + $0x8] sm:$0xff]
    %v3769 = vld [vmem:[%s3766 + $0x10] sm:$0xff]
    %v3770 = vld [vmem:[%s3766 + $0x18] sm:$0xff]
    %v3771 = vld [vmem:[%s3766 + $0x20] sm:$0xff]
    %v3772 = vld [vmem:[%s3766 + $0x28] sm:$0xff]
    %v3773 = vld [vmem:[%s3766 + $0x30] sm:$0xff]
    %v3774 = vld [vmem:[%s3766 + $0x38] sm:$0xff]
    %v3775 = vld [vmem:[%s3766 + $0x40] sm:$0xff]
    %v3776 = vld [vmem:[%s3766 + $0x48] sm:$0xff]
    %v3777 = vld [vmem:[%s3766 + $0x50] sm:$0xff]
    %v3778 = vld [vmem:[%s3766 + $0x58] sm:$0xff]
    %v3779 = vld [vmem:[%s3766 + $0x60] sm:$0x1]
    %v3780 = vld [vmem:[%s3766 + $0x68] sm:$0x1]
    %v3782 = vsel %vm299, %v3765, 0
    %v3785 = vsel %vm576, %v3779, 0
    %v3788 = vsel %vm576, %v3780, 0
    %3790 = vmatprep.subr.mxu0 %v3768
    %3791 = vmatpush1.msra.mxu0 %v3767
    %3792 = vmatprep.subr.mxu0 %v3770
    %3793 = vmatpush1.msra.mxu0 %v3769
    %3794 = vmatprep.subr.mxu0 %v3772
    %3795 = vmatpush1.msra.mxu0 %v3771
    %3796 = vmatprep.subr.mxu0 %v3774
    %3797 = vmatpush1.msra.mxu0 %v3773
    %3798 = vmatprep.subr.mxu0 %v3776
    %3799 = vmatpush1.msra.mxu0 %v3775
    %3800 = vmatprep.subr.mxu0 %v3778
    %3801 = vmatpush1.msra.mxu0 %v3777
    %3802 = vmatprep.subr.mxu0 %v3788
    %3803 = vmatpush1.msra.mxu0 %v3785
    %3804 = vmatprep.subr.mxu0 0.0
    %3805 = vmatpush1.msra.mxu0 0.0
    %3806 = vmatprep.subr.mxu0 0.0
    %3807 = vmatpush1.msra.mxu0 0.0
    %3808 = vmatprep.subr.mxu0 0.0
    %3809 = vmatpush1.msra.mxu0 0.0
    %3810 = vmatprep.subr.mxu0 0.0
    %3811 = vmatpush1.msra.mxu0 0.0
    %3812 = vmatprep.subr.mxu0 0.0
    %3813 = vmatpush1.msra.mxu0 0.0
    %3814 = vmatprep.subr.mxu0 0.0
    %3815 = vmatpush1.msra.mxu0 0.0
    %3816 = vmatprep.subr.mxu0 0.0
    %3817 = vmatpush1.msra.mxu0 0.0
    %3818 = vmatprep.subr.mxu0 0.0
    %3819 = vmatpush1.msra.mxu0 0.0
    %3820 = vmatprep.subr.mxu0 0.0
    %3821 = vmatpush1.msra.mxu0 0.0
    %3822 = vmatprep.subr.mxu0 0.0
    %3823 = vmatpush1.msra.mxu0 0.0
    %3824 = vmatprep.subr.mxu0 0.0
    %3825 = vmatpush1.msra.mxu0 0.0
    %3826 = vmatprep.subr.mxu0 0.0
    %3827 = vmatpush1.msra.mxu0 0.0
    %3828 = vmatprep.subr.mxu0 0.0
    %3829 = vmatpush1.msra.mxu0 0.0
    %3830 = vmatprep.subr.mxu0 0.0
    %3831 = vmatpush1.msra.mxu0 0.0
    %3832 = vmatprep.subr.mxu0 0.0
    %3833 = vmatpush1.msra.mxu0 0.0
    %3834 = vmatprep.subr.mxu0 0.0
    %3835 = vmatpush1.msra.mxu0 0.0
    %3836 = vmatprep.subr.mxu0 0.0
    %3837 = vmatpush1.msra.mxu0 0.0
    %3838 = vmatprep.subr.mxu0 0.0
    %3839 = vmatpush1.msra.mxu0 0.0
    %3840 = vmatprep.subr.mxu0 0.0
    %3841 = vmatpush1.msra.mxu0 0.0
    %3842 = vmatprep.subr.mxu0 0.0
    %3843 = vmatpush1.msra.mxu0 0.0
    %3844 = vmatprep.subr.mxu0 0.0
    %3845 = vmatpush1.msra.mxu0 0.0
    %3846 = vmatprep.subr.mxu0 0.0
    %3847 = vmatpush1.msra.mxu0 0.0
    %3848 = vmatprep.subr.mxu0 0.0
    %3849 = vmatpush1.msra.mxu0 0.0
    %3850 = vmatprep.subr.mxu0 0.0
    %3851 = vmatpush1.msra.mxu0 0.0
    %3852 = vmatprep.subr.mxu0 0.0
    %3853 = vmatpush1.msra.mxu0 0.0
    %3854 = vmatprep.mubr.f32.mxu0 0.0
    %3855 = vmatmul.mubr.f32.gmra.mrb[0].mxu0 %v3782
    %v3856 = vpop.f32.mrb[0].mxu0
    %v3857 = vadd.f32 0.0, %v3856
    %v3858 = vpop.f32.mrb[0].mxu0
    %v3859 = vadd.f32 0.0, %v3858
    %3860 = vdwg.mxu0
    %v3861 = vadd.f32 %v3758, %v3857
    %v3862 = vadd.f32 %v3759, %v3859
    %v3863 = vld [vmem:[%s5] sm:$0x3]
    %v3865 = vlaneseq
    %v3866 = vshrl.u32 %v3865, 7
    %v3867 = vsub.s32 0, %v3866
    %v3868 = vrot.slane %v3863, %v3867
    %v3869 = vlaneseq
    %v3870 = vshrl.u32 %v3869, 7
    %v3871 = vsub.s32 1, %v3870
    %v3872 = vrot.slane %v3863, %v3871
    %v3875 = vadd.f32 %v3861, %v3868
    %v3876 = vadd.f32 %v3862, %v3872
    %v3877 = vmax.f32 %v3875, 0.0
    %v3878 = vmax.f32 %v3876, 0.0
    %v3879 = vld [vmem:[%s6] sm:$0xff]
    %v3880 = vld [vmem:[%s6 + $0x8] sm:$0xff]
    %v3881 = vld [vmem:[%s6 + $0x10] sm:$0xff]
    %v3882 = vld [vmem:[%s6 + $0x18] sm:$0xff]
    %v3883 = vld [vmem:[%s6 + $0x20] sm:$0xff]
    %v3884 = vld [vmem:[%s6 + $0x28] sm:$0xff]
    %v3885 = vld [vmem:[%s6 + $0x30] sm:$0xff]
    %v3886 = vld [vmem:[%s6 + $0x38] sm:$0xff]
    %v3887 = vld [vmem:[%s6 + $0x40] sm:$0xff]
    %v3888 = vld [vmem:[%s6 + $0x48] sm:$0xff]
    %v3889 = vld [vmem:[%s6 + $0x50] sm:$0xff]
    %v3890 = vld [vmem:[%s6 + $0x58] sm:$0xff]
    %v3891 = vld [vmem:[%s6 + $0x60] sm:$0xff]
    %v3892 = vld [vmem:[%s6 + $0x68] sm:$0xff]
    %v3893 = vld [vmem:[%s6 + $0x70] sm:$0xff]
    %v3894 = vld [vmem:[%s6 + $0x78] sm:$0xff]
    %v3895 = vld [vmem:[%s6 + $0x80] sm:$0xff]
    %v3896 = vld [vmem:[%s6 + $0x88] sm:$0xff]
    %v3897 = vld [vmem:[%s6 + $0x90] sm:$0xff]
    %v3898 = vld [vmem:[%s6 + $0x98] sm:$0xff]
    %v3899 = vld [vmem:[%s6 + $0xa0] sm:$0xff]
    %v3900 = vld [vmem:[%s6 + $0xa8] sm:$0xff]
    %v3901 = vld [vmem:[%s6 + $0xb0] sm:$0xff]
    %v3902 = vld [vmem:[%s6 + $0xb8] sm:$0xff]
    %v3903 = vld [vmem:[%s6 + $0xc0] sm:$0xff]
    %v3904 = vld [vmem:[%s6 + $0xc8] sm:$0xff]
    %v3905 = vld [vmem:[%s6 + $0xd0] sm:$0xff]
    %v3906 = vld [vmem:[%s6 + $0xd8] sm:$0xff]
    %v3907 = vld [vmem:[%s6 + $0xe0] sm:$0xff]
    %v3908 = vld [vmem:[%s6 + $0xe8] sm:$0xff]
    %v3909 = vld [vmem:[%s6 + $0xf0] sm:$0xff]
    %v3910 = vld [vmem:[%s6 + $0xf8] sm:$0xff]
    %v3911 = vld [vmem:[%s6 + $0x100] sm:$0xff]
    %v3912 = vld [vmem:[%s6 + $0x108] sm:$0xff]
    %v3913 = vld [vmem:[%s6 + $0x110] sm:$0xff]
    %v3914 = vld [vmem:[%s6 + $0x118] sm:$0xff]
    %v3915 = vld [vmem:[%s6 + $0x120] sm:$0xff]
    %v3916 = vld [vmem:[%s6 + $0x128] sm:$0xff]
    %v3917 = vld [vmem:[%s6 + $0x130] sm:$0xff]
    %v3918 = vld [vmem:[%s6 + $0x138] sm:$0xff]
    %v3919 = vld [vmem:[%s6 + $0x140] sm:$0xff]
    %v3920 = vld [vmem:[%s6 + $0x148] sm:$0xff]
    %v3921 = vld [vmem:[%s6 + $0x150] sm:$0xff]
    %v3922 = vld [vmem:[%s6 + $0x158] sm:$0xff]
    %v3923 = vld [vmem:[%s6 + $0x160] sm:$0xff]
    %v3924 = vld [vmem:[%s6 + $0x168] sm:$0xff]
    %v3925 = vld [vmem:[%s6 + $0x170] sm:$0xff]
    %v3926 = vld [vmem:[%s6 + $0x178] sm:$0xff]
    %v3927 = vld [vmem:[%s6 + $0x180] sm:$0xff]
    %v3928 = vld [vmem:[%s6 + $0x188] sm:$0xff]
    %v3929 = vld [vmem:[%s6 + $0x190] sm:$0xff]
    %v3930 = vld [vmem:[%s6 + $0x198] sm:$0xff]
    %v3931 = vld [vmem:[%s6 + $0x1a0] sm:$0xff]
    %v3932 = vld [vmem:[%s6 + $0x1a8] sm:$0xff]
    %v3933 = vld [vmem:[%s6 + $0x1b0] sm:$0xff]
    %v3934 = vld [vmem:[%s6 + $0x1b8] sm:$0xff]
    %v3935 = vld [vmem:[%s6 + $0x1c0] sm:$0xff]
    %v3936 = vld [vmem:[%s6 + $0x1c8] sm:$0xff]
    %v3937 = vld [vmem:[%s6 + $0x1d0] sm:$0xff]
    %v3938 = vld [vmem:[%s6 + $0x1d8] sm:$0xff]
    %v3939 = vld [vmem:[%s6 + $0x1e0] sm:$0xff]
    %v3940 = vld [vmem:[%s6 + $0x1e8] sm:$0xff]
    %v3941 = vld [vmem:[%s6 + $0x1f0] sm:$0xff]
    %v3942 = vld [vmem:[%s6 + $0x1f8] sm:$0xff]
    %v3943 = vld [vmem:[%s7] sm:$0x3]
    %v3945 = vlaneseq
    %v3946 = vshrl.u32 %v3945, 7
    %v3947 = vsub.s32 0, %v3946
    %v3948 = vrot.slane %v3943, %v3947
    %v3949 = vlaneseq
    %v3950 = vshrl.u32 %v3949, 7
    %v3951 = vsub.s32 1, %v3950
    %v3952 = vrot.slane %v3943, %v3951
    %3955 = vmatprep.subr.mxu0 %v3880
    %3956 = vmatpush1.msra.mxu0 %v3879
    %3957 = vmatprep.subr.mxu0 %v3882
    %3958 = vmatpush1.msra.mxu0 %v3881
    %3959 = vmatprep.subr.mxu0 %v3884
    %3960 = vmatpush1.msra.mxu0 %v3883
    %3961 = vmatprep.subr.mxu0 %v3886
    %3962 = vmatpush1.msra.mxu0 %v3885
    %3963 = vmatprep.subr.mxu0 %v3888
    %3964 = vmatpush1.msra.mxu0 %v3887
    %3965 = vmatprep.subr.mxu0 %v3890
    %3966 = vmatpush1.msra.mxu0 %v3889
    %3967 = vmatprep.subr.mxu0 %v3892
    %3968 = vmatpush1.msra.mxu0 %v3891
    %3969 = vmatprep.subr.mxu0 %v3894
    %3970 = vmatpush1.msra.mxu0 %v3893
    %3971 = vmatprep.subr.mxu0 %v3896
    %3972 = vmatpush1.msra.mxu0 %v3895
    %3973 = vmatprep.subr.mxu0 %v3898
    %3974 = vmatpush1.msra.mxu0 %v3897
    %3975 = vmatprep.subr.mxu0 %v3900
    %3976 = vmatpush1.msra.mxu0 %v3899
    %3977 = vmatprep.subr.mxu0 %v3902
    %3978 = vmatpush1.msra.mxu0 %v3901
    %3979 = vmatprep.subr.mxu0 %v3904
    %3980 = vmatpush1.msra.mxu0 %v3903
    %3981 = vmatprep.subr.mxu0 %v3906
    %3982 = vmatpush1.msra.mxu0 %v3905
    %3983 = vmatprep.subr.mxu0 %v3908
    %3984 = vmatpush1.msra.mxu0 %v3907
    %3985 = vmatprep.subr.mxu0 %v3910
    %3986 = vmatpush1.msra.mxu0 %v3909
    %3987 = vmatprep.subr.mxu0 %v3912
    %3988 = vmatpush1.msra.mxu0 %v3911
    %3989 = vmatprep.subr.mxu0 %v3914
    %3990 = vmatpush1.msra.mxu0 %v3913
    %3991 = vmatprep.subr.mxu0 %v3916
    %3992 = vmatpush1.msra.mxu0 %v3915
    %3993 = vmatprep.subr.mxu0 %v3918
    %3994 = vmatpush1.msra.mxu0 %v3917
    %3995 = vmatprep.subr.mxu0 %v3920
    %3996 = vmatpush1.msra.mxu0 %v3919
    %3997 = vmatprep.subr.mxu0 %v3922
    %3998 = vmatpush1.msra.mxu0 %v3921
    %3999 = vmatprep.subr.mxu0 %v3924
    %4000 = vmatpush1.msra.mxu0 %v3923
    %4001 = vmatprep.subr.mxu0 %v3926
    %4002 = vmatpush1.msra.mxu0 %v3925
    %4003 = vmatprep.subr.mxu0 %v3928
    %4004 = vmatpush1.msra.mxu0 %v3927
    %4005 = vmatprep.subr.mxu0 %v3930
    %4006 = vmatpush1.msra.mxu0 %v3929
    %4007 = vmatprep.subr.mxu0 %v3932
    %4008 = vmatpush1.msra.mxu0 %v3931
    %4009 = vmatprep.subr.mxu0 %v3934
    %4010 = vmatpush1.msra.mxu0 %v3933
    %4011 = vmatprep.subr.mxu0 %v3936
    %4012 = vmatpush1.msra.mxu0 %v3935
    %4013 = vmatprep.subr.mxu0 %v3938
    %4014 = vmatpush1.msra.mxu0 %v3937
    %4015 = vmatprep.subr.mxu0 %v3940
    %4016 = vmatpush1.msra.mxu0 %v3939
    %4017 = vmatprep.subr.mxu0 %v3942
    %4018 = vmatpush1.msra.mxu0 %v3941
    %4019 = vmatprep.mubr.f32.mxu0 %v3878
    %4020 = vmatmul.mubr.f32.gmra.mrb[0].mxu0 %v3877
    %v4021 = vpop.f32.mrb[0].mxu0
    %v4022 = vadd.f32 %v3948, %v4021
    %v4023 = vpop.f32.mrb[0].mxu0
    %v4024 = vadd.f32 %v3952, %v4023
    %4025 = vdwg.mxu0
    %v4026 = vmax.f32 %v4022, 0.0
    %v4027 = vmax.f32 %v4024, 0.0
    %v4028 = vld [vmem:[%s8] sm:$0xff]
    %v4029 = vld [vmem:[%s8 + $0x8] sm:$0xff]
    %v4030 = vld [vmem:[%s8 + $0x10] sm:$0xff]
    %v4031 = vld [vmem:[%s8 + $0x18] sm:$0xff]
    %v4032 = vld [vmem:[%s8 + $0x20] sm:$0xff]
    %v4033 = vld [vmem:[%s8 + $0x28] sm:$0xff]
    %v4034 = vld [vmem:[%s8 + $0x30] sm:$0xff]
    %v4035 = vld [vmem:[%s8 + $0x38] sm:$0xff]
    %v4036 = vld [vmem:[%s8 + $0x40] sm:$0xff]
    %v4037 = vld [vmem:[%s8 + $0x48] sm:$0xff]
    %v4038 = vld [vmem:[%s8 + $0x50] sm:$0xff]
    %v4039 = vld [vmem:[%s8 + $0x58] sm:$0xff]
    %v4040 = vld [vmem:[%s8 + $0x60] sm:$0xff]
    %v4041 = vld [vmem:[%s8 + $0x68] sm:$0xff]
    %v4042 = vld [vmem:[%s8 + $0x70] sm:$0xff]
    %v4043 = vld [vmem:[%s8 + $0x78] sm:$0xff]
    %v4044 = vld [vmem:[%s8 + $0x80] sm:$0xff]
    %v4045 = vld [vmem:[%s8 + $0x88] sm:$0xff]
    %v4046 = vld [vmem:[%s8 + $0x90] sm:$0xff]
    %v4047 = vld [vmem:[%s8 + $0x98] sm:$0xff]
    %v4048 = vld [vmem:[%s8 + $0xa0] sm:$0xff]
    %v4049 = vld [vmem:[%s8 + $0xa8] sm:$0xff]
    %v4050 = vld [vmem:[%s8 + $0xb0] sm:$0xff]
    %v4051 = vld [vmem:[%s8 + $0xb8] sm:$0xff]
    %v4052 = vld [vmem:[%s8 + $0xc0] sm:$0xff]
    %v4053 = vld [vmem:[%s8 + $0xc8] sm:$0xff]
    %v4054 = vld [vmem:[%s8 + $0xd0] sm:$0xff]
    %v4055 = vld [vmem:[%s8 + $0xd8] sm:$0xff]
    %v4056 = vld [vmem:[%s8 + $0xe0] sm:$0xff]
    %v4057 = vld [vmem:[%s8 + $0xe8] sm:$0xff]
    %v4058 = vld [vmem:[%s8 + $0xf0] sm:$0xff]
    %v4059 = vld [vmem:[%s8 + $0xf8] sm:$0xff]
    %v4060 = vld [vmem:[%s9] sm:$0x1]
    %v4062 = vlaneseq
    %v4063 = vshrl.u32 %v4062, 7
    %v4064 = vsub.s32 0, %v4063
    %v4065 = vrot.slane %v4060, %v4064
    %4067 = vmatprep.subr.mxu0 0.0
    %4068 = vmatpush1.msra.mxu0 %v4028
    %4069 = vmatprep.subr.mxu0 0.0
    %4070 = vmatpush1.msra.mxu0 %v4029
    %4071 = vmatprep.subr.mxu0 0.0
    %4072 = vmatpush1.msra.mxu0 %v4030
    %4073 = vmatprep.subr.mxu0 0.0
    %4074 = vmatpush1.msra.mxu0 %v4031
    %4075 = vmatprep.subr.mxu0 0.0
    %4076 = vmatpush1.msra.mxu0 %v4032
    %4077 = vmatprep.subr.mxu0 0.0
    %4078 = vmatpush1.msra.mxu0 %v4033
    %4079 = vmatprep.subr.mxu0 0.0
    %4080 = vmatpush1.msra.mxu0 %v4034
    %4081 = vmatprep.subr.mxu0 0.0
    %4082 = vmatpush1.msra.mxu0 %v4035
    %4083 = vmatprep.subr.mxu0 0.0
    %4084 = vmatpush1.msra.mxu0 %v4036
    %4085 = vmatprep.subr.mxu0 0.0
    %4086 = vmatpush1.msra.mxu0 %v4037
    %4087 = vmatprep.subr.mxu0 0.0
    %4088 = vmatpush1.msra.mxu0 %v4038
    %4089 = vmatprep.subr.mxu0 0.0
    %4090 = vmatpush1.msra.mxu0 %v4039
    %4091 = vmatprep.subr.mxu0 0.0
    %4092 = vmatpush1.msra.mxu0 %v4040
    %4093 = vmatprep.subr.mxu0 0.0
    %4094 = vmatpush1.msra.mxu0 %v4041
    %4095 = vmatprep.subr.mxu0 0.0
    %4096 = vmatpush1.msra.mxu0 %v4042
    %4097 = vmatprep.subr.mxu0 0.0
    %4098 = vmatpush1.msra.mxu0 %v4043
    %4099 = vmatprep.subr.mxu0 0.0
    %4100 = vmatpush1.msra.mxu0 %v4044
    %4101 = vmatprep.subr.mxu0 0.0
    %4102 = vmatpush1.msra.mxu0 %v4045
    %4103 = vmatprep.subr.mxu0 0.0
    %4104 = vmatpush1.msra.mxu0 %v4046
    %4105 = vmatprep.subr.mxu0 0.0
    %4106 = vmatpush1.msra.mxu0 %v4047
    %4107 = vmatprep.subr.mxu0 0.0
    %4108 = vmatpush1.msra.mxu0 %v4048
    %4109 = vmatprep.subr.mxu0 0.0
    %4110 = vmatpush1.msra.mxu0 %v4049
    %4111 = vmatprep.subr.mxu0 0.0
    %4112 = vmatpush1.msra.mxu0 %v4050
    %4113 = vmatprep.subr.mxu0 0.0
    %4114 = vmatpush1.msra.mxu0 %v4051
    %4115 = vmatprep.subr.mxu0 0.0
    %4116 = vmatpush1.msra.mxu0 %v4052
    %4117 = vmatprep.subr.mxu0 0.0
    %4118 = vmatpush1.msra.mxu0 %v4053
    %4119 = vmatprep.subr.mxu0 0.0
    %4120 = vmatpush1.msra.mxu0 %v4054
    %4121 = vmatprep.subr.mxu0 0.0
    %4122 = vmatpush1.msra.mxu0 %v4055
    %4123 = vmatprep.subr.mxu0 0.0
    %4124 = vmatpush1.msra.mxu0 %v4056
    %4125 = vmatprep.subr.mxu0 0.0
    %4126 = vmatpush1.msra.mxu0 %v4057
    %4127 = vmatprep.subr.mxu0 0.0
    %4128 = vmatpush1.msra.mxu0 %v4058
    %4129 = vmatprep.subr.mxu0 0.0
    %4130 = vmatpush1.msra.mxu0 %v4059
    %4131 = vmatprep.mubr.f32.mxu0 %v4027
    %4132 = vmatmul.mubr.f32.gmra.mrb[0].mxu0 %v4026
    %v4133 = vpop.f32.mrb[0].mxu0
    %v4134 = vadd.f32 %v4065, %v4133
    %v4135 = vpop.f32.mrb[0].mxu0
    %4136 = vdwg.mxu0
    %vm4137 = vcmask 91136
    %4138 = vst.msk [vmem:[#allocation3] sm:$0x3] %vm4137, %v4134
    // Predicated region
    $region42: #{cnn_forward.1} parent=1 // pred_check
      _
    $region43: #{cnn_forward.1} parent=1 // pred_check_branch
      %4140 = sbr.rel (0) target = $region45
    $region44: #{cnn_forward.1} parent=1 // pred_region
      %s4142 = ssub.s32 32, 32
      %4143 = vsyncadd [#allocation4], %s4142
      %s4145 = sshll.u32 [#allocation3], 4
      %s4146 = int_to_ptr.vmem [resolvable:$true] %s4145
      %4148 = dma.vmem_to_hbm [thread:$0]  %s4146, 32, %s10, [#allocation4]
    $region45: #{cnn_forward.1} parent=1 // pred_fallthru
      _
    // Predicated region
    $region46: #{cnn_forward.1} parent=1 // pred_check
      _
    $region47: #{cnn_forward.1} parent=1 // pred_check_branch
      %4150 = sbr.rel (0) target = $region49
    $region48: #{cnn_forward.1} parent=1 // pred_region
      %4151 = dma.done [#allocation4], 32
    $region49: #{cnn_forward.1} parent=1 // pred_fallthru
      _
    %4152 = vsyncpa [#allocation4], 1

</llo_original>
